<compile_context>
chip_gen: v7x
topology: tpu7x:2x2x1
jax: 0.10.0
libtpu: 0.0.40
codegen_flags: <defaults>
</compile_context>

<pallas_src>
import functools
import math

import jax
import jax.numpy as jnp
from jax.experimental import pallas as pl
from jax.experimental.pallas import tpu as pltpu


def _sigmoid(z):
    # Explicit formula (avoids relying on lax.logistic lowering inside Mosaic).
    return 1.0 / (1.0 + jnp.exp(-z))


def bilstm_kernel(x_ref, w_ih_ref, w_hh_ref, b_ref, h0_ref, c0_ref,
                  out_ref, layer_in, *, T, B, H, L):
    """One grid step == one LSTM layer (forward + backward direction).

    x_ref:    (T*B, Din)        layer-0 input (zero-padded to common width)
    w_ih_ref: (1, 2, Din, 4H)   input->gate weights, PyTorch gate order i,f,g,o
    w_hh_ref: (1, 2, H, 4H)     hidden->gate weights
    b_ref:    (1, 2, 1, 4H)     b_ih + b_hh
    h0_ref:   (1, 2, B, H)      initial hidden state for this layer
    c0_ref:   (1, 2, B, H)      initial cell state for this layer
    out_ref:  (T*B, 2H)         layer output (fwd | bwd), resident across layers
    layer_in: (T*B, Din) VMEM   current layer input, resident across layers
    """
    l = pl.program_id(0)

    @pl.when(l == 0)
    def _():
        layer_in[...] = x_ref[...]

    if L > 1:  # static: only trace the layer-stacking path when it exists
        @pl.when(l > 0)
        def _():
            # Previous layer's (fwd | bwd) output becomes this layer's input.
            # Columns >= 2H of layer_in only ever multiply zero weight rows.
            layer_in[:, 0:2 * H] = out_ref[...]

    x_layer = layer_in[...]                                   # (T*B, Din)

    def run_direction(d, reverse, col):
        # Input projection for every timestep in ONE MXU matmul; bias hoisted.
        gx = jnp.dot(x_layer, w_ih_ref[0, d],
                     preferred_element_type=jnp.float32) + b_ref[0, d]  # (T*B, 4H)
        w_hh = w_hh_ref[0, d]                                  # (H, 4H)
        h = h0_ref[0, d]                                       # (B, H)
        c = c0_ref[0, d]                                       # (B, H)
        ts = range(T - 1, -1, -1) if reverse else range(T)
        for t in ts:              # static unroll; the recurrence is sequential
            g = gx[t * B:(t + 1) * B, :] + jnp.dot(
                h, w_hh, preferred_element_type=jnp.float32)   # (B, 4H)
            i_g = _sigmoid(g[:, 0 * H:1 * H])
            f_g = _sigmoid(g[:, 1 * H:2 * H])
            c_g = jnp.tanh(g[:, 2 * H:3 * H])
            o_g = _sigmoid(g[:, 3 * H:4 * H])
            c = f_g * c + i_g * c_g
            h = o_g * jnp.tanh(c)
            out_ref[t * B:(t + 1) * B, col:col + H] = h

    run_direction(0, reverse=False, col=0)
    run_direction(1, reverse=True, col=H)


def bidirectional_lstm_forward(x, params, h0, c0):
    """Pallas forward of BidirectionalLSTM.

    x:      (T, B, D) float32   (seq-major, PyTorch default batch_first=False)
    params: list of L layers; each layer is a pair (fwd, bwd) of
            (w_ih (4H, D_l), w_hh (4H, H), b_ih (4H,), b_hh (4H,)),
            with D_0 = D and D_l = 2H for l > 0 (PyTorch gate order i,f,g,o).
    h0, c0: (L, 2, B, H) initial states (the module uses zeros).
    returns (T, B, 2H) — the top layer's bidirectional output.
    """
    T, B, D = x.shape
    L = len(params)
    H = params[0][0][1].shape[1]          # w_hh: (4H, H)
    G = 4 * H
    Din = D if L == 1 else max(D, 2 * H)  # common input width across layers

    # Layer-0 input, time-major flattened, zero-padded to the common width.
    x_flat = x.reshape(T * B, D).astype(jnp.float32)
    if Din > D:
        x_flat = jnp.pad(x_flat, ((0, 0), (0, Din - D)))

    # Stack per-layer / per-direction weights (pre-transposed for x @ W).
    w_ih_l, w_hh_l, b_l = [], [], []
    for l in range(L):
        wi, wh, bs = [], [], []
        for d in range(2):
            w_ih, w_hh, b_ih, b_hh = params[l][d]
            w_ih_t = jnp.transpose(w_ih)                      # (D_l, 4H)
            pad = Din - w_ih_t.shape[0]
            if pad > 0:
                w_ih_t = jnp.pad(w_ih_t, ((0, pad), (0, 0)))  # zero rows: exact
            wi.append(w_ih_t)
            wh.append(jnp.transpose(w_hh))                    # (H, 4H)
            bs.append((b_ih + b_hh).reshape(1, G))
        w_ih_l.append(jnp.stack(wi))
        w_hh_l.append(jnp.stack(wh))
        b_l.append(jnp.stack(bs))
    w_ih_all = jnp.stack(w_ih_l)                              # (L, 2, Din, 4H)
    w_hh_all = jnp.stack(w_hh_l)                              # (L, 2, H,   4H)
    b_all = jnp.stack(b_l)                                    # (L, 2, 1,   4H)

    kernel = functools.partial(bilstm_kernel, T=T, B=B, H=H, L=L)
    out = pl.pallas_call(
        kernel,
        out_shape=jax.ShapeDtypeStruct((T * B, 2 * H), jnp.float32),
        grid_spec=pltpu.PrefetchScalarGridSpec(
            num_scalar_prefetch=0,
            grid=(L,),
            in_specs=[
                pl.BlockSpec((T * B, Din), lambda l: (0, 0)),
                pl.BlockSpec((1, 2, Din, G), lambda l: (l, 0, 0, 0)),
                pl.BlockSpec((1, 2, H, G), lambda l: (l, 0, 0, 0)),
                pl.BlockSpec((1, 2, 1, G), lambda l: (l, 0, 0, 0)),
                pl.BlockSpec((1, 2, B, H), lambda l: (l, 0, 0, 0)),
                pl.BlockSpec((1, 2, B, H), lambda l: (l, 0, 0, 0)),
            ],
            out_specs=pl.BlockSpec((T * B, 2 * H), lambda l: (0, 0)),
            scratch_shapes=[pltpu.VMEM((T * B, Din), jnp.float32)],
        ),
        compiler_params=pltpu.CompilerParams(
            dimension_semantics=("arbitrary",)),
    )(x_flat, w_ih_all, w_hh_all, b_all,
      h0.astype(jnp.float32), c0.astype(jnp.float32))
    return out.reshape(T, B, 2 * H)


def reference_forward(x, params, h0, c0):
    """Pure-JAX (XLA) reference with identical semantics, for validation."""
    T, B, _ = x.shape
    H = h0.shape[-1]

    def cell(x_t, h, c, w_ih, w_hh, b_ih, b_hh):
        g = x_t @ w_ih.T + b_ih + h @ w_hh.T + b_hh
        i = _sigmoid(g[:, 0:H])
        f = _sigmoid(g[:, H:2 * H])
        cg = jnp.tanh(g[:, 2 * H:3 * H])
        o = _sigmoid(g[:, 3 * H:4 * H])
        c = f * c + i * cg
        return o * jnp.tanh(c), c

    inp = x
    for l, (p_f, p_b) in enumerate(params):
        h, c = h0[l, 0], c0[l, 0]
        outs_f = []
        for t in range(T):
            h, c = cell(inp[t], h, c, *p_f)
            outs_f.append(h)
        h, c = h0[l, 1], c0[l, 1]
        outs_b = [None] * T
        for t in range(T - 1, -1, -1):
            h, c = cell(inp[t], h, c, *p_b)
            outs_b[t] = h
        inp = jnp.stack([jnp.concatenate([outs_f[t], outs_b[t]], axis=-1)
                         for t in range(T)], axis=0)
    return inp


def init_params(key, D, H, L):
    """Deterministic synthetic LSTM parameters (PyTorch uniform init range)."""
    params = []
    bound = 1.0 / math.sqrt(H)
    for l in range(L):
        d_in = D if l == 0 else 2 * H
        layer = []
        for _ in range(2):  # forward, backward
            key, k1, k2, k3, k4 = jax.random.split(key, 5)
            w_ih = jax.random.uniform(k1, (4 * H, d_in), jnp.float32, -bound, bound)
            w_hh = jax.random.uniform(k2, (4 * H, H), jnp.float32, -bound, bound)
            b_ih = jax.random.uniform(k3, (4 * H,), jnp.float32, -bound, bound)
            b_hh = jax.random.uniform(k4, (4 * H,), jnp.float32, -bound, bound)
            layer.append((w_ih, w_hh, b_ih, b_hh))
        params.append(tuple(layer))
    return params


if __name__ == "__main__":
    # BidirectionalLSTM(layer_size=[32, 32], batch_size=2, vector_dim=64, ...):
    # seq=8, batch=2, vector_dim=64, hidden=32, num_layers=2, zero init hidden.
    T, B, D, H, L = 8, 2, 64, 32, 2

    key = jax.random.PRNGKey(0)
    key, kx = jax.random.split(key)
    x = jax.random.normal(kx, (T, B, D), jnp.float32)
    params = init_params(key, D, H, L)
    h0 = jnp.zeros((L, 2, B, H), jnp.float32)   # self.init_hidden(): zeros
    c0 = jnp.zeros((L, 2, B, H), jnp.float32)

    out = bidirectional_lstm_forward(x, params, h0, c0)
    out = jax.block_until_ready(out)

    ref = reference_forward(x, params, h0, c0)
    assert out.shape == (T, B, 2 * H), out.shape
    err = float(jnp.max(jnp.abs(out - ref)))
    assert err < 1e-4, err

    # TODO(synk): the module keeps self.hidden across forward() calls (and never
    # returns it); here the initial (h0, c0) are explicit zero-initialized
    # inputs and the final hidden state is not emitted.
    print("KERNEL_OK")
</pallas_src>

<mosaic_0001>
module attributes {stable_mosaic.version = 11 : i64} {
  func.func @bilstm_kernel(%arg0: i32, %arg1: memref<16x64xf32, #tpu.memory_space<vmem>>, %arg2: memref<1x2x64x128xf32, #tpu.memory_space<vmem>>, %arg3: memref<1x2x32x128xf32, #tpu.memory_space<vmem>>, %arg4: memref<1x2x1x128xf32, #tpu.memory_space<vmem>>, %arg5: memref<1x2x2x32xf32, #tpu.memory_space<vmem>>, %arg6: memref<1x2x2x32xf32, #tpu.memory_space<vmem>>, %arg7: memref<16x64xf32, #tpu.memory_space<vmem>>, %arg8: memref<16x64xf32, #tpu.memory_space<vmem>>) attributes {dimension_semantics = [#tpu.dimension_semantics<arbitrary>], iteration_bounds = array<i64: 2>, scalar_prefetch = 0 : i64, scratch_operands = 1 : i64, tpu.core_type = #tpu.core_type<tc>, window_params = [{pipeline_mode = #tpu.pipeline_mode<synchronous>, transform_indices = @transform_0, window_bounds = array<i64: 16, 64>}, {transform_indices = @transform_1, window_bounds = array<i64: 1, 2, 64, 128>}, {transform_indices = @transform_2, window_bounds = array<i64: 1, 2, 32, 128>}, {transform_indices = @transform_3, window_bounds = array<i64: 1, 2, 1, 128>}, {transform_indices = @transform_4, window_bounds = array<i64: 1, 2, 2, 32>}, {transform_indices = @transform_5, window_bounds = array<i64: 1, 2, 2, 32>}, {pipeline_mode = #tpu.pipeline_mode<synchronous>, transform_indices = @transform_6, window_bounds = array<i64: 16, 64>}]} {
    %c0_i32 = arith.constant 0 : i32
    %0 = arith.cmpi eq, %arg0, %c0_i32 : i32
    %1 = arith.extui %0 : i1 to i32
    %c0_i32_0 = arith.constant 0 : i32
    %2 = arith.cmpi ne, %1, %c0_i32_0 : i32
    scf.if %2 {
      %c0_228 = arith.constant 0 : index
      %c0_229 = arith.constant 0 : index
      %593 = vector.load %arg1[%c0_228, %c0_229] : memref<16x64xf32, #tpu.memory_space<vmem>>, vector<16x64xf32>
      %c0_230 = arith.constant 0 : index
      %c0_231 = arith.constant 0 : index
      %594 = vector.load %arg8[%c0_230, %c0_231] : memref<16x64xf32, #tpu.memory_space<vmem>>, vector<16x64xf32>
      tpu.vector_store %arg8[%c0_230, %c0_231], %593 {strides = array<i32>} : memref<16x64xf32, #tpu.memory_space<vmem>>, vector<16x64xf32>,
    } else {
    }
    %c0_i32_1 = arith.constant 0 : i32
    %3 = arith.cmpi sgt, %arg0, %c0_i32_1 : i32
    %4 = arith.extui %3 : i1 to i32
    %c0_i32_2 = arith.constant 0 : i32
    %5 = arith.cmpi ne, %4, %c0_i32_2 : i32
    scf.if %5 {
      %c0_228 = arith.constant 0 : index
      %c0_229 = arith.constant 0 : index
      %593 = vector.load %arg7[%c0_228, %c0_229] : memref<16x64xf32, #tpu.memory_space<vmem>>, vector<16x64xf32>
      %c0_230 = arith.constant 0 : index
      %c0_231 = arith.constant 0 : index
      %594 = vector.load %arg8[%c0_230, %c0_231] : memref<16x64xf32, #tpu.memory_space<vmem>>, vector<16x64xf32>
      tpu.vector_store %arg8[%c0_230, %c0_231], %593 {strides = array<i32>} : memref<16x64xf32, #tpu.memory_space<vmem>>, vector<16x64xf32>,
    } else {
    }
    %c0 = arith.constant 0 : index
    %c0_3 = arith.constant 0 : index
    %6 = vector.load %arg8[%c0, %c0_3] : memref<16x64xf32, #tpu.memory_space<vmem>>, vector<16x64xf32>
    %c0_4 = arith.constant 0 : index
    %c0_5 = arith.constant 0 : index
    %c0_6 = arith.constant 0 : index
    %c0_7 = arith.constant 0 : index
    %7 = vector.load %arg2[%c0_4, %c0_5, %c0_6, %c0_7] : memref<1x2x64x128xf32, #tpu.memory_space<vmem>>, vector<1x1x64x128xf32>
    %8 = vector.shape_cast %7 : vector<1x1x64x128xf32> to vector<64x128xf32>
    %cst = arith.constant dense<0.000000e+00> : vector<16x128xf32>
    %9 = tpu.matmul %6, %8, %cst {dimension_numbers = #tpu.dot_dimension_numbers<[1], [0], [0], [1], [0, 0, 1, 1], [], []>} : vector<16x64xf32>, vector<64x128xf32>, vector<16x128xf32> -> vector<16x128xf32>
    %c0_8 = arith.constant 0 : index
    %c0_9 = arith.constant 0 : index
    %c0_10 = arith.constant 0 : index
    %c0_11 = arith.constant 0 : index
    %10 = vector.load %arg4[%c0_8, %c0_9, %c0_10, %c0_11] : memref<1x2x1x128xf32, #tpu.memory_space<vmem>>, vector<1x1x1x128xf32>
    %11 = vector.shape_cast %10 : vector<1x1x1x128xf32> to vector<1x128xf32>
    %12 = vector.broadcast %11 : vector<1x128xf32> to vector<16x128xf32>
    %13 = arith.addf %9, %12 : vector<16x128xf32>
    %c0_12 = arith.constant 0 : index
    %c0_13 = arith.constant 0 : index
    %c0_14 = arith.constant 0 : index
    %c0_15 = arith.constant 0 : index
    %14 = vector.load %arg3[%c0_12, %c0_13, %c0_14, %c0_15] : memref<1x2x32x128xf32, #tpu.memory_space<vmem>>, vector<1x1x32x128xf32>
    %15 = vector.shape_cast %14 : vector<1x1x32x128xf32> to vector<32x128xf32>
    %c0_16 = arith.constant 0 : index
    %c0_17 = arith.constant 0 : index
    %c0_18 = arith.constant 0 : index
    %c0_19 = arith.constant 0 : index
    %16 = vector.load %arg5[%c0_16, %c0_17, %c0_18, %c0_19] : memref<1x2x2x32xf32, #tpu.memory_space<vmem>>, vector<1x1x2x32xf32>
    %17 = vector.shape_cast %16 : vector<1x1x2x32xf32> to vector<2x32xf32>
    %c0_20 = arith.constant 0 : index
    %c0_21 = arith.constant 0 : index
    %c0_22 = arith.constant 0 : index
    %c0_23 = arith.constant 0 : index
    %18 = vector.load %arg6[%c0_20, %c0_21, %c0_22, %c0_23] : memref<1x2x2x32xf32, #tpu.memory_space<vmem>>, vector<1x1x2x32xf32>
    %19 = vector.shape_cast %18 : vector<1x1x2x32xf32> to vector<2x32xf32>
    %20 = vector.extract_strided_slice %13 {offsets = [0, 0], sizes = [2, 128], strides = [1, 1]} : vector<16x128xf32> to vector<2x128xf32>
    %cst_24 = arith.constant dense<0.000000e+00> : vector<2x128xf32>
    %21 = tpu.matmul %17, %15, %cst_24 {dimension_numbers = #tpu.dot_dimension_numbers<[1], [0], [0], [1], [0, 0, 1, 1], [], []>} : vector<2x32xf32>, vector<32x128xf32>, vector<2x128xf32> -> vector<2x128xf32>
    %22 = arith.addf %20, %21 : vector<2x128xf32>
    %23 = vector.extract_strided_slice %22 {offsets = [0, 0], sizes = [2, 32], strides = [1, 1]} : vector<2x128xf32> to vector<2x32xf32>
    %cst_25 = arith.constant 0.000000e+00 : f32
    %24 = vector.broadcast %cst_25 : f32 to vector<2x32xf32>
    %25 = arith.subf %24, %23 : vector<2x32xf32>
    %26 = math.exp %25 : vector<2x32xf32>
    %cst_26 = arith.constant 1.000000e+00 : f32
    %27 = vector.broadcast %cst_26 : f32 to vector<2x32xf32>
    %28 = arith.addf %27, %26 : vector<2x32xf32>
    %cst_27 = arith.constant 1.000000e+00 : f32
    %29 = vector.broadcast %cst_27 : f32 to vector<2x32xf32>
    %30 = arith.divf %29, %28 : vector<2x32xf32>
    %31 = vector.extract_strided_slice %22 {offsets = [0, 32], sizes = [2, 32], strides = [1, 1]} : vector<2x128xf32> to vector<2x32xf32>
    %cst_28 = arith.constant 0.000000e+00 : f32
    %32 = vector.broadcast %cst_28 : f32 to vector<2x32xf32>
    %33 = arith.subf %32, %31 : vector<2x32xf32>
    %34 = math.exp %33 : vector<2x32xf32>
    %cst_29 = arith.constant 1.000000e+00 : f32
    %35 = vector.broadcast %cst_29 : f32 to vector<2x32xf32>
    %36 = arith.addf %35, %34 : vector<2x32xf32>
    %cst_30 = arith.constant 1.000000e+00 : f32
    %37 = vector.broadcast %cst_30 : f32 to vector<2x32xf32>
    %38 = arith.divf %37, %36 : vector<2x32xf32>
    %39 = vector.extract_strided_slice %22 {offsets = [0, 64], sizes = [2, 32], strides = [1, 1]} : vector<2x128xf32> to vector<2x32xf32>
    %40 = math.tanh %39 : vector<2x32xf32>
    %41 = vector.extract_strided_slice %22 {offsets = [0, 96], sizes = [2, 32], strides = [1, 1]} : vector<2x128xf32> to vector<2x32xf32>
    %cst_31 = arith.constant 0.000000e+00 : f32
    %42 = vector.broadcast %cst_31 : f32 to vector<2x32xf32>
    %43 = arith.subf %42, %41 : vector<2x32xf32>
    %44 = math.exp %43 : vector<2x32xf32>
    %cst_32 = arith.constant 1.000000e+00 : f32
    %45 = vector.broadcast %cst_32 : f32 to vector<2x32xf32>
    %46 = arith.addf %45, %44 : vector<2x32xf32>
    %cst_33 = arith.constant 1.000000e+00 : f32
    %47 = vector.broadcast %cst_33 : f32 to vector<2x32xf32>
    %48 = arith.divf %47, %46 : vector<2x32xf32>
    %49 = arith.mulf %38, %19 : vector<2x32xf32>
    %50 = arith.mulf %30, %40 : vector<2x32xf32>
    %51 = arith.addf %49, %50 : vector<2x32xf32>
    %52 = math.tanh %51 : vector<2x32xf32>
    %53 = arith.mulf %48, %52 : vector<2x32xf32>
    %c0_34 = arith.constant 0 : index
    %c0_35 = arith.constant 0 : index
    %54 = vector.load %arg7[%c0_34, %c0_35] : memref<16x64xf32, #tpu.memory_space<vmem>>, vector<2x32xf32>
    tpu.vector_store %arg7[%c0_34, %c0_35], %53 {strides = array<i32>} : memref<16x64xf32, #tpu.memory_space<vmem>>, vector<2x32xf32>,
    %55 = vector.extract_strided_slice %13 {offsets = [2, 0], sizes = [2, 128], strides = [1, 1]} : vector<16x128xf32> to vector<2x128xf32>
    %cst_36 = arith.constant dense<0.000000e+00> : vector<2x128xf32>
    %56 = tpu.matmul %53, %15, %cst_36 {dimension_numbers = #tpu.dot_dimension_numbers<[1], [0], [0], [1], [0, 0, 1, 1], [], []>} : vector<2x32xf32>, vector<32x128xf32>, vector<2x128xf32> -> vector<2x128xf32>
    %57 = arith.addf %55, %56 : vector<2x128xf32>
    %58 = vector.extract_strided_slice %57 {offsets = [0, 0], sizes = [2, 32], strides = [1, 1]} : vector<2x128xf32> to vector<2x32xf32>
    %cst_37 = arith.constant 0.000000e+00 : f32
    %59 = vector.broadcast %cst_37 : f32 to vector<2x32xf32>
    %60 = arith.subf %59, %58 : vector<2x32xf32>
    %61 = math.exp %60 : vector<2x32xf32>
    %cst_38 = arith.constant 1.000000e+00 : f32
    %62 = vector.broadcast %cst_38 : f32 to vector<2x32xf32>
    %63 = arith.addf %62, %61 : vector<2x32xf32>
    %cst_39 = arith.constant 1.000000e+00 : f32
    %64 = vector.broadcast %cst_39 : f32 to vector<2x32xf32>
    %65 = arith.divf %64, %63 : vector<2x32xf32>
    %66 = vector.extract_strided_slice %57 {offsets = [0, 32], sizes = [2, 32], strides = [1, 1]} : vector<2x128xf32> to vector<2x32xf32>
    %cst_40 = arith.constant 0.000000e+00 : f32
    %67 = vector.broadcast %cst_40 : f32 to vector<2x32xf32>
    %68 = arith.subf %67, %66 : vector<2x32xf32>
    %69 = math.exp %68 : vector<2x32xf32>
    %cst_41 = arith.constant 1.000000e+00 : f32
    %70 = vector.broadcast %cst_41 : f32 to vector<2x32xf32>
    %71 = arith.addf %70, %69 : vector<2x32xf32>
    %cst_42 = arith.constant 1.000000e+00 : f32
    %72 = vector.broadcast %cst_42 : f32 to vector<2x32xf32>
    %73 = arith.divf %72, %71 : vector<2x32xf32>
    %74 = vector.extract_strided_slice %57 {offsets = [0, 64], sizes = [2, 32], strides = [1, 1]} : vector<2x128xf32> to vector<2x32xf32>
    %75 = math.tanh %74 : vector<2x32xf32>
    %76 = vector.extract_strided_slice %57 {offsets = [0, 96], sizes = [2, 32], strides = [1, 1]} : vector<2x128xf32> to vector<2x32xf32>
    %cst_43 = arith.constant 0.000000e+00 : f32
    %77 = vector.broadcast %cst_43 : f32 to vector<2x32xf32>
    %78 = arith.subf %77, %76 : vector<2x32xf32>
    %79 = math.exp %78 : vector<2x32xf32>
    %cst_44 = arith.constant 1.000000e+00 : f32
    %80 = vector.broadcast %cst_44 : f32 to vector<2x32xf32>
    %81 = arith.addf %80, %79 : vector<2x32xf32>
    %cst_45 = arith.constant 1.000000e+00 : f32
    %82 = vector.broadcast %cst_45 : f32 to vector<2x32xf32>
    %83 = arith.divf %82, %81 : vector<2x32xf32>
    %84 = arith.mulf %73, %51 : vector<2x32xf32>
    %85 = arith.mulf %65, %75 : vector<2x32xf32>
    %86 = arith.addf %84, %85 : vector<2x32xf32>
    %87 = math.tanh %86 : vector<2x32xf32>
    %88 = arith.mulf %83, %87 : vector<2x32xf32>
    %c2 = arith.constant 2 : index
    %c0_46 = arith.constant 0 : index
    %89 = vector.load %arg7[%c2, %c0_46] : memref<16x64xf32, #tpu.memory_space<vmem>>, vector<2x32xf32>
    tpu.vector_store %arg7[%c2, %c0_46], %88 {strides = array<i32>} : memref<16x64xf32, #tpu.memory_space<vmem>>, vector<2x32xf32>,
    %90 = vector.extract_strided_slice %13 {offsets = [4, 0], sizes = [2, 128], strides = [1, 1]} : vector<16x128xf32> to vector<2x128xf32>
    %cst_47 = arith.constant dense<0.000000e+00> : vector<2x128xf32>
    %91 = tpu.matmul %88, %15, %cst_47 {dimension_numbers = #tpu.dot_dimension_numbers<[1], [0], [0], [1], [0, 0, 1, 1], [], []>} : vector<2x32xf32>, vector<32x128xf32>, vector<2x128xf32> -> vector<2x128xf32>
    %92 = arith.addf %90, %91 : vector<2x128xf32>
    %93 = vector.extract_strided_slice %92 {offsets = [0, 0], sizes = [2, 32], strides = [1, 1]} : vector<2x128xf32> to vector<2x32xf32>
    %cst_48 = arith.constant 0.000000e+00 : f32
    %94 = vector.broadcast %cst_48 : f32 to vector<2x32xf32>
    %95 = arith.subf %94, %93 : vector<2x32xf32>
    %96 = math.exp %95 : vector<2x32xf32>
    %cst_49 = arith.constant 1.000000e+00 : f32
    %97 = vector.broadcast %cst_49 : f32 to vector<2x32xf32>
    %98 = arith.addf %97, %96 : vector<2x32xf32>
    %cst_50 = arith.constant 1.000000e+00 : f32
    %99 = vector.broadcast %cst_50 : f32 to vector<2x32xf32>
    %100 = arith.divf %99, %98 : vector<2x32xf32>
    %101 = vector.extract_strided_slice %92 {offsets = [0, 32], sizes = [2, 32], strides = [1, 1]} : vector<2x128xf32> to vector<2x32xf32>
    %cst_51 = arith.constant 0.000000e+00 : f32
    %102 = vector.broadcast %cst_51 : f32 to vector<2x32xf32>
    %103 = arith.subf %102, %101 : vector<2x32xf32>
    %104 = math.exp %103 : vector<2x32xf32>
    %cst_52 = arith.constant 1.000000e+00 : f32
    %105 = vector.broadcast %cst_52 : f32 to vector<2x32xf32>
    %106 = arith.addf %105, %104 : vector<2x32xf32>
    %cst_53 = arith.constant 1.000000e+00 : f32
    %107 = vector.broadcast %cst_53 : f32 to vector<2x32xf32>
    %108 = arith.divf %107, %106 : vector<2x32xf32>
    %109 = vector.extract_strided_slice %92 {offsets = [0, 64], sizes = [2, 32], strides = [1, 1]} : vector<2x128xf32> to vector<2x32xf32>
    %110 = math.tanh %109 : vector<2x32xf32>
    %111 = vector.extract_strided_slice %92 {offsets = [0, 96], sizes = [2, 32], strides = [1, 1]} : vector<2x128xf32> to vector<2x32xf32>
    %cst_54 = arith.constant 0.000000e+00 : f32
    %112 = vector.broadcast %cst_54 : f32 to vector<2x32xf32>
    %113 = arith.subf %112, %111 : vector<2x32xf32>
    %114 = math.exp %113 : vector<2x32xf32>
    %cst_55 = arith.constant 1.000000e+00 : f32
    %115 = vector.broadcast %cst_55 : f32 to vector<2x32xf32>
    %116 = arith.addf %115, %114 : vector<2x32xf32>
    %cst_56 = arith.constant 1.000000e+00 : f32
    %117 = vector.broadcast %cst_56 : f32 to vector<2x32xf32>
    %118 = arith.divf %117, %116 : vector<2x32xf32>
    %119 = arith.mulf %108, %86 : vector<2x32xf32>
    %120 = arith.mulf %100, %110 : vector<2x32xf32>
    %121 = arith.addf %119, %120 : vector<2x32xf32>
    %122 = math.tanh %121 : vector<2x32xf32>
    %123 = arith.mulf %118, %122 : vector<2x32xf32>
    %c4 = arith.constant 4 : index
    %c0_57 = arith.constant 0 : index
    %124 = vector.load %arg7[%c4, %c0_57] : memref<16x64xf32, #tpu.memory_space<vmem>>, vector<2x32xf32>
    tpu.vector_store %arg7[%c4, %c0_57], %123 {strides = array<i32>} : memref<16x64xf32, #tpu.memory_space<vmem>>, vector<2x32xf32>,
    %125 = vector.extract_strided_slice %13 {offsets = [6, 0], sizes = [2, 128], strides = [1, 1]} : vector<16x128xf32> to vector<2x128xf32>
    %cst_58 = arith.constant dense<0.000000e+00> : vector<2x128xf32>
    %126 = tpu.matmul %123, %15, %cst_58 {dimension_numbers = #tpu.dot_dimension_numbers<[1], [0], [0], [1], [0, 0, 1, 1], [], []>} : vector<2x32xf32>, vector<32x128xf32>, vector<2x128xf32> -> vector<2x128xf32>
    %127 = arith.addf %125, %126 : vector<2x128xf32>
    %128 = vector.extract_strided_slice %127 {offsets = [0, 0], sizes = [2, 32], strides = [1, 1]} : vector<2x128xf32> to vector<2x32xf32>
    %cst_59 = arith.constant 0.000000e+00 : f32
    %129 = vector.broadcast %cst_59 : f32 to vector<2x32xf32>
    %130 = arith.subf %129, %128 : vector<2x32xf32>
    %131 = math.exp %130 : vector<2x32xf32>
    %cst_60 = arith.constant 1.000000e+00 : f32
    %132 = vector.broadcast %cst_60 : f32 to vector<2x32xf32>
    %133 = arith.addf %132, %131 : vector<2x32xf32>
    %cst_61 = arith.constant 1.000000e+00 : f32
    %134 = vector.broadcast %cst_61 : f32 to vector<2x32xf32>
    %135 = arith.divf %134, %133 : vector<2x32xf32>
    %136 = vector.extract_strided_slice %127 {offsets = [0, 32], sizes = [2, 32], strides = [1, 1]} : vector<2x128xf32> to vector<2x32xf32>
    %cst_62 = arith.constant 0.000000e+00 : f32
    %137 = vector.broadcast %cst_62 : f32 to vector<2x32xf32>
    %138 = arith.subf %137, %136 : vector<2x32xf32>
    %139 = math.exp %138 : vector<2x32xf32>
    %cst_63 = arith.constant 1.000000e+00 : f32
    %140 = vector.broadcast %cst_63 : f32 to vector<2x32xf32>
    %141 = arith.addf %140, %139 : vector<2x32xf32>
    %cst_64 = arith.constant 1.000000e+00 : f32
    %142 = vector.broadcast %cst_64 : f32 to vector<2x32xf32>
    %143 = arith.divf %142, %141 : vector<2x32xf32>
    %144 = vector.extract_strided_slice %127 {offsets = [0, 64], sizes = [2, 32], strides = [1, 1]} : vector<2x128xf32> to vector<2x32xf32>
    %145 = math.tanh %144 : vector<2x32xf32>
    %146 = vector.extract_strided_slice %127 {offsets = [0, 96], sizes = [2, 32], strides = [1, 1]} : vector<2x128xf32> to vector<2x32xf32>
    %cst_65 = arith.constant 0.000000e+00 : f32
    %147 = vector.broadcast %cst_65 : f32 to vector<2x32xf32>
    %148 = arith.subf %147, %146 : vector<2x32xf32>
    %149 = math.exp %148 : vector<2x32xf32>
    %cst_66 = arith.constant 1.000000e+00 : f32
    %150 = vector.broadcast %cst_66 : f32 to vector<2x32xf32>
    %151 = arith.addf %150, %149 : vector<2x32xf32>
    %cst_67 = arith.constant 1.000000e+00 : f32
    %152 = vector.broadcast %cst_67 : f32 to vector<2x32xf32>
    %153 = arith.divf %152, %151 : vector<2x32xf32>
    %154 = arith.mulf %143, %121 : vector<2x32xf32>
    %155 = arith.mulf %135, %145 : vector<2x32xf32>
    %156 = arith.addf %154, %155 : vector<2x32xf32>
    %157 = math.tanh %156 : vector<2x32xf32>
    %158 = arith.mulf %153, %157 : vector<2x32xf32>
    %c6 = arith.constant 6 : index
    %c0_68 = arith.constant 0 : index
    %159 = vector.load %arg7[%c6, %c0_68] : memref<16x64xf32, #tpu.memory_space<vmem>>, vector<2x32xf32>
    tpu.vector_store %arg7[%c6, %c0_68], %158 {strides = array<i32>} : memref<16x64xf32, #tpu.memory_space<vmem>>, vector<2x32xf32>,
    %160 = vector.extract_strided_slice %13 {offsets = [8, 0], sizes = [2, 128], strides = [1, 1]} : vector<16x128xf32> to vector<2x128xf32>
    %cst_69 = arith.constant dense<0.000000e+00> : vector<2x128xf32>
    %161 = tpu.matmul %158, %15, %cst_69 {dimension_numbers = #tpu.dot_dimension_numbers<[1], [0], [0], [1], [0, 0, 1, 1], [], []>} : vector<2x32xf32>, vector<32x128xf32>, vector<2x128xf32> -> vector<2x128xf32>
    %162 = arith.addf %160, %161 : vector<2x128xf32>
    %163 = vector.extract_strided_slice %162 {offsets = [0, 0], sizes = [2, 32], strides = [1, 1]} : vector<2x128xf32> to vector<2x32xf32>
    %cst_70 = arith.constant 0.000000e+00 : f32
    %164 = vector.broadcast %cst_70 : f32 to vector<2x32xf32>
    %165 = arith.subf %164, %163 : vector<2x32xf32>
    %166 = math.exp %165 : vector<2x32xf32>
    %cst_71 = arith.constant 1.000000e+00 : f32
    %167 = vector.broadcast %cst_71 : f32 to vector<2x32xf32>
    %168 = arith.addf %167, %166 : vector<2x32xf32>
    %cst_72 = arith.constant 1.000000e+00 : f32
    %169 = vector.broadcast %cst_72 : f32 to vector<2x32xf32>
    %170 = arith.divf %169, %168 : vector<2x32xf32>
    %171 = vector.extract_strided_slice %162 {offsets = [0, 32], sizes = [2, 32], strides = [1, 1]} : vector<2x128xf32> to vector<2x32xf32>
    %cst_73 = arith.constant 0.000000e+00 : f32
    %172 = vector.broadcast %cst_73 : f32 to vector<2x32xf32>
    %173 = arith.subf %172, %171 : vector<2x32xf32>
    %174 = math.exp %173 : vector<2x32xf32>
    %cst_74 = arith.constant 1.000000e+00 : f32
    %175 = vector.broadcast %cst_74 : f32 to vector<2x32xf32>
    %176 = arith.addf %175, %174 : vector<2x32xf32>
    %cst_75 = arith.constant 1.000000e+00 : f32
    %177 = vector.broadcast %cst_75 : f32 to vector<2x32xf32>
    %178 = arith.divf %177, %176 : vector<2x32xf32>
    %179 = vector.extract_strided_slice %162 {offsets = [0, 64], sizes = [2, 32], strides = [1, 1]} : vector<2x128xf32> to vector<2x32xf32>
    %180 = math.tanh %179 : vector<2x32xf32>
    %181 = vector.extract_strided_slice %162 {offsets = [0, 96], sizes = [2, 32], strides = [1, 1]} : vector<2x128xf32> to vector<2x32xf32>
    %cst_76 = arith.constant 0.000000e+00 : f32
    %182 = vector.broadcast %cst_76 : f32 to vector<2x32xf32>
    %183 = arith.subf %182, %181 : vector<2x32xf32>
    %184 = math.exp %183 : vector<2x32xf32>
    %cst_77 = arith.constant 1.000000e+00 : f32
    %185 = vector.broadcast %cst_77 : f32 to vector<2x32xf32>
    %186 = arith.addf %185, %184 : vector<2x32xf32>
    %cst_78 = arith.constant 1.000000e+00 : f32
    %187 = vector.broadcast %cst_78 : f32 to vector<2x32xf32>
    %188 = arith.divf %187, %186 : vector<2x32xf32>
    %189 = arith.mulf %178, %156 : vector<2x32xf32>
    %190 = arith.mulf %170, %180 : vector<2x32xf32>
    %191 = arith.addf %189, %190 : vector<2x32xf32>
    %192 = math.tanh %191 : vector<2x32xf32>
    %193 = arith.mulf %188, %192 : vector<2x32xf32>
    %c8 = arith.constant 8 : index
    %c0_79 = arith.constant 0 : index
    %194 = vector.load %arg7[%c8, %c0_79] : memref<16x64xf32, #tpu.memory_space<vmem>>, vector<2x32xf32>
    tpu.vector_store %arg7[%c8, %c0_79], %193 {strides = array<i32>} : memref<16x64xf32, #tpu.memory_space<vmem>>, vector<2x32xf32>,
    %195 = vector.extract_strided_slice %13 {offsets = [10, 0], sizes = [2, 128], strides = [1, 1]} : vector<16x128xf32> to vector<2x128xf32>
    %cst_80 = arith.constant dense<0.000000e+00> : vector<2x128xf32>
    %196 = tpu.matmul %193, %15, %cst_80 {dimension_numbers = #tpu.dot_dimension_numbers<[1], [0], [0], [1], [0, 0, 1, 1], [], []>} : vector<2x32xf32>, vector<32x128xf32>, vector<2x128xf32> -> vector<2x128xf32>
    %197 = arith.addf %195, %196 : vector<2x128xf32>
    %198 = vector.extract_strided_slice %197 {offsets = [0, 0], sizes = [2, 32], strides = [1, 1]} : vector<2x128xf32> to vector<2x32xf32>
    %cst_81 = arith.constant 0.000000e+00 : f32
    %199 = vector.broadcast %cst_81 : f32 to vector<2x32xf32>
    %200 = arith.subf %199, %198 : vector<2x32xf32>
    %201 = math.exp %200 : vector<2x32xf32>
    %cst_82 = arith.constant 1.000000e+00 : f32
    %202 = vector.broadcast %cst_82 : f32 to vector<2x32xf32>
    %203 = arith.addf %202, %201 : vector<2x32xf32>
    %cst_83 = arith.constant 1.000000e+00 : f32
    %204 = vector.broadcast %cst_83 : f32 to vector<2x32xf32>
    %205 = arith.divf %204, %203 : vector<2x32xf32>
    %206 = vector.extract_strided_slice %197 {offsets = [0, 32], sizes = [2, 32], strides = [1, 1]} : vector<2x128xf32> to vector<2x32xf32>
    %cst_84 = arith.constant 0.000000e+00 : f32
    %207 = vector.broadcast %cst_84 : f32 to vector<2x32xf32>
    %208 = arith.subf %207, %206 : vector<2x32xf32>
    %209 = math.exp %208 : vector<2x32xf32>
    %cst_85 = arith.constant 1.000000e+00 : f32
    %210 = vector.broadcast %cst_85 : f32 to vector<2x32xf32>
    %211 = arith.addf %210, %209 : vector<2x32xf32>
    %cst_86 = arith.constant 1.000000e+00 : f32
    %212 = vector.broadcast %cst_86 : f32 to vector<2x32xf32>
    %213 = arith.divf %212, %211 : vector<2x32xf32>
    %214 = vector.extract_strided_slice %197 {offsets = [0, 64], sizes = [2, 32], strides = [1, 1]} : vector<2x128xf32> to vector<2x32xf32>
    %215 = math.tanh %214 : vector<2x32xf32>
    %216 = vector.extract_strided_slice %197 {offsets = [0, 96], sizes = [2, 32], strides = [1, 1]} : vector<2x128xf32> to vector<2x32xf32>
    %cst_87 = arith.constant 0.000000e+00 : f32
    %217 = vector.broadcast %cst_87 : f32 to vector<2x32xf32>
    %218 = arith.subf %217, %216 : vector<2x32xf32>
    %219 = math.exp %218 : vector<2x32xf32>
    %cst_88 = arith.constant 1.000000e+00 : f32
    %220 = vector.broadcast %cst_88 : f32 to vector<2x32xf32>
    %221 = arith.addf %220, %219 : vector<2x32xf32>
    %cst_89 = arith.constant 1.000000e+00 : f32
    %222 = vector.broadcast %cst_89 : f32 to vector<2x32xf32>
    %223 = arith.divf %222, %221 : vector<2x32xf32>
    %224 = arith.mulf %213, %191 : vector<2x32xf32>
    %225 = arith.mulf %205, %215 : vector<2x32xf32>
    %226 = arith.addf %224, %225 : vector<2x32xf32>
    %227 = math.tanh %226 : vector<2x32xf32>
    %228 = arith.mulf %223, %227 : vector<2x32xf32>
    %c10 = arith.constant 10 : index
    %c0_90 = arith.constant 0 : index
    %229 = vector.load %arg7[%c10, %c0_90] : memref<16x64xf32, #tpu.memory_space<vmem>>, vector<2x32xf32>
    tpu.vector_store %arg7[%c10, %c0_90], %228 {strides = array<i32>} : memref<16x64xf32, #tpu.memory_space<vmem>>, vector<2x32xf32>,
    %230 = vector.extract_strided_slice %13 {offsets = [12, 0], sizes = [2, 128], strides = [1, 1]} : vector<16x128xf32> to vector<2x128xf32>
    %cst_91 = arith.constant dense<0.000000e+00> : vector<2x128xf32>
    %231 = tpu.matmul %228, %15, %cst_91 {dimension_numbers = #tpu.dot_dimension_numbers<[1], [0], [0], [1], [0, 0, 1, 1], [], []>} : vector<2x32xf32>, vector<32x128xf32>, vector<2x128xf32> -> vector<2x128xf32>
    %232 = arith.addf %230, %231 : vector<2x128xf32>
    %233 = vector.extract_strided_slice %232 {offsets = [0, 0], sizes = [2, 32], strides = [1, 1]} : vector<2x128xf32> to vector<2x32xf32>
    %cst_92 = arith.constant 0.000000e+00 : f32
    %234 = vector.broadcast %cst_92 : f32 to vector<2x32xf32>
    %235 = arith.subf %234, %233 : vector<2x32xf32>
    %236 = math.exp %235 : vector<2x32xf32>
    %cst_93 = arith.constant 1.000000e+00 : f32
    %237 = vector.broadcast %cst_93 : f32 to vector<2x32xf32>
    %238 = arith.addf %237, %236 : vector<2x32xf32>
    %cst_94 = arith.constant 1.000000e+00 : f32
    %239 = vector.broadcast %cst_94 : f32 to vector<2x32xf32>
    %240 = arith.divf %239, %238 : vector<2x32xf32>
    %241 = vector.extract_strided_slice %232 {offsets = [0, 32], sizes = [2, 32], strides = [1, 1]} : vector<2x128xf32> to vector<2x32xf32>
    %cst_95 = arith.constant 0.000000e+00 : f32
    %242 = vector.broadcast %cst_95 : f32 to vector<2x32xf32>
    %243 = arith.subf %242, %241 : vector<2x32xf32>
    %244 = math.exp %243 : vector<2x32xf32>
    %cst_96 = arith.constant 1.000000e+00 : f32
    %245 = vector.broadcast %cst_96 : f32 to vector<2x32xf32>
    %246 = arith.addf %245, %244 : vector<2x32xf32>
    %cst_97 = arith.constant 1.000000e+00 : f32
    %247 = vector.broadcast %cst_97 : f32 to vector<2x32xf32>
    %248 = arith.divf %247, %246 : vector<2x32xf32>
    %249 = vector.extract_strided_slice %232 {offsets = [0, 64], sizes = [2, 32], strides = [1, 1]} : vector<2x128xf32> to vector<2x32xf32>
    %250 = math.tanh %249 : vector<2x32xf32>
    %251 = vector.extract_strided_slice %232 {offsets = [0, 96], sizes = [2, 32], strides = [1, 1]} : vector<2x128xf32> to vector<2x32xf32>
    %cst_98 = arith.constant 0.000000e+00 : f32
    %252 = vector.broadcast %cst_98 : f32 to vector<2x32xf32>
    %253 = arith.subf %252, %251 : vector<2x32xf32>
    %254 = math.exp %253 : vector<2x32xf32>
    %cst_99 = arith.constant 1.000000e+00 : f32
    %255 = vector.broadcast %cst_99 : f32 to vector<2x32xf32>
    %256 = arith.addf %255, %254 : vector<2x32xf32>
    %cst_100 = arith.constant 1.000000e+00 : f32
    %257 = vector.broadcast %cst_100 : f32 to vector<2x32xf32>
    %258 = arith.divf %257, %256 : vector<2x32xf32>
    %259 = arith.mulf %248, %226 : vector<2x32xf32>
    %260 = arith.mulf %240, %250 : vector<2x32xf32>
    %261 = arith.addf %259, %260 : vector<2x32xf32>
    %262 = math.tanh %261 : vector<2x32xf32>
    %263 = arith.mulf %258, %262 : vector<2x32xf32>
    %c12 = arith.constant 12 : index
    %c0_101 = arith.constant 0 : index
    %264 = vector.load %arg7[%c12, %c0_101] : memref<16x64xf32, #tpu.memory_space<vmem>>, vector<2x32xf32>
    tpu.vector_store %arg7[%c12, %c0_101], %263 {strides = array<i32>} : memref<16x64xf32, #tpu.memory_space<vmem>>, vector<2x32xf32>,
    %265 = vector.extract_strided_slice %13 {offsets = [14, 0], sizes = [2, 128], strides = [1, 1]} : vector<16x128xf32> to vector<2x128xf32>
    %cst_102 = arith.constant dense<0.000000e+00> : vector<2x128xf32>
    %266 = tpu.matmul %263, %15, %cst_102 {dimension_numbers = #tpu.dot_dimension_numbers<[1], [0], [0], [1], [0, 0, 1, 1], [], []>} : vector<2x32xf32>, vector<32x128xf32>, vector<2x128xf32> -> vector<2x128xf32>
    %267 = arith.addf %265, %266 : vector<2x128xf32>
    %268 = vector.extract_strided_slice %267 {offsets = [0, 0], sizes = [2, 32], strides = [1, 1]} : vector<2x128xf32> to vector<2x32xf32>
    %cst_103 = arith.constant 0.000000e+00 : f32
    %269 = vector.broadcast %cst_103 : f32 to vector<2x32xf32>
    %270 = arith.subf %269, %268 : vector<2x32xf32>
    %271 = math.exp %270 : vector<2x32xf32>
    %cst_104 = arith.constant 1.000000e+00 : f32
    %272 = vector.broadcast %cst_104 : f32 to vector<2x32xf32>
    %273 = arith.addf %272, %271 : vector<2x32xf32>
    %cst_105 = arith.constant 1.000000e+00 : f32
    %274 = vector.broadcast %cst_105 : f32 to vector<2x32xf32>
    %275 = arith.divf %274, %273 : vector<2x32xf32>
    %276 = vector.extract_strided_slice %267 {offsets = [0, 32], sizes = [2, 32], strides = [1, 1]} : vector<2x128xf32> to vector<2x32xf32>
    %cst_106 = arith.constant 0.000000e+00 : f32
    %277 = vector.broadcast %cst_106 : f32 to vector<2x32xf32>
    %278 = arith.subf %277, %276 : vector<2x32xf32>
    %279 = math.exp %278 : vector<2x32xf32>
    %cst_107 = arith.constant 1.000000e+00 : f32
    %280 = vector.broadcast %cst_107 : f32 to vector<2x32xf32>
    %281 = arith.addf %280, %279 : vector<2x32xf32>
    %cst_108 = arith.constant 1.000000e+00 : f32
    %282 = vector.broadcast %cst_108 : f32 to vector<2x32xf32>
    %283 = arith.divf %282, %281 : vector<2x32xf32>
    %284 = vector.extract_strided_slice %267 {offsets = [0, 64], sizes = [2, 32], strides = [1, 1]} : vector<2x128xf32> to vector<2x32xf32>
    %285 = math.tanh %284 : vector<2x32xf32>
    %286 = vector.extract_strided_slice %267 {offsets = [0, 96], sizes = [2, 32], strides = [1, 1]} : vector<2x128xf32> to vector<2x32xf32>
    %cst_109 = arith.constant 0.000000e+00 : f32
    %287 = vector.broadcast %cst_109 : f32 to vector<2x32xf32>
    %288 = arith.subf %287, %286 : vector<2x32xf32>
    %289 = math.exp %288 : vector<2x32xf32>
    %cst_110 = arith.constant 1.000000e+00 : f32
    %290 = vector.broadcast %cst_110 : f32 to vector<2x32xf32>
    %291 = arith.addf %290, %289 : vector<2x32xf32>
    %cst_111 = arith.constant 1.000000e+00 : f32
    %292 = vector.broadcast %cst_111 : f32 to vector<2x32xf32>
    %293 = arith.divf %292, %291 : vector<2x32xf32>
    %294 = arith.mulf %283, %261 : vector<2x32xf32>
    %295 = arith.mulf %275, %285 : vector<2x32xf32>
    %296 = arith.addf %294, %295 : vector<2x32xf32>
    %297 = math.tanh %296 : vector<2x32xf32>
    %298 = arith.mulf %293, %297 : vector<2x32xf32>
    %c14 = arith.constant 14 : index
    %c0_112 = arith.constant 0 : index
    %299 = vector.load %arg7[%c14, %c0_112] : memref<16x64xf32, #tpu.memory_space<vmem>>, vector<2x32xf32>
    tpu.vector_store %arg7[%c14, %c0_112], %298 {strides = array<i32>} : memref<16x64xf32, #tpu.memory_space<vmem>>, vector<2x32xf32>,
    %c0_113 = arith.constant 0 : index
    %c1 = arith.constant 1 : index
    %c0_114 = arith.constant 0 : index
    %c0_115 = arith.constant 0 : index
    %300 = vector.load %arg2[%c0_113, %c1, %c0_114, %c0_115] : memref<1x2x64x128xf32, #tpu.memory_space<vmem>>, vector<1x1x64x128xf32>
    %301 = vector.shape_cast %300 : vector<1x1x64x128xf32> to vector<64x128xf32>
    %cst_116 = arith.constant dense<0.000000e+00> : vector<16x128xf32>
    %302 = tpu.matmul %6, %301, %cst_116 {dimension_numbers = #tpu.dot_dimension_numbers<[1], [0], [0], [1], [0, 0, 1, 1], [], []>} : vector<16x64xf32>, vector<64x128xf32>, vector<16x128xf32> -> vector<16x128xf32>
    %c0_117 = arith.constant 0 : index
    %c1_118 = arith.constant 1 : index
    %c0_119 = arith.constant 0 : index
    %c0_120 = arith.constant 0 : index
    %303 = vector.load %arg4[%c0_117, %c1_118, %c0_119, %c0_120] : memref<1x2x1x128xf32, #tpu.memory_space<vmem>>, vector<1x1x1x128xf32>
    %304 = vector.shape_cast %303 : vector<1x1x1x128xf32> to vector<1x128xf32>
    %305 = vector.broadcast %304 : vector<1x128xf32> to vector<16x128xf32>
    %306 = arith.addf %302, %305 : vector<16x128xf32>
    %c0_121 = arith.constant 0 : index
    %c1_122 = arith.constant 1 : index
    %c0_123 = arith.constant 0 : index
    %c0_124 = arith.constant 0 : index
    %307 = vector.load %arg3[%c0_121, %c1_122, %c0_123, %c0_124] : memref<1x2x32x128xf32, #tpu.memory_space<vmem>>, vector<1x1x32x128xf32>
    %308 = vector.shape_cast %307 : vector<1x1x32x128xf32> to vector<32x128xf32>
    %c0_125 = arith.constant 0 : index
    %c1_126 = arith.constant 1 : index
    %c0_127 = arith.constant 0 : index
    %c0_128 = arith.constant 0 : index
    %309 = vector.load %arg5[%c0_125, %c1_126, %c0_127, %c0_128] : memref<1x2x2x32xf32, #tpu.memory_space<vmem>>, vector<1x1x2x32xf32>
    %310 = vector.shape_cast %309 : vector<1x1x2x32xf32> to vector<2x32xf32>
    %c0_129 = arith.constant 0 : index
    %c1_130 = arith.constant 1 : index
    %c0_131 = arith.constant 0 : index
    %c0_132 = arith.constant 0 : index
    %311 = vector.load %arg6[%c0_129, %c1_130, %c0_131, %c0_132] : memref<1x2x2x32xf32, #tpu.memory_space<vmem>>, vector<1x1x2x32xf32>
    %312 = vector.shape_cast %311 : vector<1x1x2x32xf32> to vector<2x32xf32>
    %313 = vector.extract_strided_slice %306 {offsets = [14, 0], sizes = [2, 128], strides = [1, 1]} : vector<16x128xf32> to vector<2x128xf32>
    %cst_133 = arith.constant dense<0.000000e+00> : vector<2x128xf32>
    %314 = tpu.matmul %310, %308, %cst_133 {dimension_numbers = #tpu.dot_dimension_numbers<[1], [0], [0], [1], [0, 0, 1, 1], [], []>} : vector<2x32xf32>, vector<32x128xf32>, vector<2x128xf32> -> vector<2x128xf32>
    %315 = arith.addf %313, %314 : vector<2x128xf32>
    %316 = vector.extract_strided_slice %315 {offsets = [0, 0], sizes = [2, 32], strides = [1, 1]} : vector<2x128xf32> to vector<2x32xf32>
    %cst_134 = arith.constant 0.000000e+00 : f32
    %317 = vector.broadcast %cst_134 : f32 to vector<2x32xf32>
    %318 = arith.subf %317, %316 : vector<2x32xf32>
    %319 = math.exp %318 : vector<2x32xf32>
    %cst_135 = arith.constant 1.000000e+00 : f32
    %320 = vector.broadcast %cst_135 : f32 to vector<2x32xf32>
    %321 = arith.addf %320, %319 : vector<2x32xf32>
    %cst_136 = arith.constant 1.000000e+00 : f32
    %322 = vector.broadcast %cst_136 : f32 to vector<2x32xf32>
    %323 = arith.divf %322, %321 : vector<2x32xf32>
    %324 = vector.extract_strided_slice %315 {offsets = [0, 32], sizes = [2, 32], strides = [1, 1]} : vector<2x128xf32> to vector<2x32xf32>
    %cst_137 = arith.constant 0.000000e+00 : f32
    %325 = vector.broadcast %cst_137 : f32 to vector<2x32xf32>
    %326 = arith.subf %325, %324 : vector<2x32xf32>
    %327 = math.exp %326 : vector<2x32xf32>
    %cst_138 = arith.constant 1.000000e+00 : f32
    %328 = vector.broadcast %cst_138 : f32 to vector<2x32xf32>
    %329 = arith.addf %328, %327 : vector<2x32xf32>
    %cst_139 = arith.constant 1.000000e+00 : f32
    %330 = vector.broadcast %cst_139 : f32 to vector<2x32xf32>
    %331 = arith.divf %330, %329 : vector<2x32xf32>
    %332 = vector.extract_strided_slice %315 {offsets = [0, 64], sizes = [2, 32], strides = [1, 1]} : vector<2x128xf32> to vector<2x32xf32>
    %333 = math.tanh %332 : vector<2x32xf32>
    %334 = vector.extract_strided_slice %315 {offsets = [0, 96], sizes = [2, 32], strides = [1, 1]} : vector<2x128xf32> to vector<2x32xf32>
    %cst_140 = arith.constant 0.000000e+00 : f32
    %335 = vector.broadcast %cst_140 : f32 to vector<2x32xf32>
    %336 = arith.subf %335, %334 : vector<2x32xf32>
    %337 = math.exp %336 : vector<2x32xf32>
    %cst_141 = arith.constant 1.000000e+00 : f32
    %338 = vector.broadcast %cst_141 : f32 to vector<2x32xf32>
    %339 = arith.addf %338, %337 : vector<2x32xf32>
    %cst_142 = arith.constant 1.000000e+00 : f32
    %340 = vector.broadcast %cst_142 : f32 to vector<2x32xf32>
    %341 = arith.divf %340, %339 : vector<2x32xf32>
    %342 = arith.mulf %331, %312 : vector<2x32xf32>
    %343 = arith.mulf %323, %333 : vector<2x32xf32>
    %344 = arith.addf %342, %343 : vector<2x32xf32>
    %345 = math.tanh %344 : vector<2x32xf32>
    %346 = arith.mulf %341, %345 : vector<2x32xf32>
    %c14_143 = arith.constant 14 : index
    %c32 = arith.constant 32 : index
    %347 = vector.load %arg7[%c14_143, %c32] : memref<16x64xf32, #tpu.memory_space<vmem>>, vector<2x32xf32>
    tpu.vector_store %arg7[%c14_143, %c32], %346 {strides = array<i32>} : memref<16x64xf32, #tpu.memory_space<vmem>>, vector<2x32xf32>,
    %348 = vector.extract_strided_slice %306 {offsets = [12, 0], sizes = [2, 128], strides = [1, 1]} : vector<16x128xf32> to vector<2x128xf32>
    %cst_144 = arith.constant dense<0.000000e+00> : vector<2x128xf32>
    %349 = tpu.matmul %346, %308, %cst_144 {dimension_numbers = #tpu.dot_dimension_numbers<[1], [0], [0], [1], [0, 0, 1, 1], [], []>} : vector<2x32xf32>, vector<32x128xf32>, vector<2x128xf32> -> vector<2x128xf32>
    %350 = arith.addf %348, %349 : vector<2x128xf32>
    %351 = vector.extract_strided_slice %350 {offsets = [0, 0], sizes = [2, 32], strides = [1, 1]} : vector<2x128xf32> to vector<2x32xf32>
    %cst_145 = arith.constant 0.000000e+00 : f32
    %352 = vector.broadcast %cst_145 : f32 to vector<2x32xf32>
    %353 = arith.subf %352, %351 : vector<2x32xf32>
    %354 = math.exp %353 : vector<2x32xf32>
    %cst_146 = arith.constant 1.000000e+00 : f32
    %355 = vector.broadcast %cst_146 : f32 to vector<2x32xf32>
    %356 = arith.addf %355, %354 : vector<2x32xf32>
    %cst_147 = arith.constant 1.000000e+00 : f32
    %357 = vector.broadcast %cst_147 : f32 to vector<2x32xf32>
    %358 = arith.divf %357, %356 : vector<2x32xf32>
    %359 = vector.extract_strided_slice %350 {offsets = [0, 32], sizes = [2, 32], strides = [1, 1]} : vector<2x128xf32> to vector<2x32xf32>
    %cst_148 = arith.constant 0.000000e+00 : f32
    %360 = vector.broadcast %cst_148 : f32 to vector<2x32xf32>
    %361 = arith.subf %360, %359 : vector<2x32xf32>
    %362 = math.exp %361 : vector<2x32xf32>
    %cst_149 = arith.constant 1.000000e+00 : f32
    %363 = vector.broadcast %cst_149 : f32 to vector<2x32xf32>
    %364 = arith.addf %363, %362 : vector<2x32xf32>
    %cst_150 = arith.constant 1.000000e+00 : f32
    %365 = vector.broadcast %cst_150 : f32 to vector<2x32xf32>
    %366 = arith.divf %365, %364 : vector<2x32xf32>
    %367 = vector.extract_strided_slice %350 {offsets = [0, 64], sizes = [2, 32], strides = [1, 1]} : vector<2x128xf32> to vector<2x32xf32>
    %368 = math.tanh %367 : vector<2x32xf32>
    %369 = vector.extract_strided_slice %350 {offsets = [0, 96], sizes = [2, 32], strides = [1, 1]} : vector<2x128xf32> to vector<2x32xf32>
    %cst_151 = arith.constant 0.000000e+00 : f32
    %370 = vector.broadcast %cst_151 : f32 to vector<2x32xf32>
    %371 = arith.subf %370, %369 : vector<2x32xf32>
    %372 = math.exp %371 : vector<2x32xf32>
    %cst_152 = arith.constant 1.000000e+00 : f32
    %373 = vector.broadcast %cst_152 : f32 to vector<2x32xf32>
    %374 = arith.addf %373, %372 : vector<2x32xf32>
    %cst_153 = arith.constant 1.000000e+00 : f32
    %375 = vector.broadcast %cst_153 : f32 to vector<2x32xf32>
    %376 = arith.divf %375, %374 : vector<2x32xf32>
    %377 = arith.mulf %366, %344 : vector<2x32xf32>
    %378 = arith.mulf %358, %368 : vector<2x32xf32>
    %379 = arith.addf %377, %378 : vector<2x32xf32>
    %380 = math.tanh %379 : vector<2x32xf32>
    %381 = arith.mulf %376, %380 : vector<2x32xf32>
    %c12_154 = arith.constant 12 : index
    %c32_155 = arith.constant 32 : index
    %382 = vector.load %arg7[%c12_154, %c32_155] : memref<16x64xf32, #tpu.memory_space<vmem>>, vector<2x32xf32>
    tpu.vector_store %arg7[%c12_154, %c32_155], %381 {strides = array<i32>} : memref<16x64xf32, #tpu.memory_space<vmem>>, vector<2x32xf32>,
    %383 = vector.extract_strided_slice %306 {offsets = [10, 0], sizes = [2, 128], strides = [1, 1]} : vector<16x128xf32> to vector<2x128xf32>
    %cst_156 = arith.constant dense<0.000000e+00> : vector<2x128xf32>
    %384 = tpu.matmul %381, %308, %cst_156 {dimension_numbers = #tpu.dot_dimension_numbers<[1], [0], [0], [1], [0, 0, 1, 1], [], []>} : vector<2x32xf32>, vector<32x128xf32>, vector<2x128xf32> -> vector<2x128xf32>
    %385 = arith.addf %383, %384 : vector<2x128xf32>
    %386 = vector.extract_strided_slice %385 {offsets = [0, 0], sizes = [2, 32], strides = [1, 1]} : vector<2x128xf32> to vector<2x32xf32>
    %cst_157 = arith.constant 0.000000e+00 : f32
    %387 = vector.broadcast %cst_157 : f32 to vector<2x32xf32>
    %388 = arith.subf %387, %386 : vector<2x32xf32>
    %389 = math.exp %388 : vector<2x32xf32>
    %cst_158 = arith.constant 1.000000e+00 : f32
    %390 = vector.broadcast %cst_158 : f32 to vector<2x32xf32>
    %391 = arith.addf %390, %389 : vector<2x32xf32>
    %cst_159 = arith.constant 1.000000e+00 : f32
    %392 = vector.broadcast %cst_159 : f32 to vector<2x32xf32>
    %393 = arith.divf %392, %391 : vector<2x32xf32>
    %394 = vector.extract_strided_slice %385 {offsets = [0, 32], sizes = [2, 32], strides = [1, 1]} : vector<2x128xf32> to vector<2x32xf32>
    %cst_160 = arith.constant 0.000000e+00 : f32
    %395 = vector.broadcast %cst_160 : f32 to vector<2x32xf32>
    %396 = arith.subf %395, %394 : vector<2x32xf32>
    %397 = math.exp %396 : vector<2x32xf32>
    %cst_161 = arith.constant 1.000000e+00 : f32
    %398 = vector.broadcast %cst_161 : f32 to vector<2x32xf32>
    %399 = arith.addf %398, %397 : vector<2x32xf32>
    %cst_162 = arith.constant 1.000000e+00 : f32
    %400 = vector.broadcast %cst_162 : f32 to vector<2x32xf32>
    %401 = arith.divf %400, %399 : vector<2x32xf32>
    %402 = vector.extract_strided_slice %385 {offsets = [0, 64], sizes = [2, 32], strides = [1, 1]} : vector<2x128xf32> to vector<2x32xf32>
    %403 = math.tanh %402 : vector<2x32xf32>
    %404 = vector.extract_strided_slice %385 {offsets = [0, 96], sizes = [2, 32], strides = [1, 1]} : vector<2x128xf32> to vector<2x32xf32>
    %cst_163 = arith.constant 0.000000e+00 : f32
    %405 = vector.broadcast %cst_163 : f32 to vector<2x32xf32>
    %406 = arith.subf %405, %404 : vector<2x32xf32>
    %407 = math.exp %406 : vector<2x32xf32>
    %cst_164 = arith.constant 1.000000e+00 : f32
    %408 = vector.broadcast %cst_164 : f32 to vector<2x32xf32>
    %409 = arith.addf %408, %407 : vector<2x32xf32>
    %cst_165 = arith.constant 1.000000e+00 : f32
    %410 = vector.broadcast %cst_165 : f32 to vector<2x32xf32>
    %411 = arith.divf %410, %409 : vector<2x32xf32>
    %412 = arith.mulf %401, %379 : vector<2x32xf32>
    %413 = arith.mulf %393, %403 : vector<2x32xf32>
    %414 = arith.addf %412, %413 : vector<2x32xf32>
    %415 = math.tanh %414 : vector<2x32xf32>
    %416 = arith.mulf %411, %415 : vector<2x32xf32>
    %c10_166 = arith.constant 10 : index
    %c32_167 = arith.constant 32 : index
    %417 = vector.load %arg7[%c10_166, %c32_167] : memref<16x64xf32, #tpu.memory_space<vmem>>, vector<2x32xf32>
    tpu.vector_store %arg7[%c10_166, %c32_167], %416 {strides = array<i32>} : memref<16x64xf32, #tpu.memory_space<vmem>>, vector<2x32xf32>,
    %418 = vector.extract_strided_slice %306 {offsets = [8, 0], sizes = [2, 128], strides = [1, 1]} : vector<16x128xf32> to vector<2x128xf32>
    %cst_168 = arith.constant dense<0.000000e+00> : vector<2x128xf32>
    %419 = tpu.matmul %416, %308, %cst_168 {dimension_numbers = #tpu.dot_dimension_numbers<[1], [0], [0], [1], [0, 0, 1, 1], [], []>} : vector<2x32xf32>, vector<32x128xf32>, vector<2x128xf32> -> vector<2x128xf32>
    %420 = arith.addf %418, %419 : vector<2x128xf32>
    %421 = vector.extract_strided_slice %420 {offsets = [0, 0], sizes = [2, 32], strides = [1, 1]} : vector<2x128xf32> to vector<2x32xf32>
    %cst_169 = arith.constant 0.000000e+00 : f32
    %422 = vector.broadcast %cst_169 : f32 to vector<2x32xf32>
    %423 = arith.subf %422, %421 : vector<2x32xf32>
    %424 = math.exp %423 : vector<2x32xf32>
    %cst_170 = arith.constant 1.000000e+00 : f32
    %425 = vector.broadcast %cst_170 : f32 to vector<2x32xf32>
    %426 = arith.addf %425, %424 : vector<2x32xf32>
    %cst_171 = arith.constant 1.000000e+00 : f32
    %427 = vector.broadcast %cst_171 : f32 to vector<2x32xf32>
    %428 = arith.divf %427, %426 : vector<2x32xf32>
    %429 = vector.extract_strided_slice %420 {offsets = [0, 32], sizes = [2, 32], strides = [1, 1]} : vector<2x128xf32> to vector<2x32xf32>
    %cst_172 = arith.constant 0.000000e+00 : f32
    %430 = vector.broadcast %cst_172 : f32 to vector<2x32xf32>
    %431 = arith.subf %430, %429 : vector<2x32xf32>
    %432 = math.exp %431 : vector<2x32xf32>
    %cst_173 = arith.constant 1.000000e+00 : f32
    %433 = vector.broadcast %cst_173 : f32 to vector<2x32xf32>
    %434 = arith.addf %433, %432 : vector<2x32xf32>
    %cst_174 = arith.constant 1.000000e+00 : f32
    %435 = vector.broadcast %cst_174 : f32 to vector<2x32xf32>
    %436 = arith.divf %435, %434 : vector<2x32xf32>
    %437 = vector.extract_strided_slice %420 {offsets = [0, 64], sizes = [2, 32], strides = [1, 1]} : vector<2x128xf32> to vector<2x32xf32>
    %438 = math.tanh %437 : vector<2x32xf32>
    %439 = vector.extract_strided_slice %420 {offsets = [0, 96], sizes = [2, 32], strides = [1, 1]} : vector<2x128xf32> to vector<2x32xf32>
    %cst_175 = arith.constant 0.000000e+00 : f32
    %440 = vector.broadcast %cst_175 : f32 to vector<2x32xf32>
    %441 = arith.subf %440, %439 : vector<2x32xf32>
    %442 = math.exp %441 : vector<2x32xf32>
    %cst_176 = arith.constant 1.000000e+00 : f32
    %443 = vector.broadcast %cst_176 : f32 to vector<2x32xf32>
    %444 = arith.addf %443, %442 : vector<2x32xf32>
    %cst_177 = arith.constant 1.000000e+00 : f32
    %445 = vector.broadcast %cst_177 : f32 to vector<2x32xf32>
    %446 = arith.divf %445, %444 : vector<2x32xf32>
    %447 = arith.mulf %436, %414 : vector<2x32xf32>
    %448 = arith.mulf %428, %438 : vector<2x32xf32>
    %449 = arith.addf %447, %448 : vector<2x32xf32>
    %450 = math.tanh %449 : vector<2x32xf32>
    %451 = arith.mulf %446, %450 : vector<2x32xf32>
    %c8_178 = arith.constant 8 : index
    %c32_179 = arith.constant 32 : index
    %452 = vector.load %arg7[%c8_178, %c32_179] : memref<16x64xf32, #tpu.memory_space<vmem>>, vector<2x32xf32>
    tpu.vector_store %arg7[%c8_178, %c32_179], %451 {strides = array<i32>} : memref<16x64xf32, #tpu.memory_space<vmem>>, vector<2x32xf32>,
    %453 = vector.extract_strided_slice %306 {offsets = [6, 0], sizes = [2, 128], strides = [1, 1]} : vector<16x128xf32> to vector<2x128xf32>
    %cst_180 = arith.constant dense<0.000000e+00> : vector<2x128xf32>
    %454 = tpu.matmul %451, %308, %cst_180 {dimension_numbers = #tpu.dot_dimension_numbers<[1], [0], [0], [1], [0, 0, 1, 1], [], []>} : vector<2x32xf32>, vector<32x128xf32>, vector<2x128xf32> -> vector<2x128xf32>
    %455 = arith.addf %453, %454 : vector<2x128xf32>
    %456 = vector.extract_strided_slice %455 {offsets = [0, 0], sizes = [2, 32], strides = [1, 1]} : vector<2x128xf32> to vector<2x32xf32>
    %cst_181 = arith.constant 0.000000e+00 : f32
    %457 = vector.broadcast %cst_181 : f32 to vector<2x32xf32>
    %458 = arith.subf %457, %456 : vector<2x32xf32>
    %459 = math.exp %458 : vector<2x32xf32>
    %cst_182 = arith.constant 1.000000e+00 : f32
    %460 = vector.broadcast %cst_182 : f32 to vector<2x32xf32>
    %461 = arith.addf %460, %459 : vector<2x32xf32>
    %cst_183 = arith.constant 1.000000e+00 : f32
    %462 = vector.broadcast %cst_183 : f32 to vector<2x32xf32>
    %463 = arith.divf %462, %461 : vector<2x32xf32>
    %464 = vector.extract_strided_slice %455 {offsets = [0, 32], sizes = [2, 32], strides = [1, 1]} : vector<2x128xf32> to vector<2x32xf32>
    %cst_184 = arith.constant 0.000000e+00 : f32
    %465 = vector.broadcast %cst_184 : f32 to vector<2x32xf32>
    %466 = arith.subf %465, %464 : vector<2x32xf32>
    %467 = math.exp %466 : vector<2x32xf32>
    %cst_185 = arith.constant 1.000000e+00 : f32
    %468 = vector.broadcast %cst_185 : f32 to vector<2x32xf32>
    %469 = arith.addf %468, %467 : vector<2x32xf32>
    %cst_186 = arith.constant 1.000000e+00 : f32
    %470 = vector.broadcast %cst_186 : f32 to vector<2x32xf32>
    %471 = arith.divf %470, %469 : vector<2x32xf32>
    %472 = vector.extract_strided_slice %455 {offsets = [0, 64], sizes = [2, 32], strides = [1, 1]} : vector<2x128xf32> to vector<2x32xf32>
    %473 = math.tanh %472 : vector<2x32xf32>
    %474 = vector.extract_strided_slice %455 {offsets = [0, 96], sizes = [2, 32], strides = [1, 1]} : vector<2x128xf32> to vector<2x32xf32>
    %cst_187 = arith.constant 0.000000e+00 : f32
    %475 = vector.broadcast %cst_187 : f32 to vector<2x32xf32>
    %476 = arith.subf %475, %474 : vector<2x32xf32>
    %477 = math.exp %476 : vector<2x32xf32>
    %cst_188 = arith.constant 1.000000e+00 : f32
    %478 = vector.broadcast %cst_188 : f32 to vector<2x32xf32>
    %479 = arith.addf %478, %477 : vector<2x32xf32>
    %cst_189 = arith.constant 1.000000e+00 : f32
    %480 = vector.broadcast %cst_189 : f32 to vector<2x32xf32>
    %481 = arith.divf %480, %479 : vector<2x32xf32>
    %482 = arith.mulf %471, %449 : vector<2x32xf32>
    %483 = arith.mulf %463, %473 : vector<2x32xf32>
    %484 = arith.addf %482, %483 : vector<2x32xf32>
    %485 = math.tanh %484 : vector<2x32xf32>
    %486 = arith.mulf %481, %485 : vector<2x32xf32>
    %c6_190 = arith.constant 6 : index
    %c32_191 = arith.constant 32 : index
    %487 = vector.load %arg7[%c6_190, %c32_191] : memref<16x64xf32, #tpu.memory_space<vmem>>, vector<2x32xf32>
    tpu.vector_store %arg7[%c6_190, %c32_191], %486 {strides = array<i32>} : memref<16x64xf32, #tpu.memory_space<vmem>>, vector<2x32xf32>,
    %488 = vector.extract_strided_slice %306 {offsets = [4, 0], sizes = [2, 128], strides = [1, 1]} : vector<16x128xf32> to vector<2x128xf32>
    %cst_192 = arith.constant dense<0.000000e+00> : vector<2x128xf32>
    %489 = tpu.matmul %486, %308, %cst_192 {dimension_numbers = #tpu.dot_dimension_numbers<[1], [0], [0], [1], [0, 0, 1, 1], [], []>} : vector<2x32xf32>, vector<32x128xf32>, vector<2x128xf32> -> vector<2x128xf32>
    %490 = arith.addf %488, %489 : vector<2x128xf32>
    %491 = vector.extract_strided_slice %490 {offsets = [0, 0], sizes = [2, 32], strides = [1, 1]} : vector<2x128xf32> to vector<2x32xf32>
    %cst_193 = arith.constant 0.000000e+00 : f32
    %492 = vector.broadcast %cst_193 : f32 to vector<2x32xf32>
    %493 = arith.subf %492, %491 : vector<2x32xf32>
    %494 = math.exp %493 : vector<2x32xf32>
    %cst_194 = arith.constant 1.000000e+00 : f32
    %495 = vector.broadcast %cst_194 : f32 to vector<2x32xf32>
    %496 = arith.addf %495, %494 : vector<2x32xf32>
    %cst_195 = arith.constant 1.000000e+00 : f32
    %497 = vector.broadcast %cst_195 : f32 to vector<2x32xf32>
    %498 = arith.divf %497, %496 : vector<2x32xf32>
    %499 = vector.extract_strided_slice %490 {offsets = [0, 32], sizes = [2, 32], strides = [1, 1]} : vector<2x128xf32> to vector<2x32xf32>
    %cst_196 = arith.constant 0.000000e+00 : f32
    %500 = vector.broadcast %cst_196 : f32 to vector<2x32xf32>
    %501 = arith.subf %500, %499 : vector<2x32xf32>
    %502 = math.exp %501 : vector<2x32xf32>
    %cst_197 = arith.constant 1.000000e+00 : f32
    %503 = vector.broadcast %cst_197 : f32 to vector<2x32xf32>
    %504 = arith.addf %503, %502 : vector<2x32xf32>
    %cst_198 = arith.constant 1.000000e+00 : f32
    %505 = vector.broadcast %cst_198 : f32 to vector<2x32xf32>
    %506 = arith.divf %505, %504 : vector<2x32xf32>
    %507 = vector.extract_strided_slice %490 {offsets = [0, 64], sizes = [2, 32], strides = [1, 1]} : vector<2x128xf32> to vector<2x32xf32>
    %508 = math.tanh %507 : vector<2x32xf32>
    %509 = vector.extract_strided_slice %490 {offsets = [0, 96], sizes = [2, 32], strides = [1, 1]} : vector<2x128xf32> to vector<2x32xf32>
    %cst_199 = arith.constant 0.000000e+00 : f32
    %510 = vector.broadcast %cst_199 : f32 to vector<2x32xf32>
    %511 = arith.subf %510, %509 : vector<2x32xf32>
    %512 = math.exp %511 : vector<2x32xf32>
    %cst_200 = arith.constant 1.000000e+00 : f32
    %513 = vector.broadcast %cst_200 : f32 to vector<2x32xf32>
    %514 = arith.addf %513, %512 : vector<2x32xf32>
    %cst_201 = arith.constant 1.000000e+00 : f32
    %515 = vector.broadcast %cst_201 : f32 to vector<2x32xf32>
    %516 = arith.divf %515, %514 : vector<2x32xf32>
    %517 = arith.mulf %506, %484 : vector<2x32xf32>
    %518 = arith.mulf %498, %508 : vector<2x32xf32>
    %519 = arith.addf %517, %518 : vector<2x32xf32>
    %520 = math.tanh %519 : vector<2x32xf32>
    %521 = arith.mulf %516, %520 : vector<2x32xf32>
    %c4_202 = arith.constant 4 : index
    %c32_203 = arith.constant 32 : index
    %522 = vector.load %arg7[%c4_202, %c32_203] : memref<16x64xf32, #tpu.memory_space<vmem>>, vector<2x32xf32>
    tpu.vector_store %arg7[%c4_202, %c32_203], %521 {strides = array<i32>} : memref<16x64xf32, #tpu.memory_space<vmem>>, vector<2x32xf32>,
    %523 = vector.extract_strided_slice %306 {offsets = [2, 0], sizes = [2, 128], strides = [1, 1]} : vector<16x128xf32> to vector<2x128xf32>
    %cst_204 = arith.constant dense<0.000000e+00> : vector<2x128xf32>
    %524 = tpu.matmul %521, %308, %cst_204 {dimension_numbers = #tpu.dot_dimension_numbers<[1], [0], [0], [1], [0, 0, 1, 1], [], []>} : vector<2x32xf32>, vector<32x128xf32>, vector<2x128xf32> -> vector<2x128xf32>
    %525 = arith.addf %523, %524 : vector<2x128xf32>
    %526 = vector.extract_strided_slice %525 {offsets = [0, 0], sizes = [2, 32], strides = [1, 1]} : vector<2x128xf32> to vector<2x32xf32>
    %cst_205 = arith.constant 0.000000e+00 : f32
    %527 = vector.broadcast %cst_205 : f32 to vector<2x32xf32>
    %528 = arith.subf %527, %526 : vector<2x32xf32>
    %529 = math.exp %528 : vector<2x32xf32>
    %cst_206 = arith.constant 1.000000e+00 : f32
    %530 = vector.broadcast %cst_206 : f32 to vector<2x32xf32>
    %531 = arith.addf %530, %529 : vector<2x32xf32>
    %cst_207 = arith.constant 1.000000e+00 : f32
    %532 = vector.broadcast %cst_207 : f32 to vector<2x32xf32>
    %533 = arith.divf %532, %531 : vector<2x32xf32>
    %534 = vector.extract_strided_slice %525 {offsets = [0, 32], sizes = [2, 32], strides = [1, 1]} : vector<2x128xf32> to vector<2x32xf32>
    %cst_208 = arith.constant 0.000000e+00 : f32
    %535 = vector.broadcast %cst_208 : f32 to vector<2x32xf32>
    %536 = arith.subf %535, %534 : vector<2x32xf32>
    %537 = math.exp %536 : vector<2x32xf32>
    %cst_209 = arith.constant 1.000000e+00 : f32
    %538 = vector.broadcast %cst_209 : f32 to vector<2x32xf32>
    %539 = arith.addf %538, %537 : vector<2x32xf32>
    %cst_210 = arith.constant 1.000000e+00 : f32
    %540 = vector.broadcast %cst_210 : f32 to vector<2x32xf32>
    %541 = arith.divf %540, %539 : vector<2x32xf32>
    %542 = vector.extract_strided_slice %525 {offsets = [0, 64], sizes = [2, 32], strides = [1, 1]} : vector<2x128xf32> to vector<2x32xf32>
    %543 = math.tanh %542 : vector<2x32xf32>
    %544 = vector.extract_strided_slice %525 {offsets = [0, 96], sizes = [2, 32], strides = [1, 1]} : vector<2x128xf32> to vector<2x32xf32>
    %cst_211 = arith.constant 0.000000e+00 : f32
    %545 = vector.broadcast %cst_211 : f32 to vector<2x32xf32>
    %546 = arith.subf %545, %544 : vector<2x32xf32>
    %547 = math.exp %546 : vector<2x32xf32>
    %cst_212 = arith.constant 1.000000e+00 : f32
    %548 = vector.broadcast %cst_212 : f32 to vector<2x32xf32>
    %549 = arith.addf %548, %547 : vector<2x32xf32>
    %cst_213 = arith.constant 1.000000e+00 : f32
    %550 = vector.broadcast %cst_213 : f32 to vector<2x32xf32>
    %551 = arith.divf %550, %549 : vector<2x32xf32>
    %552 = arith.mulf %541, %519 : vector<2x32xf32>
    %553 = arith.mulf %533, %543 : vector<2x32xf32>
    %554 = arith.addf %552, %553 : vector<2x32xf32>
    %555 = math.tanh %554 : vector<2x32xf32>
    %556 = arith.mulf %551, %555 : vector<2x32xf32>
    %c2_214 = arith.constant 2 : index
    %c32_215 = arith.constant 32 : index
    %557 = vector.load %arg7[%c2_214, %c32_215] : memref<16x64xf32, #tpu.memory_space<vmem>>, vector<2x32xf32>
    tpu.vector_store %arg7[%c2_214, %c32_215], %556 {strides = array<i32>} : memref<16x64xf32, #tpu.memory_space<vmem>>, vector<2x32xf32>,
    %558 = vector.extract_strided_slice %306 {offsets = [0, 0], sizes = [2, 128], strides = [1, 1]} : vector<16x128xf32> to vector<2x128xf32>
    %cst_216 = arith.constant dense<0.000000e+00> : vector<2x128xf32>
    %559 = tpu.matmul %556, %308, %cst_216 {dimension_numbers = #tpu.dot_dimension_numbers<[1], [0], [0], [1], [0, 0, 1, 1], [], []>} : vector<2x32xf32>, vector<32x128xf32>, vector<2x128xf32> -> vector<2x128xf32>
    %560 = arith.addf %558, %559 : vector<2x128xf32>
    %561 = vector.extract_strided_slice %560 {offsets = [0, 0], sizes = [2, 32], strides = [1, 1]} : vector<2x128xf32> to vector<2x32xf32>
    %cst_217 = arith.constant 0.000000e+00 : f32
    %562 = vector.broadcast %cst_217 : f32 to vector<2x32xf32>
    %563 = arith.subf %562, %561 : vector<2x32xf32>
    %564 = math.exp %563 : vector<2x32xf32>
    %cst_218 = arith.constant 1.000000e+00 : f32
    %565 = vector.broadcast %cst_218 : f32 to vector<2x32xf32>
    %566 = arith.addf %565, %564 : vector<2x32xf32>
    %cst_219 = arith.constant 1.000000e+00 : f32
    %567 = vector.broadcast %cst_219 : f32 to vector<2x32xf32>
    %568 = arith.divf %567, %566 : vector<2x32xf32>
    %569 = vector.extract_strided_slice %560 {offsets = [0, 32], sizes = [2, 32], strides = [1, 1]} : vector<2x128xf32> to vector<2x32xf32>
    %cst_220 = arith.constant 0.000000e+00 : f32
    %570 = vector.broadcast %cst_220 : f32 to vector<2x32xf32>
    %571 = arith.subf %570, %569 : vector<2x32xf32>
    %572 = math.exp %571 : vector<2x32xf32>
    %cst_221 = arith.constant 1.000000e+00 : f32
    %573 = vector.broadcast %cst_221 : f32 to vector<2x32xf32>
    %574 = arith.addf %573, %572 : vector<2x32xf32>
    %cst_222 = arith.constant 1.000000e+00 : f32
    %575 = vector.broadcast %cst_222 : f32 to vector<2x32xf32>
    %576 = arith.divf %575, %574 : vector<2x32xf32>
    %577 = vector.extract_strided_slice %560 {offsets = [0, 64], sizes = [2, 32], strides = [1, 1]} : vector<2x128xf32> to vector<2x32xf32>
    %578 = math.tanh %577 : vector<2x32xf32>
    %579 = vector.extract_strided_slice %560 {offsets = [0, 96], sizes = [2, 32], strides = [1, 1]} : vector<2x128xf32> to vector<2x32xf32>
    %cst_223 = arith.constant 0.000000e+00 : f32
    %580 = vector.broadcast %cst_223 : f32 to vector<2x32xf32>
    %581 = arith.subf %580, %579 : vector<2x32xf32>
    %582 = math.exp %581 : vector<2x32xf32>
    %cst_224 = arith.constant 1.000000e+00 : f32
    %583 = vector.broadcast %cst_224 : f32 to vector<2x32xf32>
    %584 = arith.addf %583, %582 : vector<2x32xf32>
    %cst_225 = arith.constant 1.000000e+00 : f32
    %585 = vector.broadcast %cst_225 : f32 to vector<2x32xf32>
    %586 = arith.divf %585, %584 : vector<2x32xf32>
    %587 = arith.mulf %576, %554 : vector<2x32xf32>
    %588 = arith.mulf %568, %578 : vector<2x32xf32>
    %589 = arith.addf %587, %588 : vector<2x32xf32>
    %590 = math.tanh %589 : vector<2x32xf32>
    %591 = arith.mulf %586, %590 : vector<2x32xf32>
    %c0_226 = arith.constant 0 : index
    %c32_227 = arith.constant 32 : index
    %592 = vector.load %arg7[%c0_226, %c32_227] : memref<16x64xf32, #tpu.memory_space<vmem>>, vector<2x32xf32>
    tpu.vector_store %arg7[%c0_226, %c32_227], %591 {strides = array<i32>} : memref<16x64xf32, #tpu.memory_space<vmem>>, vector<2x32xf32>,
    return
  }
  func.func @transform_0(%arg0: i32) -> (i32, i32) {
    %c0_i32 = arith.constant 0 : i32
    %c0_i32_0 = arith.constant 0 : i32
    %c0_i32_1 = arith.constant 0 : i32
    return %c0_i32, %c0_i32_0 : i32, i32
  }
  func.func @transform_1(%arg0: i32) -> (i32, i32, i32, i32) {
    %c0_i32 = arith.constant 0 : i32
    %c0_i32_0 = arith.constant 0 : i32
    %c0_i32_1 = arith.constant 0 : i32
    %c0_i32_2 = arith.constant 0 : i32
    return %arg0, %c0_i32, %c0_i32_0, %c0_i32_1 : i32, i32, i32, i32
  }
  func.func @transform_2(%arg0: i32) -> (i32, i32, i32, i32) {
    %c0_i32 = arith.constant 0 : i32
    %c0_i32_0 = arith.constant 0 : i32
    %c0_i32_1 = arith.constant 0 : i32
    %c0_i32_2 = arith.constant 0 : i32
    return %arg0, %c0_i32, %c0_i32_0, %c0_i32_1 : i32, i32, i32, i32
  }
  func.func @transform_3(%arg0: i32) -> (i32, i32, i32, i32) {
    %c0_i32 = arith.constant 0 : i32
    %c0_i32_0 = arith.constant 0 : i32
    %c0_i32_1 = arith.constant 0 : i32
    %c0_i32_2 = arith.constant 0 : i32
    return %arg0, %c0_i32, %c0_i32_0, %c0_i32_1 : i32, i32, i32, i32
  }
  func.func @transform_4(%arg0: i32) -> (i32, i32, i32, i32) {
    %c0_i32 = arith.constant 0 : i32
    %c0_i32_0 = arith.constant 0 : i32
    %c0_i32_1 = arith.constant 0 : i32
    %c0_i32_2 = arith.constant 0 : i32
    return %arg0, %c0_i32, %c0_i32_0, %c0_i32_1 : i32, i32, i32, i32
  }
  func.func @transform_5(%arg0: i32) -> (i32, i32, i32, i32) {
    %c0_i32 = arith.constant 0 : i32
    %c0_i32_0 = arith.constant 0 : i32
    %c0_i32_1 = arith.constant 0 : i32
    %c0_i32_2 = arith.constant 0 : i32
    return %arg0, %c0_i32, %c0_i32_0, %c0_i32_1 : i32, i32, i32, i32
  }
  func.func @transform_6(%arg0: i32) -> (i32, i32) {
    %c0_i32 = arith.constant 0 : i32
    %c0_i32_0 = arith.constant 0 : i32
    %c0_i32_1 = arith.constant 0 : i32
    return %c0_i32, %c0_i32_0 : i32, i32
  }
}

</mosaic_0001>

<llo_original>
// kernel: tpu_custom_call.1
$region0: #{tpu_custom_call.1}
  #allocation0 [shape = 'u32[]', space=smem, size = 0x4, offset = 0x4, fixed_abs, tag = 'smem constant byte address 0x4 - core index']
  #allocation1 [shape = 'u32[144,128]{1,0:T(1,128)}', space=vmem, size = 0x12000, scoped, tag = 'internal scratch']
  #allocation2 [shape = 'f32[16,64]{1,0:T(8,128)}', space=vmem, size = 0x2000, scoped, tag = 'scratch operand']
  %s0 = inlined_call_operand.hbm [shape: f32[16,64], index: 0, kind: input, shape index: {}]
  %s1 = inlined_call_operand.hbm [shape: f32[2,2,64,128], index: 1, kind: input, shape index: {}]
  %s2 = inlined_call_operand.hbm [shape: f32[2,2,32,128], index: 2, kind: input, shape index: {}]
  %s3 = inlined_call_operand.hbm [shape: f32[2,2,1,128], index: 3, kind: input, shape index: {}]
  %s4 = inlined_call_operand.vmem [shape: f32[2,2,2,32], index: 4, kind: input, shape index: {}]
  %s5 = inlined_call_operand.vmem [shape: f32[2,2,2,32], index: 5, kind: input, shape index: {}]
  %s6 = inlined_call_operand.hbm [shape: f32[16,64], index: 6, kind: output, shape index: {}]
  %s7 = sld [smem:[#allocation0]]
  $region81: #{tpu_custom_call.1} parent=0
    _
  %s9 = ssub.s32 1, %s7
  %s10 = scalar_select 0, %s9, %s7
  $region1: #{tpu_custom_call.1} parent=0
    #allocation3 [shape = 'u8[8192]{0}', space=vmem, size = 0x2000, scoped, tag = 'input window, operand 0, single buffered']
    #allocation4 [shape = 's32[2]{0}', space=sflag, size = 0x8, scoped, tag = 'scoped memory for tpu_custom_call.1']
    #allocation5 [shape = 's32[2]{0}', space=sflag, size = 0x8, scoped, tag = 'scoped memory for tpu_custom_call.1']
    #allocation6 [shape = 'u8[131072]{0}', space=vmem, size = 0x20000, scoped, tag = 'input window, operand 1']
    #allocation7 [shape = 's32[2]{0}', space=sflag, size = 0x8, scoped, tag = 'scoped memory for tpu_custom_call.1']
    #allocation8 [shape = 'u8[65536]{0}', space=vmem, size = 0x10000, scoped, tag = 'input window, operand 2']
    #allocation9 [shape = 'u8[2048]{0}', space=vmem, size = 0x800, scoped, tag = 'input window, operand 3']
    #allocation10 [shape = 's32[2]{0}', space=sflag, size = 0x8, scoped, tag = 'scoped memory for tpu_custom_call.1']
    #allocation11 [shape = 'u8[8192]{0}', space=vmem, size = 0x2000, scoped, tag = 'output window, operand 0, single buffered']
    %11 = vsyncpa [#allocation4], 0
    %12 = vsyncpa [#allocation7], 0
    %s13 = scalar_lea.sflag [#allocation7], 1
    %14 = vsyncpa %s13, 0
    %15 = vsyncpa [#allocation10], 0
    %s16 = scalar_lea.sflag [#allocation10], 1
    %17 = vsyncpa %s16, 0
    %18 = vsyncpa [#allocation5], 0
    loop: start=0, step=1, limit=4
    $region2: #{tpu_custom_call.1} parent=1 // loop_pre_header
      _
    $region3: #{tpu_custom_call.1} parent=1 // loop_header
      %s20 = sphi 0, %s24
      %p21 = scmp.ge.s32.totalorder %s20, 4
      %s28 = sphi 0, %s28
      %s30 = sphi 0, %s28
      %s31 = sphi 0, %s30
      %s45 = sphi 0, %s31
      %s51 = sphi 0, %s53
      %s54 = sphi 0, %s51
      %s55 = sphi 0, %s54
      %s71 = sphi 0, %s55
      %s77 = sphi 0, %s79
      %s80 = sphi 0, %s77
      %s81 = sphi 0, %s80
      %s97 = sphi 0, %s81
      %s103 = sphi 0, %s105
      %s106 = sphi 0, %s103
      %s107 = sphi 0, %s106
      %s123 = sphi 0, %s107
      %s129 = sphi 0, %s131
      %s132 = sphi 0, %s129
      %s133 = sphi 0, %s132
      %s149 = sphi 0, %s133
      %s155 = sphi 0, %s157
      %s158 = sphi 0, %s155
      %s159 = sphi 0, %s158
      %s175 = sphi 0, %s159
      %s179 = sphi 0, %s179
      %s181 = sphi 0, %s179
      %s182 = sphi 0, %s181
      %s196 = sphi 0, %s182
    $region4: #{tpu_custom_call.1} parent=1 // loop_header_branch
      %23 = sbr.rel (%p21) target = $region8
    $region5: #{tpu_custom_call.1} parent=1 // loop_body
      %s25 = ssub.s32 %s20, 1
      %s26 = ssub.s32 %s20, 2
      %s27 = sadd.s32 %s20, 1
      %s29 = sadd.s32 %s28, 1
      %p32 = scmp.eq.s32.totalorder %s20, 1
      %p33 = scmp.ne.s32.totalorder %s28, %s30
      %p34 = scmp.eq.s32.totalorder %s20, 0
      %p35 = por %p33, %p34
      %p36 = scmp.ne.s32.totalorder %s28, %s30
      %p37 = scmp.eq.s32.totalorder %s25, 1
      %p38 = por %p36, %p37
      %p39 = scmp.ne.s32.totalorder %s30, %s31
      %p40 = scmp.eq.s32.totalorder %s25, 0
      %p41 = por %p39, %p40
      %p42 = scmp.ne.s32.totalorder %s30, %s31
      %p43 = scmp.eq.s32.totalorder %s26, 1
      %p44 = por %p42, %p43
      %p46 = scmp.ne.s32.totalorder %s31, %s45
      %p47 = scmp.eq.s32.totalorder %s26, 0
      %p48 = por %p46, %p47
      %s49 = ssub.s32 %s20, %s27
      %p50 = scmp.eq.s32.totalorder %s49, 0
      %s52 = sadd.s32 %s51, 1
      %s53 = scalar_select %p50, %s51, %s52
      %p56 = pneg %p50
      %p57 = scmp.eq.s32.totalorder %s20, 1
      %p58 = por %p56, %p57
      %p59 = scmp.ne.s32.totalorder %s51, %s54
      %p60 = scmp.eq.s32.totalorder %s20, 0
      %p61 = por %p59, %p60
      %p62 = scmp.ne.s32.totalorder %s51, %s54
      %p63 = scmp.eq.s32.totalorder %s25, 1
      %p64 = por %p62, %p63
      %p65 = scmp.ne.s32.totalorder %s54, %s55
      %p66 = scmp.eq.s32.totalorder %s25, 0
      %p67 = por %p65, %p66
      %p68 = scmp.ne.s32.totalorder %s54, %s55
      %p69 = scmp.eq.s32.totalorder %s26, 1
      %p70 = por %p68, %p69
      %p72 = scmp.ne.s32.totalorder %s55, %s71
      %p73 = scmp.eq.s32.totalorder %s26, 0
      %p74 = por %p72, %p73
      %s75 = ssub.s32 %s20, %s27
      %p76 = scmp.eq.s32.totalorder %s75, 0
      %s78 = sadd.s32 %s77, 1
      %s79 = scalar_select %p76, %s77, %s78
      %p82 = pneg %p76
      %p83 = scmp.eq.s32.totalorder %s20, 1
      %p84 = por %p82, %p83
      %p85 = scmp.ne.s32.totalorder %s77, %s80
      %p86 = scmp.eq.s32.totalorder %s20, 0
      %p87 = por %p85, %p86
      %p88 = scmp.ne.s32.totalorder %s77, %s80
      %p89 = scmp.eq.s32.totalorder %s25, 1
      %p90 = por %p88, %p89
      %p91 = scmp.ne.s32.totalorder %s80, %s81
      %p92 = scmp.eq.s32.totalorder %s25, 0
      %p93 = por %p91, %p92
      %p94 = scmp.ne.s32.totalorder %s80, %s81
      %p95 = scmp.eq.s32.totalorder %s26, 1
      %p96 = por %p94, %p95
      %p98 = scmp.ne.s32.totalorder %s81, %s97
      %p99 = scmp.eq.s32.totalorder %s26, 0
      %p100 = por %p98, %p99
      %s101 = ssub.s32 %s20, %s27
      %p102 = scmp.eq.s32.totalorder %s101, 0
      %s104 = sadd.s32 %s103, 1
      %s105 = scalar_select %p102, %s103, %s104
      %p108 = pneg %p102
      %p109 = scmp.eq.s32.totalorder %s20, 1
      %p110 = por %p108, %p109
      %p111 = scmp.ne.s32.totalorder %s103, %s106
      %p112 = scmp.eq.s32.totalorder %s20, 0
      %p113 = por %p111, %p112
      %p114 = scmp.ne.s32.totalorder %s103, %s106
      %p115 = scmp.eq.s32.totalorder %s25, 1
      %p116 = por %p114, %p115
      %p117 = scmp.ne.s32.totalorder %s106, %s107
      %p118 = scmp.eq.s32.totalorder %s25, 0
      %p119 = por %p117, %p118
      %p120 = scmp.ne.s32.totalorder %s106, %s107
      %p121 = scmp.eq.s32.totalorder %s26, 1
      %p122 = por %p120, %p121
      %p124 = scmp.ne.s32.totalorder %s107, %s123
      %p125 = scmp.eq.s32.totalorder %s26, 0
      %p126 = por %p124, %p125
      %s127 = ssub.s32 %s20, %s27
      %p128 = scmp.eq.s32.totalorder %s127, 0
      %s130 = sadd.s32 %s129, 1
      %s131 = scalar_select %p128, %s129, %s130
      %p134 = pneg %p128
      %p135 = scmp.eq.s32.totalorder %s20, 1
      %p136 = por %p134, %p135
      %p137 = scmp.ne.s32.totalorder %s129, %s132
      %p138 = scmp.eq.s32.totalorder %s20, 0
      %p139 = por %p137, %p138
      %p140 = scmp.ne.s32.totalorder %s129, %s132
      %p141 = scmp.eq.s32.totalorder %s25, 1
      %p142 = por %p140, %p141
      %p143 = scmp.ne.s32.totalorder %s132, %s133
      %p144 = scmp.eq.s32.totalorder %s25, 0
      %p145 = por %p143, %p144
      %p146 = scmp.ne.s32.totalorder %s132, %s133
      %p147 = scmp.eq.s32.totalorder %s26, 1
      %p148 = por %p146, %p147
      %p150 = scmp.ne.s32.totalorder %s133, %s149
      %p151 = scmp.eq.s32.totalorder %s26, 0
      %p152 = por %p150, %p151
      %s153 = ssub.s32 %s20, %s27
      %p154 = scmp.eq.s32.totalorder %s153, 0
      %s156 = sadd.s32 %s155, 1
      %s157 = scalar_select %p154, %s155, %s156
      %p160 = pneg %p154
      %p161 = scmp.eq.s32.totalorder %s20, 1
      %p162 = por %p160, %p161
      %p163 = scmp.ne.s32.totalorder %s155, %s158
      %p164 = scmp.eq.s32.totalorder %s20, 0
      %p165 = por %p163, %p164
      %p166 = scmp.ne.s32.totalorder %s155, %s158
      %p167 = scmp.eq.s32.totalorder %s25, 1
      %p168 = por %p166, %p167
      %p169 = scmp.ne.s32.totalorder %s158, %s159
      %p170 = scmp.eq.s32.totalorder %s25, 0
      %p171 = por %p169, %p170
      %p172 = scmp.ne.s32.totalorder %s158, %s159
      %p173 = scmp.eq.s32.totalorder %s26, 1
      %p174 = por %p172, %p173
      %p176 = scmp.ne.s32.totalorder %s159, %s175
      %p177 = scmp.eq.s32.totalorder %s26, 0
      %p178 = por %p176, %p177
      %s180 = sadd.s32 %s179, 1
      %p183 = scmp.eq.s32.totalorder %s20, 1
      %p184 = scmp.ne.s32.totalorder %s179, %s181
      %p185 = scmp.eq.s32.totalorder %s20, 0
      %p186 = por %p184, %p185
      %p187 = scmp.ne.s32.totalorder %s179, %s181
      %p188 = scmp.eq.s32.totalorder %s25, 1
      %p189 = por %p187, %p188
      %p190 = scmp.ne.s32.totalorder %s181, %s182
      %p191 = scmp.eq.s32.totalorder %s25, 0
      %p192 = por %p190, %p191
      %p193 = scmp.ne.s32.totalorder %s181, %s182
      %p194 = scmp.eq.s32.totalorder %s26, 1
      %p195 = por %p193, %p194
      %p197 = scmp.ne.s32.totalorder %s182, %s196
      %p198 = scmp.eq.s32.totalorder %s26, 0
      %p199 = por %p197, %p198
      %p200 = scmp.le.s32.totalorder 1, %s20
      %p201 = scmp.lt.s32.totalorder %s20, 3
      %p202 = pnand %p200, %p201
      %p203 = pneg %p202
      // Predicated region
      $region9: #{tpu_custom_call.1} parent=5 // pred_check
        _
      $region10: #{tpu_custom_call.1} parent=5 // pred_check_branch
        %205 = sbr.rel (%p202) target = $region12
      $region11: #{tpu_custom_call.1} parent=5 // pred_region
        %s206 = ssub.s32 %s20, 1
        // Predicated region
        $region13: #{tpu_custom_call.1} parent=11 // pred_check
          %p207 = pneg %p41
        $region14: #{tpu_custom_call.1} parent=11 // pred_check_branch
          %209 = sbr.rel (%p207) target = $region16
        $region15: #{tpu_custom_call.1} parent=11 // pred_region
          %s211 = ssub.s32 256, 256
          %212 = vsyncadd [#allocation4], %s211
          %s213 = sshll.u32 [#allocation3], 4
          %s214 = int_to_ptr.vmem [resolvable:$true] %s213
          %219 = dma.hbm_to_vmem [thread:$0]  %s0, 256, %s214, [#allocation4], 128, 128, 8
        $region16: #{tpu_custom_call.1} parent=11 // pred_fallthru
          _
      $region12: #{tpu_custom_call.1} parent=5 // pred_fallthru
        _
      %p220 = scmp.lt.s32.totalorder %s20, 2
      // Predicated region
      $region17: #{tpu_custom_call.1} parent=5 // pred_check
        %p221 = pneg %p220
      $region18: #{tpu_custom_call.1} parent=5 // pred_check_branch
        %223 = sbr.rel (%p221) target = $region20
      $region19: #{tpu_custom_call.1} parent=5 // pred_region
        // Predicated region
        $region21: #{tpu_custom_call.1} parent=19 // pred_check
          %p224 = pneg %p61
        $region22: #{tpu_custom_call.1} parent=19 // pred_check_branch
          %226 = sbr.rel (%p224) target = $region24
        $region23: #{tpu_custom_call.1} parent=19 // pred_region
          %s227 = sand.u32 %s20, 1
          %s228 = scalar_lea.sflag [#allocation7], %s227
          %s229 = sand.u32 %s51, 1
          %s230 = smul.addr %s229, 128
          %s231 = scalar_lea.vmem [#allocation6], %s230
          %s233 = ssub.s32 2048, 2048
          %234 = vsyncadd %s228, %s233
          %s235 = smul.addr %s20, 16
          %s236 = smul.addr %s235, 128
          %s237 = scalar_lea.hbm %s1, %s236
          %s238 = sshll.u32 %s231, 4
          %s239 = int_to_ptr.vmem [resolvable:$true] %s238
          %244 = dma.hbm_to_vmem [thread:$0]  %s237, 2048, %s239, %s228, 128, 128, 8
        $region24: #{tpu_custom_call.1} parent=19 // pred_fallthru
          _
        // Predicated region
        $region25: #{tpu_custom_call.1} parent=19 // pred_check
          %p245 = pneg %p87
        $region26: #{tpu_custom_call.1} parent=19 // pred_check_branch
          %247 = sbr.rel (%p245) target = $region28
        $region27: #{tpu_custom_call.1} parent=19 // pred_region
          %s248 = sand.u32 %s20, 1
          %s249 = scalar_lea.sflag [#allocation7], %s248
          %s250 = sand.u32 %s77, 1
          %s251 = smul.addr %s250, 64
          %s252 = scalar_lea.vmem [#allocation8], %s251
          %s254 = ssub.s32 1024, 1024
          %255 = vsyncadd %s249, %s254
          %s256 = smul.addr %s20, 8
          %s257 = smul.addr %s256, 128
          %s258 = scalar_lea.hbm %s2, %s257
          %s259 = sshll.u32 %s252, 4
          %s260 = int_to_ptr.vmem [resolvable:$true] %s259
          %265 = dma.hbm_to_vmem [thread:$0]  %s258, 1024, %s260, %s249, 128, 128, 8
        $region28: #{tpu_custom_call.1} parent=19 // pred_fallthru
          _
        // Predicated region
        $region29: #{tpu_custom_call.1} parent=19 // pred_check
          %p266 = pneg %p113
        $region30: #{tpu_custom_call.1} parent=19 // pred_check_branch
          %268 = sbr.rel (%p266) target = $region32
        $region31: #{tpu_custom_call.1} parent=19 // pred_region
          %s269 = sand.u32 %s103, 1
          %s270 = scalar_lea.sflag [#allocation10], %s269
          %s271 = sand.u32 %s103, 1
          %s272 = smul.addr %s271, 2
          %s273 = scalar_lea.vmem [#allocation9], %s272
          %s275 = ssub.s32 32, 32
          %276 = vsyncadd %s270, %s275
          %s277 = smul.addr %s20, 2
          %s278 = smul.addr %s277, 16
          %s279 = scalar_lea.hbm %s3, %s278
          %s280 = sshll.u32 %s273, 4
          %s281 = int_to_ptr.vmem [resolvable:$true] %s280
          %286 = dma.hbm_to_vmem [thread:$0]  %s279, 32, %s281, %s270, 16, 16, 1
        $region32: #{tpu_custom_call.1} parent=19 // pred_fallthru
          _
        // Predicated region
        $region33: #{tpu_custom_call.1} parent=19 // pred_check
          %p287 = pneg %p139
        $region34: #{tpu_custom_call.1} parent=19 // pred_check_branch
          %289 = sbr.rel (%p287) target = $region36
        $region35: #{tpu_custom_call.1} parent=19 // pred_region
          %p290 = scmp.lt.s32.totalorder %s20, 1
          %s291 = scalar_select %p290, %s20, 1
          %s292 = smul.addr %s291, 2
          %s293 = smul.addr %s292, 2
          %s294 = scalar_lea.vmem %s4, %s293
        $region36: #{tpu_custom_call.1} parent=19 // pred_fallthru
          _
        // Predicated region
        $region37: #{tpu_custom_call.1} parent=19 // pred_check
          %p295 = pneg %p165
        $region38: #{tpu_custom_call.1} parent=19 // pred_check_branch
          %297 = sbr.rel (%p295) target = $region40
        $region39: #{tpu_custom_call.1} parent=19 // pred_region
          %p298 = scmp.lt.s32.totalorder %s20, 1
          %s299 = scalar_select %p298, %s20, 1
          %s300 = smul.addr %s299, 2
          %s301 = smul.addr %s300, 2
          %s302 = scalar_lea.vmem %s5, %s301
        $region40: #{tpu_custom_call.1} parent=19 // pred_fallthru
          _
      $region20: #{tpu_custom_call.1} parent=5 // pred_fallthru
        _
      %p303 = scmp.le.s32.totalorder 1, %s20
      %p304 = scmp.lt.s32.totalorder %s20, 3
      %p305 = pnand %p303, %p304
      %p306 = pneg %p305
      // Predicated region
      $region41: #{tpu_custom_call.1} parent=5 // pred_check
        _
      $region42: #{tpu_custom_call.1} parent=5 // pred_check_branch
        %308 = sbr.rel (%p305) target = $region44
      $region43: #{tpu_custom_call.1} parent=5 // pred_region
        %s309 = ssub.s32 %s20, 1
        // Predicated region
        $region45: #{tpu_custom_call.1} parent=43 // pred_check
          %p310 = pneg %p41
        $region46: #{tpu_custom_call.1} parent=43 // pred_check_branch
          %312 = sbr.rel (%p310) target = $region48
        $region47: #{tpu_custom_call.1} parent=43 // pred_region
          %313 = dma.done [#allocation4], 256
        $region48: #{tpu_custom_call.1} parent=43 // pred_fallthru
          _
        %s314 = sand.u32 %s25, 1
        %s315 = scalar_lea.sflag [#allocation7], %s314
        %s316 = sand.u32 %s54, 1
        %s317 = smul.addr %s316, 128
        %s318 = scalar_lea.vmem [#allocation6], %s317
        // Predicated region
        $region49: #{tpu_custom_call.1} parent=43 // pred_check
          %p319 = pneg %p67
        $region50: #{tpu_custom_call.1} parent=43 // pred_check_branch
          %321 = sbr.rel (%p319) target = $region52
        $region51: #{tpu_custom_call.1} parent=43 // pred_region
          %322 = dma.done %s315, 2048
        $region52: #{tpu_custom_call.1} parent=43 // pred_fallthru
          _
        %s323 = sand.u32 %s25, 1
        %s324 = scalar_lea.sflag [#allocation7], %s323
        %s325 = sand.u32 %s80, 1
        %s326 = smul.addr %s325, 64
        %s327 = scalar_lea.vmem [#allocation8], %s326
        // Predicated region
        $region53: #{tpu_custom_call.1} parent=43 // pred_check
          %p328 = pneg %p93
        $region54: #{tpu_custom_call.1} parent=43 // pred_check_branch
          %330 = sbr.rel (%p328) target = $region56
        $region55: #{tpu_custom_call.1} parent=43 // pred_region
          %331 = dma.done %s324, 1024
        $region56: #{tpu_custom_call.1} parent=43 // pred_fallthru
          _
        %s332 = sand.u32 %s106, 1
        %s333 = scalar_lea.sflag [#allocation10], %s332
        %s334 = sand.u32 %s106, 1
        %s335 = smul.addr %s334, 2
        %s336 = scalar_lea.vmem [#allocation9], %s335
        // Predicated region
        $region57: #{tpu_custom_call.1} parent=43 // pred_check
          %p337 = pneg %p119
        $region58: #{tpu_custom_call.1} parent=43 // pred_check_branch
          %339 = sbr.rel (%p337) target = $region60
        $region59: #{tpu_custom_call.1} parent=43 // pred_region
          %340 = dma.done %s333, 32
        $region60: #{tpu_custom_call.1} parent=43 // pred_fallthru
          _
        %p341 = pneg %p41
        %p342 = pneg %p38
        %s343 = sand.u32 %s25, 1
        %s344 = scalar_lea.sflag [#allocation7], %s343
        %s345 = sand.u32 %s54, 1
        %s346 = smul.addr %s345, 128
        %s347 = scalar_lea.vmem [#allocation6], %s346
        %p348 = pneg %p67
        %p349 = pneg %p64
        %s350 = sand.u32 %s25, 1
        %s351 = scalar_lea.sflag [#allocation7], %s350
        %s352 = sand.u32 %s80, 1
        %s353 = smul.addr %s352, 64
        %s354 = scalar_lea.vmem [#allocation8], %s353
        %p355 = pneg %p93
        %p356 = pneg %p90
        %s357 = sand.u32 %s106, 1
        %s358 = scalar_lea.sflag [#allocation10], %s357
        %s359 = sand.u32 %s106, 1
        %s360 = smul.addr %s359, 2
        %s361 = scalar_lea.vmem [#allocation9], %s360
        %p362 = pneg %p119
        %p363 = pneg %p116
        %p364 = scmp.lt.s32.totalorder %s25, 1
        %s365 = scalar_select %p364, %s25, 1
        %s366 = smul.addr %s365, 2
        %s367 = smul.addr %s366, 2
        %s368 = scalar_lea.vmem %s4, %s367
        %p369 = pneg %p145
        %p370 = pneg %p142
        %p371 = scmp.lt.s32.totalorder %s25, 1
        %s372 = scalar_select %p371, %s25, 1
        %s373 = smul.addr %s372, 2
        %s374 = smul.addr %s373, 2
        %s375 = scalar_lea.vmem %s5, %s374
        %p376 = pneg %p171
        %p377 = pneg %p168
        %p378 = pneg %p192
        %p379 = pneg %p189
        %p380 = scmp.lt.s32.totalorder %s25, 1
        %s381 = scalar_select %p380, %s25, 1
        %s382 = smul.addr %s381, 2
        %s383 = smul.addr %s382, 2
        %s384 = scalar_lea.vmem %s4, %s383
        %p385 = scmp.lt.s32.totalorder %s25, 1
        %s386 = scalar_select %p385, %s25, 1
        %s387 = smul.addr %s386, 2
        %s388 = smul.addr %s387, 2
        %s389 = scalar_lea.vmem %s5, %s388
        %p390 = scmp.eq.s32.totalorder %s25, 0
        // Predicated region
        $region61: #{tpu_custom_call.1} parent=43 // pred_check
          %p391 = pneg %p390
        $region62: #{tpu_custom_call.1} parent=43 // pred_check_branch
          %393 = sbr.rel (%p391) target = $region64
        $region63: #{tpu_custom_call.1} parent=43 // pred_region
          %v394 = vld [vmem:[#allocation3] sm:$0xff]
          %v395 = vld [vmem:[#allocation3 + $0x8] sm:$0xff]
          %vm396 = vcmask 523264
          %397 = vst.msk [vmem:[#allocation2] sm:$0xff] %vm396, %v394
          %398 = vst.msk [vmem:[#allocation2 + $0x8] sm:$0xff] %vm396, %v395
        $region64: #{tpu_custom_call.1} parent=43 // pred_fallthru
          _
        %p399 = scmp.gt.s32.totalorder %s25, 0
        // Predicated region
        $region65: #{tpu_custom_call.1} parent=43 // pred_check
          %p400 = pneg %p399
        $region66: #{tpu_custom_call.1} parent=43 // pred_check_branch
          %402 = sbr.rel (%p400) target = $region68
        $region67: #{tpu_custom_call.1} parent=43 // pred_region
          %v403 = vld [vmem:[#allocation11] sm:$0xff]
          %v404 = vld [vmem:[#allocation11 + $0x8] sm:$0xff]
          %vm405 = vcmask 523264
          %406 = vst.msk [vmem:[#allocation2] sm:$0xff] %vm405, %v403
          %407 = vst.msk [vmem:[#allocation2 + $0x8] sm:$0xff] %vm405, %v404
        $region68: #{tpu_custom_call.1} parent=43 // pred_fallthru
          _
        %v408 = vld [vmem:[#allocation2] sm:$0xff]
        %v409 = vld [vmem:[#allocation2 + $0x8] sm:$0xff]
        %v410 = vld [vmem:[%s318] sm:$0xff]
        %v411 = vld [vmem:[%s318 + $0x8] sm:$0xff]
        %v412 = vld [vmem:[%s318 + $0x10] sm:$0xff]
        %v413 = vld [vmem:[%s318 + $0x18] sm:$0xff]
        %v414 = vld [vmem:[%s318 + $0x20] sm:$0xff]
        %v415 = vld [vmem:[%s318 + $0x28] sm:$0xff]
        %v416 = vld [vmem:[%s318 + $0x30] sm:$0xff]
        %v417 = vld [vmem:[%s318 + $0x38] sm:$0xff]
        %v418 = vld [vmem:[%s336] sm:$0x1]
        %v420 = vlaneseq
        %v421 = vshrl.u32 %v420, 7
        %v422 = vsub.s32 0, %v421
        %v423 = vrot.slane %v418, %v422
        %vm425 = vcmask 523264
        %v427 = vsel %vm425, %v408, 0
        %v430 = vsel %vm425, %v409, 0
        %432 = vmatprep.subr.mxu0 0.0
        %433 = vmatpush1.msra.mxu0 %v410
        %434 = vmatprep.subr.mxu0 0.0
        %435 = vmatpush1.msra.mxu0 %v411
        %436 = vmatprep.subr.mxu0 0.0
        %437 = vmatpush1.msra.mxu0 %v412
        %438 = vmatprep.subr.mxu0 0.0
        %439 = vmatpush1.msra.mxu0 %v413
        %440 = vmatprep.subr.mxu0 0.0
        %441 = vmatpush1.msra.mxu0 %v414
        %442 = vmatprep.subr.mxu0 0.0
        %443 = vmatpush1.msra.mxu0 %v415
        %444 = vmatprep.subr.mxu0 0.0
        %445 = vmatpush1.msra.mxu0 %v416
        %446 = vmatprep.subr.mxu0 0.0
        %447 = vmatpush1.msra.mxu0 %v417
        %448 = vmatprep.subr.mxu0 0.0
        %449 = vmatpush1.msra.mxu0 0.0
        %450 = vmatprep.subr.mxu0 0.0
        %451 = vmatpush1.msra.mxu0 0.0
        %452 = vmatprep.subr.mxu0 0.0
        %453 = vmatpush1.msra.mxu0 0.0
        %454 = vmatprep.subr.mxu0 0.0
        %455 = vmatpush1.msra.mxu0 0.0
        %456 = vmatprep.subr.mxu0 0.0
        %457 = vmatpush1.msra.mxu0 0.0
        %458 = vmatprep.subr.mxu0 0.0
        %459 = vmatpush1.msra.mxu0 0.0
        %460 = vmatprep.subr.mxu0 0.0
        %461 = vmatpush1.msra.mxu0 0.0
        %462 = vmatprep.subr.mxu0 0.0
        %463 = vmatpush1.msra.mxu0 0.0
        %464 = vmatprep.subr.mxu0 0.0
        %465 = vmatpush1.msra.mxu0 0.0
        %466 = vmatprep.subr.mxu0 0.0
        %467 = vmatpush1.msra.mxu0 0.0
        %468 = vmatprep.subr.mxu0 0.0
        %469 = vmatpush1.msra.mxu0 0.0
        %470 = vmatprep.subr.mxu0 0.0
        %471 = vmatpush1.msra.mxu0 0.0
        %472 = vmatprep.subr.mxu0 0.0
        %473 = vmatpush1.msra.mxu0 0.0
        %474 = vmatprep.subr.mxu0 0.0
        %475 = vmatpush1.msra.mxu0 0.0
        %476 = vmatprep.subr.mxu0 0.0
        %477 = vmatpush1.msra.mxu0 0.0
        %478 = vmatprep.subr.mxu0 0.0
        %479 = vmatpush1.msra.mxu0 0.0
        %480 = vmatprep.subr.mxu0 0.0
        %481 = vmatpush1.msra.mxu0 0.0
        %482 = vmatprep.subr.mxu0 0.0
        %483 = vmatpush1.msra.mxu0 0.0
        %484 = vmatprep.subr.mxu0 0.0
        %485 = vmatpush1.msra.mxu0 0.0
        %486 = vmatprep.subr.mxu0 0.0
        %487 = vmatpush1.msra.mxu0 0.0
        %488 = vmatprep.subr.mxu0 0.0
        %489 = vmatpush1.msra.mxu0 0.0
        %490 = vmatprep.subr.mxu0 0.0
        %491 = vmatpush1.msra.mxu0 0.0
        %492 = vmatprep.subr.mxu0 0.0
        %493 = vmatpush1.msra.mxu0 0.0
        %494 = vmatprep.subr.mxu0 0.0
        %495 = vmatpush1.msra.mxu0 0.0
        %496 = vmatprep.mubr.f32.mxu0 0.0
        %497 = vmatmul.mubr.f32.gmra.mrb[0].mxu0 %v427
        %v498 = vpop.f32.mrb[0].mxu0
        %v499 = vadd.f32 %v423, %v498
        %v500 = vpop.f32.mrb[0].mxu0
        %501 = vmatprep.mubr.f32.mxu0 0.0
        %502 = vmatmul.mubr.f32.gmra.mrb[0].mxu0 %v430
        %v503 = vpop.f32.mrb[0].mxu0
        %v504 = vadd.f32 %v423, %v503
        %v505 = vpop.f32.mrb[0].mxu0
        %506 = vdwg.mxu0
        %v507 = vld [vmem:[%s327] sm:$0xff]
        %v508 = vld [vmem:[%s327 + $0x8] sm:$0xff]
        %v509 = vld [vmem:[%s327 + $0x10] sm:$0xff]
        %v510 = vld [vmem:[%s327 + $0x18] sm:$0xff]
        %v511 = vld [vmem:[%s384] sm:$0x3]
        %v512 = vld [vmem:[%s389] sm:$0x3]
        %vm513 = vcmask 261120
        %v515 = vsel %vm513, %v511, 0
        %517 = vmatprep.subr.mxu0 0.0
        %518 = vmatpush1.msra.mxu0 %v507
        %519 = vmatprep.subr.mxu0 0.0
        %520 = vmatpush1.msra.mxu0 %v508
        %521 = vmatprep.subr.mxu0 0.0
        %522 = vmatpush1.msra.mxu0 %v509
        %523 = vmatprep.subr.mxu0 0.0
        %524 = vmatpush1.msra.mxu0 %v510
        %525 = vmatprep.subr.mxu0 0.0
        %526 = vmatpush1.msra.mxu0 0.0
        %527 = vmatprep.subr.mxu0 0.0
        %528 = vmatpush1.msra.mxu0 0.0
        %529 = vmatprep.subr.mxu0 0.0
        %530 = vmatpush1.msra.mxu0 0.0
        %531 = vmatprep.subr.mxu0 0.0
        %532 = vmatpush1.msra.mxu0 0.0
        %533 = vmatprep.subr.mxu0 0.0
        %534 = vmatpush1.msra.mxu0 0.0
        %535 = vmatprep.subr.mxu0 0.0
        %536 = vmatpush1.msra.mxu0 0.0
        %537 = vmatprep.subr.mxu0 0.0
        %538 = vmatpush1.msra.mxu0 0.0
        %539 = vmatprep.subr.mxu0 0.0
        %540 = vmatpush1.msra.mxu0 0.0
        %541 = vmatprep.subr.mxu0 0.0
        %542 = vmatpush1.msra.mxu0 0.0
        %543 = vmatprep.subr.mxu0 0.0
        %544 = vmatpush1.msra.mxu0 0.0
        %545 = vmatprep.subr.mxu0 0.0
        %546 = vmatpush1.msra.mxu0 0.0
        %547 = vmatprep.subr.mxu0 0.0
        %548 = vmatpush1.msra.mxu0 0.0
        %549 = vmatprep.subr.mxu0 0.0
        %550 = vmatpush1.msra.mxu0 0.0
        %551 = vmatprep.subr.mxu0 0.0
        %552 = vmatpush1.msra.mxu0 0.0
        %553 = vmatprep.subr.mxu0 0.0
        %554 = vmatpush1.msra.mxu0 0.0
        %555 = vmatprep.subr.mxu0 0.0
        %556 = vmatpush1.msra.mxu0 0.0
        %557 = vmatprep.subr.mxu0 0.0
        %558 = vmatpush1.msra.mxu0 0.0
        %559 = vmatprep.subr.mxu0 0.0
        %560 = vmatpush1.msra.mxu0 0.0
        %561 = vmatprep.subr.mxu0 0.0
        %562 = vmatpush1.msra.mxu0 0.0
        %563 = vmatprep.subr.mxu0 0.0
        %564 = vmatpush1.msra.mxu0 0.0
        %565 = vmatprep.subr.mxu0 0.0
        %566 = vmatpush1.msra.mxu0 0.0
        %567 = vmatprep.subr.mxu0 0.0
        %568 = vmatpush1.msra.mxu0 0.0
        %569 = vmatprep.subr.mxu0 0.0
        %570 = vmatpush1.msra.mxu0 0.0
        %571 = vmatprep.subr.mxu0 0.0
        %572 = vmatpush1.msra.mxu0 0.0
        %573 = vmatprep.subr.mxu0 0.0
        %574 = vmatpush1.msra.mxu0 0.0
        %575 = vmatprep.subr.mxu0 0.0
        %576 = vmatpush1.msra.mxu0 0.0
        %577 = vmatprep.subr.mxu0 0.0
        %578 = vmatpush1.msra.mxu0 0.0
        %579 = vmatprep.subr.mxu0 0.0
        %580 = vmatpush1.msra.mxu0 0.0
        %581 = vmatprep.mubr.f32.mxu0 0.0
        %582 = vmatmul.mubr.f32.gmra.mrb[0].mxu0 %v515
        %v583 = vpop.f32.mrb[0].mxu0
        %v584 = vadd.f32 0.0, %v583
        %v585 = vpop.f32.mrb[0].mxu0
        %586 = vdwg.mxu0
        %v587 = vadd.f32 %v499, %v584
        %v588 = vsub.f32 0.0, %v587
        %v589 = vmul.f32 %v588, 1.442695
        %v590 = vpow.pop %v589
        %v591 = vadd.f32 %v590, 1.0
        %v592 = vrcp.pop %v591
        %v593 = vmul.f32 1.0, %v592
        %v594 = vtanh.pop %v587
        %596 = vrot.lane.b32.xlu0 %v512, 32
        %v597 = vpop.permute.xlu0 %596
        %v599 = vmul.f32 %v593, %v597
        %601 = vrot.lane.b32.xlu0 %v594, 64
        %v602 = vpop.permute.xlu0 %601
        %v604 = vmul.f32 %v593, %v602
        %606 = vrot.lane.b32.xlu0 %v604, 32
        %v607 = vpop.permute.xlu0 %606
        %v609 = vadd.f32 %v599, %v607
        %v610 = vtanh.pop %v609
        %612 = vrot.lane.b32.xlu0 %v610, 64
        %v613 = vpop.permute.xlu0 %612
        %v615 = vmul.f32 %v593, %v613
        %617 = vrot.lane.b32.xlu0 %v615, 32
        %v618 = vpop.permute.xlu0 %617
        %vm620 = vcmask 254976
        %621 = vst.msk [vmem:[#allocation11] sm:$0x3] %vm620, %v618
        %v622 = vsel %vm513, %v618, 0
        %624 = vmatprep.subr.mxu0 0.0
        %625 = vmatpush1.msra.mxu0 %v507
        %626 = vmatprep.subr.mxu0 0.0
        %627 = vmatpush1.msra.mxu0 %v508
        %628 = vmatprep.subr.mxu0 0.0
        %629 = vmatpush1.msra.mxu0 %v509
        %630 = vmatprep.subr.mxu0 0.0
        %631 = vmatpush1.msra.mxu0 %v510
        %632 = vmatprep.subr.mxu0 0.0
        %633 = vmatpush1.msra.mxu0 0.0
        %634 = vmatprep.subr.mxu0 0.0
        %635 = vmatpush1.msra.mxu0 0.0
        %636 = vmatprep.subr.mxu0 0.0
        %637 = vmatpush1.msra.mxu0 0.0
        %638 = vmatprep.subr.mxu0 0.0
        %639 = vmatpush1.msra.mxu0 0.0
        %640 = vmatprep.subr.mxu0 0.0
        %641 = vmatpush1.msra.mxu0 0.0
        %642 = vmatprep.subr.mxu0 0.0
        %643 = vmatpush1.msra.mxu0 0.0
        %644 = vmatprep.subr.mxu0 0.0
        %645 = vmatpush1.msra.mxu0 0.0
        %646 = vmatprep.subr.mxu0 0.0
        %647 = vmatpush1.msra.mxu0 0.0
        %648 = vmatprep.subr.mxu0 0.0
        %649 = vmatpush1.msra.mxu0 0.0
        %650 = vmatprep.subr.mxu0 0.0
        %651 = vmatpush1.msra.mxu0 0.0
        %652 = vmatprep.subr.mxu0 0.0
        %653 = vmatpush1.msra.mxu0 0.0
        %654 = vmatprep.subr.mxu0 0.0
        %655 = vmatpush1.msra.mxu0 0.0
        %656 = vmatprep.subr.mxu0 0.0
        %657 = vmatpush1.msra.mxu0 0.0
        %658 = vmatprep.subr.mxu0 0.0
        %659 = vmatpush1.msra.mxu0 0.0
        %660 = vmatprep.subr.mxu0 0.0
        %661 = vmatpush1.msra.mxu0 0.0
        %662 = vmatprep.subr.mxu0 0.0
        %663 = vmatpush1.msra.mxu0 0.0
        %664 = vmatprep.subr.mxu0 0.0
        %665 = vmatpush1.msra.mxu0 0.0
        %666 = vmatprep.subr.mxu0 0.0
        %667 = vmatpush1.msra.mxu0 0.0
        %668 = vmatprep.subr.mxu0 0.0
        %669 = vmatpush1.msra.mxu0 0.0
        %670 = vmatprep.subr.mxu0 0.0
        %671 = vmatpush1.msra.mxu0 0.0
        %672 = vmatprep.subr.mxu0 0.0
        %673 = vmatpush1.msra.mxu0 0.0
        %674 = vmatprep.subr.mxu0 0.0
        %675 = vmatpush1.msra.mxu0 0.0
        %676 = vmatprep.subr.mxu0 0.0
        %677 = vmatpush1.msra.mxu0 0.0
        %678 = vmatprep.subr.mxu0 0.0
        %679 = vmatpush1.msra.mxu0 0.0
        %680 = vmatprep.subr.mxu0 0.0
        %681 = vmatpush1.msra.mxu0 0.0
        %682 = vmatprep.subr.mxu0 0.0
        %683 = vmatpush1.msra.mxu0 0.0
        %684 = vmatprep.subr.mxu0 0.0
        %685 = vmatpush1.msra.mxu0 0.0
        %686 = vmatprep.subr.mxu0 0.0
        %687 = vmatpush1.msra.mxu0 0.0
        %688 = vmatprep.mubr.f32.mxu0 0.0
        %689 = vmatmul.mubr.f32.gmra.mrb[0].mxu0 %v622
        %v690 = vpop.f32.mrb[0].mxu0
        %v691 = vadd.f32 0.0, %v690
        %v692 = vpop.f32.mrb[0].mxu0
        %693 = vdwg.mxu0
        %v695 = vrot.slane %v691, 6
        %v697 = vadd.f32 %v499, %v695
        %v698 = vsub.f32 0.0, %v697
        %v699 = vmul.f32 %v698, 1.442695
        %v700 = vpow.pop %v699
        %v701 = vadd.f32 %v700, 1.0
        %v702 = vrcp.pop %v701
        %v703 = vmul.f32 1.0, %v702
        %v704 = vtanh.pop %v697
        %v706 = vrot.slane %v609, 6
        %v708 = vmul.f32 %v703, %v706
        %710 = vrot.lane.b32.xlu0 %v704, 64
        %v711 = vpop.permute.xlu0 %710
        %v713 = vmul.f32 %v703, %v711
        %715 = vrot.lane.b32.xlu0 %v713, 32
        %v716 = vpop.permute.xlu0 %715
        %v718 = vadd.f32 %v708, %v716
        %v719 = vtanh.pop %v718
        %721 = vrot.lane.b32.xlu0 %v719, 64
        %v722 = vpop.permute.xlu0 %721
        %v724 = vmul.f32 %v703, %v722
        %726 = vrot.lane.b32.xlu0 %v724, 32
        %v727 = vpop.permute.xlu0 %726
        %vm729 = vcmask 257026
        %730 = vst.msk [vmem:[#allocation11] sm:$0xc] %vm729, %v727
        %v731 = vrot.slane %v724, 2
        %732 = vrot.lane.b32.xlu0 %v731, 32
        %v733 = vpop.permute.xlu0 %732
        %v734 = vsel %vm513, %v733, 0
        %736 = vmatprep.subr.mxu0 0.0
        %737 = vmatpush1.msra.mxu0 %v507
        %738 = vmatprep.subr.mxu0 0.0
        %739 = vmatpush1.msra.mxu0 %v508
        %740 = vmatprep.subr.mxu0 0.0
        %741 = vmatpush1.msra.mxu0 %v509
        %742 = vmatprep.subr.mxu0 0.0
        %743 = vmatpush1.msra.mxu0 %v510
        %744 = vmatprep.subr.mxu0 0.0
        %745 = vmatpush1.msra.mxu0 0.0
        %746 = vmatprep.subr.mxu0 0.0
        %747 = vmatpush1.msra.mxu0 0.0
        %748 = vmatprep.subr.mxu0 0.0
        %749 = vmatpush1.msra.mxu0 0.0
        %750 = vmatprep.subr.mxu0 0.0
        %751 = vmatpush1.msra.mxu0 0.0
        %752 = vmatprep.subr.mxu0 0.0
        %753 = vmatpush1.msra.mxu0 0.0
        %754 = vmatprep.subr.mxu0 0.0
        %755 = vmatpush1.msra.mxu0 0.0
        %756 = vmatprep.subr.mxu0 0.0
        %757 = vmatpush1.msra.mxu0 0.0
        %758 = vmatprep.subr.mxu0 0.0
        %759 = vmatpush1.msra.mxu0 0.0
        %760 = vmatprep.subr.mxu0 0.0
        %761 = vmatpush1.msra.mxu0 0.0
        %762 = vmatprep.subr.mxu0 0.0
        %763 = vmatpush1.msra.mxu0 0.0
        %764 = vmatprep.subr.mxu0 0.0
        %765 = vmatpush1.msra.mxu0 0.0
        %766 = vmatprep.subr.mxu0 0.0
        %767 = vmatpush1.msra.mxu0 0.0
        %768 = vmatprep.subr.mxu0 0.0
        %769 = vmatpush1.msra.mxu0 0.0
        %770 = vmatprep.subr.mxu0 0.0
        %771 = vmatpush1.msra.mxu0 0.0
        %772 = vmatprep.subr.mxu0 0.0
        %773 = vmatpush1.msra.mxu0 0.0
        %774 = vmatprep.subr.mxu0 0.0
        %775 = vmatpush1.msra.mxu0 0.0
        %776 = vmatprep.subr.mxu0 0.0
        %777 = vmatpush1.msra.mxu0 0.0
        %778 = vmatprep.subr.mxu0 0.0
        %779 = vmatpush1.msra.mxu0 0.0
        %780 = vmatprep.subr.mxu0 0.0
        %781 = vmatpush1.msra.mxu0 0.0
        %782 = vmatprep.subr.mxu0 0.0
        %783 = vmatpush1.msra.mxu0 0.0
        %784 = vmatprep.subr.mxu0 0.0
        %785 = vmatpush1.msra.mxu0 0.0
        %786 = vmatprep.subr.mxu0 0.0
        %787 = vmatpush1.msra.mxu0 0.0
        %788 = vmatprep.subr.mxu0 0.0
        %789 = vmatpush1.msra.mxu0 0.0
        %790 = vmatprep.subr.mxu0 0.0
        %791 = vmatpush1.msra.mxu0 0.0
        %792 = vmatprep.subr.mxu0 0.0
        %793 = vmatpush1.msra.mxu0 0.0
        %794 = vmatprep.subr.mxu0 0.0
        %795 = vmatpush1.msra.mxu0 0.0
        %796 = vmatprep.subr.mxu0 0.0
        %797 = vmatpush1.msra.mxu0 0.0
        %798 = vmatprep.subr.mxu0 0.0
        %799 = vmatpush1.msra.mxu0 0.0
        %800 = vmatprep.mubr.f32.mxu0 0.0
        %801 = vmatmul.mubr.f32.gmra.mrb[0].mxu0 %v734
        %v802 = vpop.f32.mrb[0].mxu0
        %v803 = vadd.f32 0.0, %v802
        %v804 = vpop.f32.mrb[0].mxu0
        %805 = vdwg.mxu0
        %v807 = vrot.slane %v803, 4
        %v809 = vadd.f32 %v499, %v807
        %v810 = vsub.f32 0.0, %v809
        %v811 = vmul.f32 %v810, 1.442695
        %v812 = vpow.pop %v811
        %v813 = vadd.f32 %v812, 1.0
        %v814 = vrcp.pop %v813
        %v815 = vmul.f32 1.0, %v814
        %v816 = vtanh.pop %v809
        %v818 = vrot.slane %v718, 6
        %v820 = vmul.f32 %v815, %v818
        %822 = vrot.lane.b32.xlu0 %v816, 64
        %v823 = vpop.permute.xlu0 %822
        %v825 = vmul.f32 %v815, %v823
        %827 = vrot.lane.b32.xlu0 %v825, 32
        %v828 = vpop.permute.xlu0 %827
        %v830 = vadd.f32 %v820, %v828
        %v831 = vtanh.pop %v830
        %833 = vrot.lane.b32.xlu0 %v831, 64
        %v834 = vpop.permute.xlu0 %833
        %v836 = vmul.f32 %v815, %v834
        %838 = vrot.lane.b32.xlu0 %v836, 32
        %v839 = vpop.permute.xlu0 %838
        %vm841 = vcmask 259076
        %842 = vst.msk [vmem:[#allocation11] sm:$0x30] %vm841, %v839
        %v843 = vrot.slane %v836, 4
        %844 = vrot.lane.b32.xlu0 %v843, 32
        %v845 = vpop.permute.xlu0 %844
        %v846 = vsel %vm513, %v845, 0
        %848 = vmatprep.subr.mxu0 0.0
        %849 = vmatpush1.msra.mxu0 %v507
        %850 = vmatprep.subr.mxu0 0.0
        %851 = vmatpush1.msra.mxu0 %v508
        %852 = vmatprep.subr.mxu0 0.0
        %853 = vmatpush1.msra.mxu0 %v509
        %854 = vmatprep.subr.mxu0 0.0
        %855 = vmatpush1.msra.mxu0 %v510
        %856 = vmatprep.subr.mxu0 0.0
        %857 = vmatpush1.msra.mxu0 0.0
        %858 = vmatprep.subr.mxu0 0.0
        %859 = vmatpush1.msra.mxu0 0.0
        %860 = vmatprep.subr.mxu0 0.0
        %861 = vmatpush1.msra.mxu0 0.0
        %862 = vmatprep.subr.mxu0 0.0
        %863 = vmatpush1.msra.mxu0 0.0
        %864 = vmatprep.subr.mxu0 0.0
        %865 = vmatpush1.msra.mxu0 0.0
        %866 = vmatprep.subr.mxu0 0.0
        %867 = vmatpush1.msra.mxu0 0.0
        %868 = vmatprep.subr.mxu0 0.0
        %869 = vmatpush1.msra.mxu0 0.0
        %870 = vmatprep.subr.mxu0 0.0
        %871 = vmatpush1.msra.mxu0 0.0
        %872 = vmatprep.subr.mxu0 0.0
        %873 = vmatpush1.msra.mxu0 0.0
        %874 = vmatprep.subr.mxu0 0.0
        %875 = vmatpush1.msra.mxu0 0.0
        %876 = vmatprep.subr.mxu0 0.0
        %877 = vmatpush1.msra.mxu0 0.0
        %878 = vmatprep.subr.mxu0 0.0
        %879 = vmatpush1.msra.mxu0 0.0
        %880 = vmatprep.subr.mxu0 0.0
        %881 = vmatpush1.msra.mxu0 0.0
        %882 = vmatprep.subr.mxu0 0.0
        %883 = vmatpush1.msra.mxu0 0.0
        %884 = vmatprep.subr.mxu0 0.0
        %885 = vmatpush1.msra.mxu0 0.0
        %886 = vmatprep.subr.mxu0 0.0
        %887 = vmatpush1.msra.mxu0 0.0
        %888 = vmatprep.subr.mxu0 0.0
        %889 = vmatpush1.msra.mxu0 0.0
        %890 = vmatprep.subr.mxu0 0.0
        %891 = vmatpush1.msra.mxu0 0.0
        %892 = vmatprep.subr.mxu0 0.0
        %893 = vmatpush1.msra.mxu0 0.0
        %894 = vmatprep.subr.mxu0 0.0
        %895 = vmatpush1.msra.mxu0 0.0
        %896 = vmatprep.subr.mxu0 0.0
        %897 = vmatpush1.msra.mxu0 0.0
        %898 = vmatprep.subr.mxu0 0.0
        %899 = vmatpush1.msra.mxu0 0.0
        %900 = vmatprep.subr.mxu0 0.0
        %901 = vmatpush1.msra.mxu0 0.0
        %902 = vmatprep.subr.mxu0 0.0
        %903 = vmatpush1.msra.mxu0 0.0
        %904 = vmatprep.subr.mxu0 0.0
        %905 = vmatpush1.msra.mxu0 0.0
        %906 = vmatprep.subr.mxu0 0.0
        %907 = vmatpush1.msra.mxu0 0.0
        %908 = vmatprep.subr.mxu0 0.0
        %909 = vmatpush1.msra.mxu0 0.0
        %910 = vmatprep.subr.mxu0 0.0
        %911 = vmatpush1.msra.mxu0 0.0
        %912 = vmatprep.mubr.f32.mxu0 0.0
        %913 = vmatmul.mubr.f32.gmra.mrb[0].mxu0 %v846
        %v914 = vpop.f32.mrb[0].mxu0
        %v915 = vadd.f32 0.0, %v914
        %v916 = vpop.f32.mrb[0].mxu0
        %917 = vdwg.mxu0
        %v919 = vrot.slane %v915, 2
        %v921 = vadd.f32 %v499, %v919
        %v922 = vsub.f32 0.0, %v921
        %v923 = vmul.f32 %v922, 1.442695
        %v924 = vpow.pop %v923
        %v925 = vadd.f32 %v924, 1.0
        %v926 = vrcp.pop %v925
        %v927 = vmul.f32 1.0, %v926
        %v928 = vtanh.pop %v921
        %v930 = vrot.slane %v830, 6
        %v932 = vmul.f32 %v927, %v930
        %934 = vrot.lane.b32.xlu0 %v928, 64
        %v935 = vpop.permute.xlu0 %934
        %v937 = vmul.f32 %v927, %v935
        %939 = vrot.lane.b32.xlu0 %v937, 32
        %v940 = vpop.permute.xlu0 %939
        %v942 = vadd.f32 %v932, %v940
        %v943 = vtanh.pop %v942
        %945 = vrot.lane.b32.xlu0 %v943, 64
        %v946 = vpop.permute.xlu0 %945
        %v948 = vmul.f32 %v927, %v946
        %950 = vrot.lane.b32.xlu0 %v948, 32
        %v951 = vpop.permute.xlu0 %950
        %vm953 = vcmask 261126
        %954 = vst.msk [vmem:[#allocation11] sm:$0xc0] %vm953, %v951
        %v955 = vrot.slane %v948, 6
        %956 = vrot.lane.b32.xlu0 %v955, 32
        %v957 = vpop.permute.xlu0 %956
        %v958 = vsel %vm513, %v957, 0
        %960 = vmatprep.subr.mxu0 0.0
        %961 = vmatpush1.msra.mxu0 %v507
        %962 = vmatprep.subr.mxu0 0.0
        %963 = vmatpush1.msra.mxu0 %v508
        %964 = vmatprep.subr.mxu0 0.0
        %965 = vmatpush1.msra.mxu0 %v509
        %966 = vmatprep.subr.mxu0 0.0
        %967 = vmatpush1.msra.mxu0 %v510
        %968 = vmatprep.subr.mxu0 0.0
        %969 = vmatpush1.msra.mxu0 0.0
        %970 = vmatprep.subr.mxu0 0.0
        %971 = vmatpush1.msra.mxu0 0.0
        %972 = vmatprep.subr.mxu0 0.0
        %973 = vmatpush1.msra.mxu0 0.0
        %974 = vmatprep.subr.mxu0 0.0
        %975 = vmatpush1.msra.mxu0 0.0
        %976 = vmatprep.subr.mxu0 0.0
        %977 = vmatpush1.msra.mxu0 0.0
        %978 = vmatprep.subr.mxu0 0.0
        %979 = vmatpush1.msra.mxu0 0.0
        %980 = vmatprep.subr.mxu0 0.0
        %981 = vmatpush1.msra.mxu0 0.0
        %982 = vmatprep.subr.mxu0 0.0
        %983 = vmatpush1.msra.mxu0 0.0
        %984 = vmatprep.subr.mxu0 0.0
        %985 = vmatpush1.msra.mxu0 0.0
        %986 = vmatprep.subr.mxu0 0.0
        %987 = vmatpush1.msra.mxu0 0.0
        %988 = vmatprep.subr.mxu0 0.0
        %989 = vmatpush1.msra.mxu0 0.0
        %990 = vmatprep.subr.mxu0 0.0
        %991 = vmatpush1.msra.mxu0 0.0
        %992 = vmatprep.subr.mxu0 0.0
        %993 = vmatpush1.msra.mxu0 0.0
        %994 = vmatprep.subr.mxu0 0.0
        %995 = vmatpush1.msra.mxu0 0.0
        %996 = vmatprep.subr.mxu0 0.0
        %997 = vmatpush1.msra.mxu0 0.0
        %998 = vmatprep.subr.mxu0 0.0
        %999 = vmatpush1.msra.mxu0 0.0
        %1000 = vmatprep.subr.mxu0 0.0
        %1001 = vmatpush1.msra.mxu0 0.0
        %1002 = vmatprep.subr.mxu0 0.0
        %1003 = vmatpush1.msra.mxu0 0.0
        %1004 = vmatprep.subr.mxu0 0.0
        %1005 = vmatpush1.msra.mxu0 0.0
        %1006 = vmatprep.subr.mxu0 0.0
        %1007 = vmatpush1.msra.mxu0 0.0
        %1008 = vmatprep.subr.mxu0 0.0
        %1009 = vmatpush1.msra.mxu0 0.0
        %1010 = vmatprep.subr.mxu0 0.0
        %1011 = vmatpush1.msra.mxu0 0.0
        %1012 = vmatprep.subr.mxu0 0.0
        %1013 = vmatpush1.msra.mxu0 0.0
        %1014 = vmatprep.subr.mxu0 0.0
        %1015 = vmatpush1.msra.mxu0 0.0
        %1016 = vmatprep.subr.mxu0 0.0
        %1017 = vmatpush1.msra.mxu0 0.0
        %1018 = vmatprep.subr.mxu0 0.0
        %1019 = vmatpush1.msra.mxu0 0.0
        %1020 = vmatprep.subr.mxu0 0.0
        %1021 = vmatpush1.msra.mxu0 0.0
        %1022 = vmatprep.subr.mxu0 0.0
        %1023 = vmatpush1.msra.mxu0 0.0
        %1024 = vmatprep.mubr.f32.mxu0 0.0
        %1025 = vmatmul.mubr.f32.gmra.mrb[0].mxu0 %v958
        %v1026 = vpop.f32.mrb[0].mxu0
        %v1027 = vadd.f32 0.0, %v1026
        %v1028 = vpop.f32.mrb[0].mxu0
        %1029 = vdwg.mxu0
        %v1030 = vadd.f32 %v504, %v1027
        %v1031 = vsub.f32 0.0, %v1030
        %v1032 = vmul.f32 %v1031, 1.442695
        %v1033 = vpow.pop %v1032
        %v1034 = vadd.f32 %v1033, 1.0
        %v1035 = vrcp.pop %v1034
        %v1036 = vmul.f32 1.0, %v1035
        %v1037 = vtanh.pop %v1030
        %v1039 = vrot.slane %v942, 6
        %v1041 = vmul.f32 %v1036, %v1039
        %1043 = vrot.lane.b32.xlu0 %v1037, 64
        %v1044 = vpop.permute.xlu0 %1043
        %v1046 = vmul.f32 %v1036, %v1044
        %1048 = vrot.lane.b32.xlu0 %v1046, 32
        %v1049 = vpop.permute.xlu0 %1048
        %v1051 = vadd.f32 %v1041, %v1049
        %v1052 = vtanh.pop %v1051
        %1054 = vrot.lane.b32.xlu0 %v1052, 64
        %v1055 = vpop.permute.xlu0 %1054
        %v1057 = vmul.f32 %v1036, %v1055
        %1059 = vrot.lane.b32.xlu0 %v1057, 32
        %v1060 = vpop.permute.xlu0 %1059
        %1062 = vst.msk [vmem:[#allocation11 + $0x8] sm:$0x3] %vm620, %v1060
        %v1063 = vsel %vm513, %v1060, 0
        %1065 = vmatprep.subr.mxu0 0.0
        %1066 = vmatpush1.msra.mxu0 %v507
        %1067 = vmatprep.subr.mxu0 0.0
        %1068 = vmatpush1.msra.mxu0 %v508
        %1069 = vmatprep.subr.mxu0 0.0
        %1070 = vmatpush1.msra.mxu0 %v509
        %1071 = vmatprep.subr.mxu0 0.0
        %1072 = vmatpush1.msra.mxu0 %v510
        %1073 = vmatprep.subr.mxu0 0.0
        %1074 = vmatpush1.msra.mxu0 0.0
        %1075 = vmatprep.subr.mxu0 0.0
        %1076 = vmatpush1.msra.mxu0 0.0
        %1077 = vmatprep.subr.mxu0 0.0
        %1078 = vmatpush1.msra.mxu0 0.0
        %1079 = vmatprep.subr.mxu0 0.0
        %1080 = vmatpush1.msra.mxu0 0.0
        %1081 = vmatprep.subr.mxu0 0.0
        %1082 = vmatpush1.msra.mxu0 0.0
        %1083 = vmatprep.subr.mxu0 0.0
        %1084 = vmatpush1.msra.mxu0 0.0
        %1085 = vmatprep.subr.mxu0 0.0
        %1086 = vmatpush1.msra.mxu0 0.0
        %1087 = vmatprep.subr.mxu0 0.0
        %1088 = vmatpush1.msra.mxu0 0.0
        %1089 = vmatprep.subr.mxu0 0.0
        %1090 = vmatpush1.msra.mxu0 0.0
        %1091 = vmatprep.subr.mxu0 0.0
        %1092 = vmatpush1.msra.mxu0 0.0
        %1093 = vmatprep.subr.mxu0 0.0
        %1094 = vmatpush1.msra.mxu0 0.0
        %1095 = vmatprep.subr.mxu0 0.0
        %1096 = vmatpush1.msra.mxu0 0.0
        %1097 = vmatprep.subr.mxu0 0.0
        %1098 = vmatpush1.msra.mxu0 0.0
        %1099 = vmatprep.subr.mxu0 0.0
        %1100 = vmatpush1.msra.mxu0 0.0
        %1101 = vmatprep.subr.mxu0 0.0
        %1102 = vmatpush1.msra.mxu0 0.0
        %1103 = vmatprep.subr.mxu0 0.0
        %1104 = vmatpush1.msra.mxu0 0.0
        %1105 = vmatprep.subr.mxu0 0.0
        %1106 = vmatpush1.msra.mxu0 0.0
        %1107 = vmatprep.subr.mxu0 0.0
        %1108 = vmatpush1.msra.mxu0 0.0
        %1109 = vmatprep.subr.mxu0 0.0
        %1110 = vmatpush1.msra.mxu0 0.0
        %1111 = vmatprep.subr.mxu0 0.0
        %1112 = vmatpush1.msra.mxu0 0.0
        %1113 = vmatprep.subr.mxu0 0.0
        %1114 = vmatpush1.msra.mxu0 0.0
        %1115 = vmatprep.subr.mxu0 0.0
        %1116 = vmatpush1.msra.mxu0 0.0
        %1117 = vmatprep.subr.mxu0 0.0
        %1118 = vmatpush1.msra.mxu0 0.0
        %1119 = vmatprep.subr.mxu0 0.0
        %1120 = vmatpush1.msra.mxu0 0.0
        %1121 = vmatprep.subr.mxu0 0.0
        %1122 = vmatpush1.msra.mxu0 0.0
        %1123 = vmatprep.subr.mxu0 0.0
        %1124 = vmatpush1.msra.mxu0 0.0
        %1125 = vmatprep.subr.mxu0 0.0
        %1126 = vmatpush1.msra.mxu0 0.0
        %1127 = vmatprep.subr.mxu0 0.0
        %1128 = vmatpush1.msra.mxu0 0.0
        %1129 = vmatprep.mubr.f32.mxu0 0.0
        %1130 = vmatmul.mubr.f32.gmra.mrb[0].mxu0 %v1063
        %v1131 = vpop.f32.mrb[0].mxu0
        %v1132 = vadd.f32 0.0, %v1131
        %v1133 = vpop.f32.mrb[0].mxu0
        %1134 = vdwg.mxu0
        %v1136 = vrot.slane %v1132, 6
        %v1138 = vadd.f32 %v504, %v1136
        %v1139 = vsub.f32 0.0, %v1138
        %v1140 = vmul.f32 %v1139, 1.442695
        %v1141 = vpow.pop %v1140
        %v1142 = vadd.f32 %v1141, 1.0
        %v1143 = vrcp.pop %v1142
        %v1144 = vmul.f32 1.0, %v1143
        %v1145 = vtanh.pop %v1138
        %v1147 = vrot.slane %v1051, 6
        %v1149 = vmul.f32 %v1144, %v1147
        %1151 = vrot.lane.b32.xlu0 %v1145, 64
        %v1152 = vpop.permute.xlu0 %1151
        %v1154 = vmul.f32 %v1144, %v1152
        %1156 = vrot.lane.b32.xlu0 %v1154, 32
        %v1157 = vpop.permute.xlu0 %1156
        %v1159 = vadd.f32 %v1149, %v1157
        %v1160 = vtanh.pop %v1159
        %1162 = vrot.lane.b32.xlu0 %v1160, 64
        %v1163 = vpop.permute.xlu0 %1162
        %v1165 = vmul.f32 %v1144, %v1163
        %1167 = vrot.lane.b32.xlu0 %v1165, 32
        %v1168 = vpop.permute.xlu0 %1167
        %1170 = vst.msk [vmem:[#allocation11 + $0x8] sm:$0xc] %vm729, %v1168
        %v1171 = vrot.slane %v1165, 2
        %1172 = vrot.lane.b32.xlu0 %v1171, 32
        %v1173 = vpop.permute.xlu0 %1172
        %v1174 = vsel %vm513, %v1173, 0
        %1176 = vmatprep.subr.mxu0 0.0
        %1177 = vmatpush1.msra.mxu0 %v507
        %1178 = vmatprep.subr.mxu0 0.0
        %1179 = vmatpush1.msra.mxu0 %v508
        %1180 = vmatprep.subr.mxu0 0.0
        %1181 = vmatpush1.msra.mxu0 %v509
        %1182 = vmatprep.subr.mxu0 0.0
        %1183 = vmatpush1.msra.mxu0 %v510
        %1184 = vmatprep.subr.mxu0 0.0
        %1185 = vmatpush1.msra.mxu0 0.0
        %1186 = vmatprep.subr.mxu0 0.0
        %1187 = vmatpush1.msra.mxu0 0.0
        %1188 = vmatprep.subr.mxu0 0.0
        %1189 = vmatpush1.msra.mxu0 0.0
        %1190 = vmatprep.subr.mxu0 0.0
        %1191 = vmatpush1.msra.mxu0 0.0
        %1192 = vmatprep.subr.mxu0 0.0
        %1193 = vmatpush1.msra.mxu0 0.0
        %1194 = vmatprep.subr.mxu0 0.0
        %1195 = vmatpush1.msra.mxu0 0.0
        %1196 = vmatprep.subr.mxu0 0.0
        %1197 = vmatpush1.msra.mxu0 0.0
        %1198 = vmatprep.subr.mxu0 0.0
        %1199 = vmatpush1.msra.mxu0 0.0
        %1200 = vmatprep.subr.mxu0 0.0
        %1201 = vmatpush1.msra.mxu0 0.0
        %1202 = vmatprep.subr.mxu0 0.0
        %1203 = vmatpush1.msra.mxu0 0.0
        %1204 = vmatprep.subr.mxu0 0.0
        %1205 = vmatpush1.msra.mxu0 0.0
        %1206 = vmatprep.subr.mxu0 0.0
        %1207 = vmatpush1.msra.mxu0 0.0
        %1208 = vmatprep.subr.mxu0 0.0
        %1209 = vmatpush1.msra.mxu0 0.0
        %1210 = vmatprep.subr.mxu0 0.0
        %1211 = vmatpush1.msra.mxu0 0.0
        %1212 = vmatprep.subr.mxu0 0.0
        %1213 = vmatpush1.msra.mxu0 0.0
        %1214 = vmatprep.subr.mxu0 0.0
        %1215 = vmatpush1.msra.mxu0 0.0
        %1216 = vmatprep.subr.mxu0 0.0
        %1217 = vmatpush1.msra.mxu0 0.0
        %1218 = vmatprep.subr.mxu0 0.0
        %1219 = vmatpush1.msra.mxu0 0.0
        %1220 = vmatprep.subr.mxu0 0.0
        %1221 = vmatpush1.msra.mxu0 0.0
        %1222 = vmatprep.subr.mxu0 0.0
        %1223 = vmatpush1.msra.mxu0 0.0
        %1224 = vmatprep.subr.mxu0 0.0
        %1225 = vmatpush1.msra.mxu0 0.0
        %1226 = vmatprep.subr.mxu0 0.0
        %1227 = vmatpush1.msra.mxu0 0.0
        %1228 = vmatprep.subr.mxu0 0.0
        %1229 = vmatpush1.msra.mxu0 0.0
        %1230 = vmatprep.subr.mxu0 0.0
        %1231 = vmatpush1.msra.mxu0 0.0
        %1232 = vmatprep.subr.mxu0 0.0
        %1233 = vmatpush1.msra.mxu0 0.0
        %1234 = vmatprep.subr.mxu0 0.0
        %1235 = vmatpush1.msra.mxu0 0.0
        %1236 = vmatprep.subr.mxu0 0.0
        %1237 = vmatpush1.msra.mxu0 0.0
        %1238 = vmatprep.subr.mxu0 0.0
        %1239 = vmatpush1.msra.mxu0 0.0
        %1240 = vmatprep.mubr.f32.mxu0 0.0
        %1241 = vmatmul.mubr.f32.gmra.mrb[0].mxu0 %v1174
        %v1242 = vpop.f32.mrb[0].mxu0
        %v1243 = vadd.f32 0.0, %v1242
        %v1244 = vpop.f32.mrb[0].mxu0
        %1245 = vdwg.mxu0
        %v1247 = vrot.slane %v1243, 4
        %v1249 = vadd.f32 %v504, %v1247
        %v1250 = vsub.f32 0.0, %v1249
        %v1251 = vmul.f32 %v1250, 1.442695
        %v1252 = vpow.pop %v1251
        %v1253 = vadd.f32 %v1252, 1.0
        %v1254 = vrcp.pop %v1253
        %v1255 = vmul.f32 1.0, %v1254
        %v1256 = vtanh.pop %v1249
        %v1258 = vrot.slane %v1159, 6
        %v1260 = vmul.f32 %v1255, %v1258
        %1262 = vrot.lane.b32.xlu0 %v1256, 64
        %v1263 = vpop.permute.xlu0 %1262
        %v1265 = vmul.f32 %v1255, %v1263
        %1267 = vrot.lane.b32.xlu0 %v1265, 32
        %v1268 = vpop.permute.xlu0 %1267
        %v1270 = vadd.f32 %v1260, %v1268
        %v1271 = vtanh.pop %v1270
        %1273 = vrot.lane.b32.xlu0 %v1271, 64
        %v1274 = vpop.permute.xlu0 %1273
        %v1276 = vmul.f32 %v1255, %v1274
        %1278 = vrot.lane.b32.xlu0 %v1276, 32
        %v1279 = vpop.permute.xlu0 %1278
        %1281 = vst.msk [vmem:[#allocation11 + $0x8] sm:$0x30] %vm841, %v1279
        %v1282 = vrot.slane %v1276, 4
        %1283 = vrot.lane.b32.xlu0 %v1282, 32
        %v1284 = vpop.permute.xlu0 %1283
        %v1285 = vsel %vm513, %v1284, 0
        %1287 = vmatprep.subr.mxu0 0.0
        %1288 = vmatpush1.msra.mxu0 %v507
        %1289 = vmatprep.subr.mxu0 0.0
        %1290 = vmatpush1.msra.mxu0 %v508
        %1291 = vmatprep.subr.mxu0 0.0
        %1292 = vmatpush1.msra.mxu0 %v509
        %1293 = vmatprep.subr.mxu0 0.0
        %1294 = vmatpush1.msra.mxu0 %v510
        %1295 = vmatprep.subr.mxu0 0.0
        %1296 = vmatpush1.msra.mxu0 0.0
        %1297 = vmatprep.subr.mxu0 0.0
        %1298 = vmatpush1.msra.mxu0 0.0
        %1299 = vmatprep.subr.mxu0 0.0
        %1300 = vmatpush1.msra.mxu0 0.0
        %1301 = vmatprep.subr.mxu0 0.0
        %1302 = vmatpush1.msra.mxu0 0.0
        %1303 = vmatprep.subr.mxu0 0.0
        %1304 = vmatpush1.msra.mxu0 0.0
        %1305 = vmatprep.subr.mxu0 0.0
        %1306 = vmatpush1.msra.mxu0 0.0
        %1307 = vmatprep.subr.mxu0 0.0
        %1308 = vmatpush1.msra.mxu0 0.0
        %1309 = vmatprep.subr.mxu0 0.0
        %1310 = vmatpush1.msra.mxu0 0.0
        %1311 = vmatprep.subr.mxu0 0.0
        %1312 = vmatpush1.msra.mxu0 0.0
        %1313 = vmatprep.subr.mxu0 0.0
        %1314 = vmatpush1.msra.mxu0 0.0
        %1315 = vmatprep.subr.mxu0 0.0
        %1316 = vmatpush1.msra.mxu0 0.0
        %1317 = vmatprep.subr.mxu0 0.0
        %1318 = vmatpush1.msra.mxu0 0.0
        %1319 = vmatprep.subr.mxu0 0.0
        %1320 = vmatpush1.msra.mxu0 0.0
        %1321 = vmatprep.subr.mxu0 0.0
        %1322 = vmatpush1.msra.mxu0 0.0
        %1323 = vmatprep.subr.mxu0 0.0
        %1324 = vmatpush1.msra.mxu0 0.0
        %1325 = vmatprep.subr.mxu0 0.0
        %1326 = vmatpush1.msra.mxu0 0.0
        %1327 = vmatprep.subr.mxu0 0.0
        %1328 = vmatpush1.msra.mxu0 0.0
        %1329 = vmatprep.subr.mxu0 0.0
        %1330 = vmatpush1.msra.mxu0 0.0
        %1331 = vmatprep.subr.mxu0 0.0
        %1332 = vmatpush1.msra.mxu0 0.0
        %1333 = vmatprep.subr.mxu0 0.0
        %1334 = vmatpush1.msra.mxu0 0.0
        %1335 = vmatprep.subr.mxu0 0.0
        %1336 = vmatpush1.msra.mxu0 0.0
        %1337 = vmatprep.subr.mxu0 0.0
        %1338 = vmatpush1.msra.mxu0 0.0
        %1339 = vmatprep.subr.mxu0 0.0
        %1340 = vmatpush1.msra.mxu0 0.0
        %1341 = vmatprep.subr.mxu0 0.0
        %1342 = vmatpush1.msra.mxu0 0.0
        %1343 = vmatprep.subr.mxu0 0.0
        %1344 = vmatpush1.msra.mxu0 0.0
        %1345 = vmatprep.subr.mxu0 0.0
        %1346 = vmatpush1.msra.mxu0 0.0
        %1347 = vmatprep.subr.mxu0 0.0
        %1348 = vmatpush1.msra.mxu0 0.0
        %1349 = vmatprep.subr.mxu0 0.0
        %1350 = vmatpush1.msra.mxu0 0.0
        %1351 = vmatprep.mubr.f32.mxu0 0.0
        %1352 = vmatmul.mubr.f32.gmra.mrb[0].mxu0 %v1285
        %v1353 = vpop.f32.mrb[0].mxu0
        %v1354 = vadd.f32 0.0, %v1353
        %v1355 = vpop.f32.mrb[0].mxu0
        %1356 = vdwg.mxu0
        %v1358 = vrot.slane %v1354, 2
        %v1360 = vadd.f32 %v504, %v1358
        %v1361 = vsub.f32 0.0, %v1360
        %v1362 = vmul.f32 %v1361, 1.442695
        %v1363 = vpow.pop %v1362
        %v1364 = vadd.f32 %v1363, 1.0
        %v1365 = vrcp.pop %v1364
        %v1366 = vmul.f32 1.0, %v1365
        %v1367 = vtanh.pop %v1360
        %v1369 = vrot.slane %v1270, 6
        %v1371 = vmul.f32 %v1366, %v1369
        %1373 = vrot.lane.b32.xlu0 %v1367, 64
        %v1374 = vpop.permute.xlu0 %1373
        %v1376 = vmul.f32 %v1366, %v1374
        %1378 = vrot.lane.b32.xlu0 %v1376, 32
        %v1379 = vpop.permute.xlu0 %1378
        %v1381 = vadd.f32 %v1371, %v1379
        %v1382 = vtanh.pop %v1381
        %1384 = vrot.lane.b32.xlu0 %v1382, 64
        %v1385 = vpop.permute.xlu0 %1384
        %v1387 = vmul.f32 %v1366, %v1385
        %1389 = vrot.lane.b32.xlu0 %v1387, 32
        %v1390 = vpop.permute.xlu0 %1389
        %1392 = vst.msk [vmem:[#allocation11 + $0x8] sm:$0xc0] %vm953, %v1390
        %s1393 = scalar_lea.vmem %s318, 64 [#allocation6]
        %v1394 = vld [vmem:[%s1393] sm:$0xff]
        %v1395 = vld [vmem:[%s1393 + $0x8] sm:$0xff]
        %v1396 = vld [vmem:[%s1393 + $0x10] sm:$0xff]
        %v1397 = vld [vmem:[%s1393 + $0x18] sm:$0xff]
        %v1398 = vld [vmem:[%s1393 + $0x20] sm:$0xff]
        %v1399 = vld [vmem:[%s1393 + $0x28] sm:$0xff]
        %v1400 = vld [vmem:[%s1393 + $0x30] sm:$0xff]
        %v1401 = vld [vmem:[%s1393 + $0x38] sm:$0xff]
        %s1402 = scalar_lea.vmem %s336, 1 [#allocation9]
        %v1403 = vld [vmem:[%s1402] sm:$0x1]
        %v1405 = vlaneseq
        %v1406 = vshrl.u32 %v1405, 7
        %v1407 = vsub.s32 0, %v1406
        %v1408 = vrot.slane %v1403, %v1407
        %1410 = vmatprep.subr.mxu0 0.0
        %1411 = vmatpush1.msra.mxu0 %v1394
        %1412 = vmatprep.subr.mxu0 0.0
        %1413 = vmatpush1.msra.mxu0 %v1395
        %1414 = vmatprep.subr.mxu0 0.0
        %1415 = vmatpush1.msra.mxu0 %v1396
        %1416 = vmatprep.subr.mxu0 0.0
        %1417 = vmatpush1.msra.mxu0 %v1397
        %1418 = vmatprep.subr.mxu0 0.0
        %1419 = vmatpush1.msra.mxu0 %v1398
        %1420 = vmatprep.subr.mxu0 0.0
        %1421 = vmatpush1.msra.mxu0 %v1399
        %1422 = vmatprep.subr.mxu0 0.0
        %1423 = vmatpush1.msra.mxu0 %v1400
        %1424 = vmatprep.subr.mxu0 0.0
        %1425 = vmatpush1.msra.mxu0 %v1401
        %1426 = vmatprep.subr.mxu0 0.0
        %1427 = vmatpush1.msra.mxu0 0.0
        %1428 = vmatprep.subr.mxu0 0.0
        %1429 = vmatpush1.msra.mxu0 0.0
        %1430 = vmatprep.subr.mxu0 0.0
        %1431 = vmatpush1.msra.mxu0 0.0
        %1432 = vmatprep.subr.mxu0 0.0
        %1433 = vmatpush1.msra.mxu0 0.0
        %1434 = vmatprep.subr.mxu0 0.0
        %1435 = vmatpush1.msra.mxu0 0.0
        %1436 = vmatprep.subr.mxu0 0.0
        %1437 = vmatpush1.msra.mxu0 0.0
        %1438 = vmatprep.subr.mxu0 0.0
        %1439 = vmatpush1.msra.mxu0 0.0
        %1440 = vmatprep.subr.mxu0 0.0
        %1441 = vmatpush1.msra.mxu0 0.0
        %1442 = vmatprep.subr.mxu0 0.0
        %1443 = vmatpush1.msra.mxu0 0.0
        %1444 = vmatprep.subr.mxu0 0.0
        %1445 = vmatpush1.msra.mxu0 0.0
        %1446 = vmatprep.subr.mxu0 0.0
        %1447 = vmatpush1.msra.mxu0 0.0
        %1448 = vmatprep.subr.mxu0 0.0
        %1449 = vmatpush1.msra.mxu0 0.0
        %1450 = vmatprep.subr.mxu0 0.0
        %1451 = vmatpush1.msra.mxu0 0.0
        %1452 = vmatprep.subr.mxu0 0.0
        %1453 = vmatpush1.msra.mxu0 0.0
        %1454 = vmatprep.subr.mxu0 0.0
        %1455 = vmatpush1.msra.mxu0 0.0
        %1456 = vmatprep.subr.mxu0 0.0
        %1457 = vmatpush1.msra.mxu0 0.0
        %1458 = vmatprep.subr.mxu0 0.0
        %1459 = vmatpush1.msra.mxu0 0.0
        %1460 = vmatprep.subr.mxu0 0.0
        %1461 = vmatpush1.msra.mxu0 0.0
        %1462 = vmatprep.subr.mxu0 0.0
        %1463 = vmatpush1.msra.mxu0 0.0
        %1464 = vmatprep.subr.mxu0 0.0
        %1465 = vmatpush1.msra.mxu0 0.0
        %1466 = vmatprep.subr.mxu0 0.0
        %1467 = vmatpush1.msra.mxu0 0.0
        %1468 = vmatprep.subr.mxu0 0.0
        %1469 = vmatpush1.msra.mxu0 0.0
        %1470 = vmatprep.subr.mxu0 0.0
        %1471 = vmatpush1.msra.mxu0 0.0
        %1472 = vmatprep.subr.mxu0 0.0
        %1473 = vmatpush1.msra.mxu0 0.0
        %1474 = vmatprep.mubr.f32.mxu0 0.0
        %1475 = vmatmul.mubr.f32.gmra.mrb[0].mxu0 %v427
        %v1476 = vpop.f32.mrb[0].mxu0
        %v1477 = vadd.f32 %v1408, %v1476
        %v1478 = vpop.f32.mrb[0].mxu0
        %1479 = vmatprep.mubr.f32.mxu0 0.0
        %1480 = vmatmul.mubr.f32.gmra.mrb[0].mxu0 %v430
        %v1481 = vpop.f32.mrb[0].mxu0
        %v1482 = vadd.f32 %v1408, %v1481
        %v1483 = vpop.f32.mrb[0].mxu0
        %1484 = vdwg.mxu0
        %s1485 = scalar_lea.vmem %s327, 32 [#allocation8]
        %v1486 = vld [vmem:[%s1485] sm:$0xff]
        %v1487 = vld [vmem:[%s1485 + $0x8] sm:$0xff]
        %v1488 = vld [vmem:[%s1485 + $0x10] sm:$0xff]
        %v1489 = vld [vmem:[%s1485 + $0x18] sm:$0xff]
        %s1490 = scalar_lea.vmem %s384, 2
        %v1491 = vld [vmem:[%s1490] sm:$0x3]
        %s1492 = scalar_lea.vmem %s389, 2
        %v1493 = vld [vmem:[%s1492] sm:$0x3]
        %v1495 = vsel %vm513, %v1491, 0
        %1497 = vmatprep.subr.mxu0 0.0
        %1498 = vmatpush1.msra.mxu0 %v1486
        %1499 = vmatprep.subr.mxu0 0.0
        %1500 = vmatpush1.msra.mxu0 %v1487
        %1501 = vmatprep.subr.mxu0 0.0
        %1502 = vmatpush1.msra.mxu0 %v1488
        %1503 = vmatprep.subr.mxu0 0.0
        %1504 = vmatpush1.msra.mxu0 %v1489
        %1505 = vmatprep.subr.mxu0 0.0
        %1506 = vmatpush1.msra.mxu0 0.0
        %1507 = vmatprep.subr.mxu0 0.0
        %1508 = vmatpush1.msra.mxu0 0.0
        %1509 = vmatprep.subr.mxu0 0.0
        %1510 = vmatpush1.msra.mxu0 0.0
        %1511 = vmatprep.subr.mxu0 0.0
        %1512 = vmatpush1.msra.mxu0 0.0
        %1513 = vmatprep.subr.mxu0 0.0
        %1514 = vmatpush1.msra.mxu0 0.0
        %1515 = vmatprep.subr.mxu0 0.0
        %1516 = vmatpush1.msra.mxu0 0.0
        %1517 = vmatprep.subr.mxu0 0.0
        %1518 = vmatpush1.msra.mxu0 0.0
        %1519 = vmatprep.subr.mxu0 0.0
        %1520 = vmatpush1.msra.mxu0 0.0
        %1521 = vmatprep.subr.mxu0 0.0
        %1522 = vmatpush1.msra.mxu0 0.0
        %1523 = vmatprep.subr.mxu0 0.0
        %1524 = vmatpush1.msra.mxu0 0.0
        %1525 = vmatprep.subr.mxu0 0.0
        %1526 = vmatpush1.msra.mxu0 0.0
        %1527 = vmatprep.subr.mxu0 0.0
        %1528 = vmatpush1.msra.mxu0 0.0
        %1529 = vmatprep.subr.mxu0 0.0
        %1530 = vmatpush1.msra.mxu0 0.0
        %1531 = vmatprep.subr.mxu0 0.0
        %1532 = vmatpush1.msra.mxu0 0.0
        %1533 = vmatprep.subr.mxu0 0.0
        %1534 = vmatpush1.msra.mxu0 0.0
        %1535 = vmatprep.subr.mxu0 0.0
        %1536 = vmatpush1.msra.mxu0 0.0
        %1537 = vmatprep.subr.mxu0 0.0
        %1538 = vmatpush1.msra.mxu0 0.0
        %1539 = vmatprep.subr.mxu0 0.0
        %1540 = vmatpush1.msra.mxu0 0.0
        %1541 = vmatprep.subr.mxu0 0.0
        %1542 = vmatpush1.msra.mxu0 0.0
        %1543 = vmatprep.subr.mxu0 0.0
        %1544 = vmatpush1.msra.mxu0 0.0
        %1545 = vmatprep.subr.mxu0 0.0
        %1546 = vmatpush1.msra.mxu0 0.0
        %1547 = vmatprep.subr.mxu0 0.0
        %1548 = vmatpush1.msra.mxu0 0.0
        %1549 = vmatprep.subr.mxu0 0.0
        %1550 = vmatpush1.msra.mxu0 0.0
        %1551 = vmatprep.subr.mxu0 0.0
        %1552 = vmatpush1.msra.mxu0 0.0
        %1553 = vmatprep.subr.mxu0 0.0
        %1554 = vmatpush1.msra.mxu0 0.0
        %1555 = vmatprep.subr.mxu0 0.0
        %1556 = vmatpush1.msra.mxu0 0.0
        %1557 = vmatprep.subr.mxu0 0.0
        %1558 = vmatpush1.msra.mxu0 0.0
        %1559 = vmatprep.subr.mxu0 0.0
        %1560 = vmatpush1.msra.mxu0 0.0
        %1561 = vmatprep.mubr.f32.mxu0 0.0
        %1562 = vmatmul.mubr.f32.gmra.mrb[0].mxu0 %v1495
        %v1563 = vpop.f32.mrb[0].mxu0
        %v1564 = vadd.f32 0.0, %v1563
        %v1565 = vpop.f32.mrb[0].mxu0
        %1566 = vdwg.mxu0
        %v1568 = vrot.slane %v1564, 2
        %v1570 = vadd.f32 %v1482, %v1568
        %v1571 = vsub.f32 0.0, %v1570
        %v1572 = vmul.f32 %v1571, 1.442695
        %v1573 = vpow.pop %v1572
        %v1574 = vadd.f32 %v1573, 1.0
        %v1575 = vrcp.pop %v1574
        %v1576 = vmul.f32 1.0, %v1575
        %v1577 = vtanh.pop %v1570
        %v1579 = vrot.slane %v1493, 2
        %1580 = vrot.lane.b32.xlu0 %v1579, 32
        %v1581 = vpop.permute.xlu0 %1580
        %v1583 = vmul.f32 %v1576, %v1581
        %1585 = vrot.lane.b32.xlu0 %v1577, 64
        %v1586 = vpop.permute.xlu0 %1585
        %v1588 = vmul.f32 %v1576, %v1586
        %1590 = vrot.lane.b32.xlu0 %v1588, 32
        %v1591 = vpop.permute.xlu0 %1590
        %v1593 = vadd.f32 %v1583, %v1591
        %v1594 = vtanh.pop %v1593
        %1596 = vrot.lane.b32.xlu0 %v1594, 64
        %v1597 = vpop.permute.xlu0 %1596
        %v1599 = vmul.f32 %v1576, %v1597
        %1601 = vrot.lane.b32.xlu0 %v1599, 64
        %v1602 = vpop.permute.xlu0 %1601
        %vm1604 = vcmask 523526
        %1605 = vst.msk [vmem:[#allocation11 + $0x8] sm:$0xc0] %vm1604, %v1602
        %v1606 = vrot.slane %v1599, 6
        %1607 = vrot.lane.b32.xlu0 %v1606, 32
        %v1608 = vpop.permute.xlu0 %1607
        %v1609 = vsel %vm513, %v1608, 0
        %1611 = vmatprep.subr.mxu0 0.0
        %1612 = vmatpush1.msra.mxu0 %v1486
        %1613 = vmatprep.subr.mxu0 0.0
        %1614 = vmatpush1.msra.mxu0 %v1487
        %1615 = vmatprep.subr.mxu0 0.0
        %1616 = vmatpush1.msra.mxu0 %v1488
        %1617 = vmatprep.subr.mxu0 0.0
        %1618 = vmatpush1.msra.mxu0 %v1489
        %1619 = vmatprep.subr.mxu0 0.0
        %1620 = vmatpush1.msra.mxu0 0.0
        %1621 = vmatprep.subr.mxu0 0.0
        %1622 = vmatpush1.msra.mxu0 0.0
        %1623 = vmatprep.subr.mxu0 0.0
        %1624 = vmatpush1.msra.mxu0 0.0
        %1625 = vmatprep.subr.mxu0 0.0
        %1626 = vmatpush1.msra.mxu0 0.0
        %1627 = vmatprep.subr.mxu0 0.0
        %1628 = vmatpush1.msra.mxu0 0.0
        %1629 = vmatprep.subr.mxu0 0.0
        %1630 = vmatpush1.msra.mxu0 0.0
        %1631 = vmatprep.subr.mxu0 0.0
        %1632 = vmatpush1.msra.mxu0 0.0
        %1633 = vmatprep.subr.mxu0 0.0
        %1634 = vmatpush1.msra.mxu0 0.0
        %1635 = vmatprep.subr.mxu0 0.0
        %1636 = vmatpush1.msra.mxu0 0.0
        %1637 = vmatprep.subr.mxu0 0.0
        %1638 = vmatpush1.msra.mxu0 0.0
        %1639 = vmatprep.subr.mxu0 0.0
        %1640 = vmatpush1.msra.mxu0 0.0
        %1641 = vmatprep.subr.mxu0 0.0
        %1642 = vmatpush1.msra.mxu0 0.0
        %1643 = vmatprep.subr.mxu0 0.0
        %1644 = vmatpush1.msra.mxu0 0.0
        %1645 = vmatprep.subr.mxu0 0.0
        %1646 = vmatpush1.msra.mxu0 0.0
        %1647 = vmatprep.subr.mxu0 0.0
        %1648 = vmatpush1.msra.mxu0 0.0
        %1649 = vmatprep.subr.mxu0 0.0
        %1650 = vmatpush1.msra.mxu0 0.0
        %1651 = vmatprep.subr.mxu0 0.0
        %1652 = vmatpush1.msra.mxu0 0.0
        %1653 = vmatprep.subr.mxu0 0.0
        %1654 = vmatpush1.msra.mxu0 0.0
        %1655 = vmatprep.subr.mxu0 0.0
        %1656 = vmatpush1.msra.mxu0 0.0
        %1657 = vmatprep.subr.mxu0 0.0
        %1658 = vmatpush1.msra.mxu0 0.0
        %1659 = vmatprep.subr.mxu0 0.0
        %1660 = vmatpush1.msra.mxu0 0.0
        %1661 = vmatprep.subr.mxu0 0.0
        %1662 = vmatpush1.msra.mxu0 0.0
        %1663 = vmatprep.subr.mxu0 0.0
        %1664 = vmatpush1.msra.mxu0 0.0
        %1665 = vmatprep.subr.mxu0 0.0
        %1666 = vmatpush1.msra.mxu0 0.0
        %1667 = vmatprep.subr.mxu0 0.0
        %1668 = vmatpush1.msra.mxu0 0.0
        %1669 = vmatprep.subr.mxu0 0.0
        %1670 = vmatpush1.msra.mxu0 0.0
        %1671 = vmatprep.subr.mxu0 0.0
        %1672 = vmatpush1.msra.mxu0 0.0
        %1673 = vmatprep.subr.mxu0 0.0
        %1674 = vmatpush1.msra.mxu0 0.0
        %1675 = vmatprep.mubr.f32.mxu0 0.0
        %1676 = vmatmul.mubr.f32.gmra.mrb[0].mxu0 %v1609
        %v1677 = vpop.f32.mrb[0].mxu0
        %v1678 = vadd.f32 0.0, %v1677
        %v1679 = vpop.f32.mrb[0].mxu0
        %1680 = vdwg.mxu0
        %v1682 = vrot.slane %v1678, 4
        %v1684 = vadd.f32 %v1482, %v1682
        %v1685 = vsub.f32 0.0, %v1684
        %v1686 = vmul.f32 %v1685, 1.442695
        %v1687 = vpow.pop %v1686
        %v1688 = vadd.f32 %v1687, 1.0
        %v1689 = vrcp.pop %v1688
        %v1690 = vmul.f32 1.0, %v1689
        %v1691 = vtanh.pop %v1684
        %v1693 = vrot.slane %v1593, 2
        %v1695 = vmul.f32 %v1690, %v1693
        %1697 = vrot.lane.b32.xlu0 %v1691, 64
        %v1698 = vpop.permute.xlu0 %1697
        %v1700 = vmul.f32 %v1690, %v1698
        %1702 = vrot.lane.b32.xlu0 %v1700, 32
        %v1703 = vpop.permute.xlu0 %1702
        %v1705 = vadd.f32 %v1695, %v1703
        %v1706 = vtanh.pop %v1705
        %1708 = vrot.lane.b32.xlu0 %v1706, 64
        %v1709 = vpop.permute.xlu0 %1708
        %v1711 = vmul.f32 %v1690, %v1709
        %1713 = vrot.lane.b32.xlu0 %v1711, 64
        %v1714 = vpop.permute.xlu0 %1713
        %vm1716 = vcmask 521476
        %1717 = vst.msk [vmem:[#allocation11 + $0x8] sm:$0x30] %vm1716, %v1714
        %v1718 = vrot.slane %v1711, 4
        %1719 = vrot.lane.b32.xlu0 %v1718, 32
        %v1720 = vpop.permute.xlu0 %1719
        %v1721 = vsel %vm513, %v1720, 0
        %1723 = vmatprep.subr.mxu0 0.0
        %1724 = vmatpush1.msra.mxu0 %v1486
        %1725 = vmatprep.subr.mxu0 0.0
        %1726 = vmatpush1.msra.mxu0 %v1487
        %1727 = vmatprep.subr.mxu0 0.0
        %1728 = vmatpush1.msra.mxu0 %v1488
        %1729 = vmatprep.subr.mxu0 0.0
        %1730 = vmatpush1.msra.mxu0 %v1489
        %1731 = vmatprep.subr.mxu0 0.0
        %1732 = vmatpush1.msra.mxu0 0.0
        %1733 = vmatprep.subr.mxu0 0.0
        %1734 = vmatpush1.msra.mxu0 0.0
        %1735 = vmatprep.subr.mxu0 0.0
        %1736 = vmatpush1.msra.mxu0 0.0
        %1737 = vmatprep.subr.mxu0 0.0
        %1738 = vmatpush1.msra.mxu0 0.0
        %1739 = vmatprep.subr.mxu0 0.0
        %1740 = vmatpush1.msra.mxu0 0.0
        %1741 = vmatprep.subr.mxu0 0.0
        %1742 = vmatpush1.msra.mxu0 0.0
        %1743 = vmatprep.subr.mxu0 0.0
        %1744 = vmatpush1.msra.mxu0 0.0
        %1745 = vmatprep.subr.mxu0 0.0
        %1746 = vmatpush1.msra.mxu0 0.0
        %1747 = vmatprep.subr.mxu0 0.0
        %1748 = vmatpush1.msra.mxu0 0.0
        %1749 = vmatprep.subr.mxu0 0.0
        %1750 = vmatpush1.msra.mxu0 0.0
        %1751 = vmatprep.subr.mxu0 0.0
        %1752 = vmatpush1.msra.mxu0 0.0
        %1753 = vmatprep.subr.mxu0 0.0
        %1754 = vmatpush1.msra.mxu0 0.0
        %1755 = vmatprep.subr.mxu0 0.0
        %1756 = vmatpush1.msra.mxu0 0.0
        %1757 = vmatprep.subr.mxu0 0.0
        %1758 = vmatpush1.msra.mxu0 0.0
        %1759 = vmatprep.subr.mxu0 0.0
        %1760 = vmatpush1.msra.mxu0 0.0
        %1761 = vmatprep.subr.mxu0 0.0
        %1762 = vmatpush1.msra.mxu0 0.0
        %1763 = vmatprep.subr.mxu0 0.0
        %1764 = vmatpush1.msra.mxu0 0.0
        %1765 = vmatprep.subr.mxu0 0.0
        %1766 = vmatpush1.msra.mxu0 0.0
        %1767 = vmatprep.subr.mxu0 0.0
        %1768 = vmatpush1.msra.mxu0 0.0
        %1769 = vmatprep.subr.mxu0 0.0
        %1770 = vmatpush1.msra.mxu0 0.0
        %1771 = vmatprep.subr.mxu0 0.0
        %1772 = vmatpush1.msra.mxu0 0.0
        %1773 = vmatprep.subr.mxu0 0.0
        %1774 = vmatpush1.msra.mxu0 0.0
        %1775 = vmatprep.subr.mxu0 0.0
        %1776 = vmatpush1.msra.mxu0 0.0
        %1777 = vmatprep.subr.mxu0 0.0
        %1778 = vmatpush1.msra.mxu0 0.0
        %1779 = vmatprep.subr.mxu0 0.0
        %1780 = vmatpush1.msra.mxu0 0.0
        %1781 = vmatprep.subr.mxu0 0.0
        %1782 = vmatpush1.msra.mxu0 0.0
        %1783 = vmatprep.subr.mxu0 0.0
        %1784 = vmatpush1.msra.mxu0 0.0
        %1785 = vmatprep.subr.mxu0 0.0
        %1786 = vmatpush1.msra.mxu0 0.0
        %1787 = vmatprep.mubr.f32.mxu0 0.0
        %1788 = vmatmul.mubr.f32.gmra.mrb[0].mxu0 %v1721
        %v1789 = vpop.f32.mrb[0].mxu0
        %v1790 = vadd.f32 0.0, %v1789
        %v1791 = vpop.f32.mrb[0].mxu0
        %1792 = vdwg.mxu0
        %v1794 = vrot.slane %v1790, 6
        %v1796 = vadd.f32 %v1482, %v1794
        %v1797 = vsub.f32 0.0, %v1796
        %v1798 = vmul.f32 %v1797, 1.442695
        %v1799 = vpow.pop %v1798
        %v1800 = vadd.f32 %v1799, 1.0
        %v1801 = vrcp.pop %v1800
        %v1802 = vmul.f32 1.0, %v1801
        %v1803 = vtanh.pop %v1796
        %v1805 = vrot.slane %v1705, 2
        %v1807 = vmul.f32 %v1802, %v1805
        %1809 = vrot.lane.b32.xlu0 %v1803, 64
        %v1810 = vpop.permute.xlu0 %1809
        %v1812 = vmul.f32 %v1802, %v1810
        %1814 = vrot.lane.b32.xlu0 %v1812, 32
        %v1815 = vpop.permute.xlu0 %1814
        %v1817 = vadd.f32 %v1807, %v1815
        %v1818 = vtanh.pop %v1817
        %1820 = vrot.lane.b32.xlu0 %v1818, 64
        %v1821 = vpop.permute.xlu0 %1820
        %v1823 = vmul.f32 %v1802, %v1821
        %1825 = vrot.lane.b32.xlu0 %v1823, 64
        %v1826 = vpop.permute.xlu0 %1825
        %vm1828 = vcmask 519426
        %1829 = vst.msk [vmem:[#allocation11 + $0x8] sm:$0xc] %vm1828, %v1826
        %v1830 = vrot.slane %v1823, 2
        %1831 = vrot.lane.b32.xlu0 %v1830, 32
        %v1832 = vpop.permute.xlu0 %1831
        %v1833 = vsel %vm513, %v1832, 0
        %1835 = vmatprep.subr.mxu0 0.0
        %1836 = vmatpush1.msra.mxu0 %v1486
        %1837 = vmatprep.subr.mxu0 0.0
        %1838 = vmatpush1.msra.mxu0 %v1487
        %1839 = vmatprep.subr.mxu0 0.0
        %1840 = vmatpush1.msra.mxu0 %v1488
        %1841 = vmatprep.subr.mxu0 0.0
        %1842 = vmatpush1.msra.mxu0 %v1489
        %1843 = vmatprep.subr.mxu0 0.0
        %1844 = vmatpush1.msra.mxu0 0.0
        %1845 = vmatprep.subr.mxu0 0.0
        %1846 = vmatpush1.msra.mxu0 0.0
        %1847 = vmatprep.subr.mxu0 0.0
        %1848 = vmatpush1.msra.mxu0 0.0
        %1849 = vmatprep.subr.mxu0 0.0
        %1850 = vmatpush1.msra.mxu0 0.0
        %1851 = vmatprep.subr.mxu0 0.0
        %1852 = vmatpush1.msra.mxu0 0.0
        %1853 = vmatprep.subr.mxu0 0.0
        %1854 = vmatpush1.msra.mxu0 0.0
        %1855 = vmatprep.subr.mxu0 0.0
        %1856 = vmatpush1.msra.mxu0 0.0
        %1857 = vmatprep.subr.mxu0 0.0
        %1858 = vmatpush1.msra.mxu0 0.0
        %1859 = vmatprep.subr.mxu0 0.0
        %1860 = vmatpush1.msra.mxu0 0.0
        %1861 = vmatprep.subr.mxu0 0.0
        %1862 = vmatpush1.msra.mxu0 0.0
        %1863 = vmatprep.subr.mxu0 0.0
        %1864 = vmatpush1.msra.mxu0 0.0
        %1865 = vmatprep.subr.mxu0 0.0
        %1866 = vmatpush1.msra.mxu0 0.0
        %1867 = vmatprep.subr.mxu0 0.0
        %1868 = vmatpush1.msra.mxu0 0.0
        %1869 = vmatprep.subr.mxu0 0.0
        %1870 = vmatpush1.msra.mxu0 0.0
        %1871 = vmatprep.subr.mxu0 0.0
        %1872 = vmatpush1.msra.mxu0 0.0
        %1873 = vmatprep.subr.mxu0 0.0
        %1874 = vmatpush1.msra.mxu0 0.0
        %1875 = vmatprep.subr.mxu0 0.0
        %1876 = vmatpush1.msra.mxu0 0.0
        %1877 = vmatprep.subr.mxu0 0.0
        %1878 = vmatpush1.msra.mxu0 0.0
        %1879 = vmatprep.subr.mxu0 0.0
        %1880 = vmatpush1.msra.mxu0 0.0
        %1881 = vmatprep.subr.mxu0 0.0
        %1882 = vmatpush1.msra.mxu0 0.0
        %1883 = vmatprep.subr.mxu0 0.0
        %1884 = vmatpush1.msra.mxu0 0.0
        %1885 = vmatprep.subr.mxu0 0.0
        %1886 = vmatpush1.msra.mxu0 0.0
        %1887 = vmatprep.subr.mxu0 0.0
        %1888 = vmatpush1.msra.mxu0 0.0
        %1889 = vmatprep.subr.mxu0 0.0
        %1890 = vmatpush1.msra.mxu0 0.0
        %1891 = vmatprep.subr.mxu0 0.0
        %1892 = vmatpush1.msra.mxu0 0.0
        %1893 = vmatprep.subr.mxu0 0.0
        %1894 = vmatpush1.msra.mxu0 0.0
        %1895 = vmatprep.subr.mxu0 0.0
        %1896 = vmatpush1.msra.mxu0 0.0
        %1897 = vmatprep.subr.mxu0 0.0
        %1898 = vmatpush1.msra.mxu0 0.0
        %1899 = vmatprep.mubr.f32.mxu0 0.0
        %1900 = vmatmul.mubr.f32.gmra.mrb[0].mxu0 %v1833
        %v1901 = vpop.f32.mrb[0].mxu0
        %v1902 = vadd.f32 0.0, %v1901
        %v1903 = vpop.f32.mrb[0].mxu0
        %1904 = vdwg.mxu0
        %v1905 = vadd.f32 %v1482, %v1902
        %v1906 = vsub.f32 0.0, %v1905
        %v1907 = vmul.f32 %v1906, 1.442695
        %v1908 = vpow.pop %v1907
        %v1909 = vadd.f32 %v1908, 1.0
        %v1910 = vrcp.pop %v1909
        %v1911 = vmul.f32 1.0, %v1910
        %v1912 = vtanh.pop %v1905
        %v1914 = vrot.slane %v1817, 2
        %v1916 = vmul.f32 %v1911, %v1914
        %1918 = vrot.lane.b32.xlu0 %v1912, 64
        %v1919 = vpop.permute.xlu0 %1918
        %v1921 = vmul.f32 %v1911, %v1919
        %1923 = vrot.lane.b32.xlu0 %v1921, 32
        %v1924 = vpop.permute.xlu0 %1923
        %v1926 = vadd.f32 %v1916, %v1924
        %v1927 = vtanh.pop %v1926
        %1929 = vrot.lane.b32.xlu0 %v1927, 64
        %v1930 = vpop.permute.xlu0 %1929
        %v1932 = vmul.f32 %v1911, %v1930
        %1934 = vrot.lane.b32.xlu0 %v1932, 64
        %v1935 = vpop.permute.xlu0 %1934
        %vm1937 = vcmask 517376
        %1938 = vst.msk [vmem:[#allocation11 + $0x8] sm:$0x3] %vm1937, %v1935
        %1939 = vrot.lane.b32.xlu0 %v1932, 32
        %v1940 = vpop.permute.xlu0 %1939
        %v1941 = vsel %vm513, %v1940, 0
        %1943 = vmatprep.subr.mxu0 0.0
        %1944 = vmatpush1.msra.mxu0 %v1486
        %1945 = vmatprep.subr.mxu0 0.0
        %1946 = vmatpush1.msra.mxu0 %v1487
        %1947 = vmatprep.subr.mxu0 0.0
        %1948 = vmatpush1.msra.mxu0 %v1488
        %1949 = vmatprep.subr.mxu0 0.0
        %1950 = vmatpush1.msra.mxu0 %v1489
        %1951 = vmatprep.subr.mxu0 0.0
        %1952 = vmatpush1.msra.mxu0 0.0
        %1953 = vmatprep.subr.mxu0 0.0
        %1954 = vmatpush1.msra.mxu0 0.0
        %1955 = vmatprep.subr.mxu0 0.0
        %1956 = vmatpush1.msra.mxu0 0.0
        %1957 = vmatprep.subr.mxu0 0.0
        %1958 = vmatpush1.msra.mxu0 0.0
        %1959 = vmatprep.subr.mxu0 0.0
        %1960 = vmatpush1.msra.mxu0 0.0
        %1961 = vmatprep.subr.mxu0 0.0
        %1962 = vmatpush1.msra.mxu0 0.0
        %1963 = vmatprep.subr.mxu0 0.0
        %1964 = vmatpush1.msra.mxu0 0.0
        %1965 = vmatprep.subr.mxu0 0.0
        %1966 = vmatpush1.msra.mxu0 0.0
        %1967 = vmatprep.subr.mxu0 0.0
        %1968 = vmatpush1.msra.mxu0 0.0
        %1969 = vmatprep.subr.mxu0 0.0
        %1970 = vmatpush1.msra.mxu0 0.0
        %1971 = vmatprep.subr.mxu0 0.0
        %1972 = vmatpush1.msra.mxu0 0.0
        %1973 = vmatprep.subr.mxu0 0.0
        %1974 = vmatpush1.msra.mxu0 0.0
        %1975 = vmatprep.subr.mxu0 0.0
        %1976 = vmatpush1.msra.mxu0 0.0
        %1977 = vmatprep.subr.mxu0 0.0
        %1978 = vmatpush1.msra.mxu0 0.0
        %1979 = vmatprep.subr.mxu0 0.0
        %1980 = vmatpush1.msra.mxu0 0.0
        %1981 = vmatprep.subr.mxu0 0.0
        %1982 = vmatpush1.msra.mxu0 0.0
        %1983 = vmatprep.subr.mxu0 0.0
        %1984 = vmatpush1.msra.mxu0 0.0
        %1985 = vmatprep.subr.mxu0 0.0
        %1986 = vmatpush1.msra.mxu0 0.0
        %1987 = vmatprep.subr.mxu0 0.0
        %1988 = vmatpush1.msra.mxu0 0.0
        %1989 = vmatprep.subr.mxu0 0.0
        %1990 = vmatpush1.msra.mxu0 0.0
        %1991 = vmatprep.subr.mxu0 0.0
        %1992 = vmatpush1.msra.mxu0 0.0
        %1993 = vmatprep.subr.mxu0 0.0
        %1994 = vmatpush1.msra.mxu0 0.0
        %1995 = vmatprep.subr.mxu0 0.0
        %1996 = vmatpush1.msra.mxu0 0.0
        %1997 = vmatprep.subr.mxu0 0.0
        %1998 = vmatpush1.msra.mxu0 0.0
        %1999 = vmatprep.subr.mxu0 0.0
        %2000 = vmatpush1.msra.mxu0 0.0
        %2001 = vmatprep.subr.mxu0 0.0
        %2002 = vmatpush1.msra.mxu0 0.0
        %2003 = vmatprep.subr.mxu0 0.0
        %2004 = vmatpush1.msra.mxu0 0.0
        %2005 = vmatprep.subr.mxu0 0.0
        %2006 = vmatpush1.msra.mxu0 0.0
        %2007 = vmatprep.mubr.f32.mxu0 0.0
        %2008 = vmatmul.mubr.f32.gmra.mrb[0].mxu0 %v1941
        %v2009 = vpop.f32.mrb[0].mxu0
        %v2010 = vadd.f32 0.0, %v2009
        %v2011 = vpop.f32.mrb[0].mxu0
        %2012 = vdwg.mxu0
        %v2014 = vrot.slane %v2010, 2
        %v2016 = vadd.f32 %v1477, %v2014
        %v2017 = vsub.f32 0.0, %v2016
        %v2018 = vmul.f32 %v2017, 1.442695
        %v2019 = vpow.pop %v2018
        %v2020 = vadd.f32 %v2019, 1.0
        %v2021 = vrcp.pop %v2020
        %v2022 = vmul.f32 1.0, %v2021
        %v2023 = vtanh.pop %v2016
        %v2025 = vrot.slane %v1926, 2
        %v2027 = vmul.f32 %v2022, %v2025
        %2029 = vrot.lane.b32.xlu0 %v2023, 64
        %v2030 = vpop.permute.xlu0 %2029
        %v2032 = vmul.f32 %v2022, %v2030
        %2034 = vrot.lane.b32.xlu0 %v2032, 32
        %v2035 = vpop.permute.xlu0 %2034
        %v2037 = vadd.f32 %v2027, %v2035
        %v2038 = vtanh.pop %v2037
        %2040 = vrot.lane.b32.xlu0 %v2038, 64
        %v2041 = vpop.permute.xlu0 %2040
        %v2043 = vmul.f32 %v2022, %v2041
        %2045 = vrot.lane.b32.xlu0 %v2043, 64
        %v2046 = vpop.permute.xlu0 %2045
        %2048 = vst.msk [vmem:[#allocation11] sm:$0xc0] %vm1604, %v2046
        %v2049 = vrot.slane %v2043, 6
        %2050 = vrot.lane.b32.xlu0 %v2049, 32
        %v2051 = vpop.permute.xlu0 %2050
        %v2052 = vsel %vm513, %v2051, 0
        %2054 = vmatprep.subr.mxu0 0.0
        %2055 = vmatpush1.msra.mxu0 %v1486
        %2056 = vmatprep.subr.mxu0 0.0
        %2057 = vmatpush1.msra.mxu0 %v1487
        %2058 = vmatprep.subr.mxu0 0.0
        %2059 = vmatpush1.msra.mxu0 %v1488
        %2060 = vmatprep.subr.mxu0 0.0
        %2061 = vmatpush1.msra.mxu0 %v1489
        %2062 = vmatprep.subr.mxu0 0.0
        %2063 = vmatpush1.msra.mxu0 0.0
        %2064 = vmatprep.subr.mxu0 0.0
        %2065 = vmatpush1.msra.mxu0 0.0
        %2066 = vmatprep.subr.mxu0 0.0
        %2067 = vmatpush1.msra.mxu0 0.0
        %2068 = vmatprep.subr.mxu0 0.0
        %2069 = vmatpush1.msra.mxu0 0.0
        %2070 = vmatprep.subr.mxu0 0.0
        %2071 = vmatpush1.msra.mxu0 0.0
        %2072 = vmatprep.subr.mxu0 0.0
        %2073 = vmatpush1.msra.mxu0 0.0
        %2074 = vmatprep.subr.mxu0 0.0
        %2075 = vmatpush1.msra.mxu0 0.0
        %2076 = vmatprep.subr.mxu0 0.0
        %2077 = vmatpush1.msra.mxu0 0.0
        %2078 = vmatprep.subr.mxu0 0.0
        %2079 = vmatpush1.msra.mxu0 0.0
        %2080 = vmatprep.subr.mxu0 0.0
        %2081 = vmatpush1.msra.mxu0 0.0
        %2082 = vmatprep.subr.mxu0 0.0
        %2083 = vmatpush1.msra.mxu0 0.0
        %2084 = vmatprep.subr.mxu0 0.0
        %2085 = vmatpush1.msra.mxu0 0.0
        %2086 = vmatprep.subr.mxu0 0.0
        %2087 = vmatpush1.msra.mxu0 0.0
        %2088 = vmatprep.subr.mxu0 0.0
        %2089 = vmatpush1.msra.mxu0 0.0
        %2090 = vmatprep.subr.mxu0 0.0
        %2091 = vmatpush1.msra.mxu0 0.0
        %2092 = vmatprep.subr.mxu0 0.0
        %2093 = vmatpush1.msra.mxu0 0.0
        %2094 = vmatprep.subr.mxu0 0.0
        %2095 = vmatpush1.msra.mxu0 0.0
        %2096 = vmatprep.subr.mxu0 0.0
        %2097 = vmatpush1.msra.mxu0 0.0
        %2098 = vmatprep.subr.mxu0 0.0
        %2099 = vmatpush1.msra.mxu0 0.0
        %2100 = vmatprep.subr.mxu0 0.0
        %2101 = vmatpush1.msra.mxu0 0.0
        %2102 = vmatprep.subr.mxu0 0.0
        %2103 = vmatpush1.msra.mxu0 0.0
        %2104 = vmatprep.subr.mxu0 0.0
        %2105 = vmatpush1.msra.mxu0 0.0
        %2106 = vmatprep.subr.mxu0 0.0
        %2107 = vmatpush1.msra.mxu0 0.0
        %2108 = vmatprep.subr.mxu0 0.0
        %2109 = vmatpush1.msra.mxu0 0.0
        %2110 = vmatprep.subr.mxu0 0.0
        %2111 = vmatpush1.msra.mxu0 0.0
        %2112 = vmatprep.subr.mxu0 0.0
        %2113 = vmatpush1.msra.mxu0 0.0
        %2114 = vmatprep.subr.mxu0 0.0
        %2115 = vmatpush1.msra.mxu0 0.0
        %2116 = vmatprep.subr.mxu0 0.0
        %2117 = vmatpush1.msra.mxu0 0.0
        %2118 = vmatprep.mubr.f32.mxu0 0.0
        %2119 = vmatmul.mubr.f32.gmra.mrb[0].mxu0 %v2052
        %v2120 = vpop.f32.mrb[0].mxu0
        %v2121 = vadd.f32 0.0, %v2120
        %v2122 = vpop.f32.mrb[0].mxu0
        %2123 = vdwg.mxu0
        %v2125 = vrot.slane %v2121, 4
        %v2127 = vadd.f32 %v1477, %v2125
        %v2128 = vsub.f32 0.0, %v2127
        %v2129 = vmul.f32 %v2128, 1.442695
        %v2130 = vpow.pop %v2129
        %v2131 = vadd.f32 %v2130, 1.0
        %v2132 = vrcp.pop %v2131
        %v2133 = vmul.f32 1.0, %v2132
        %v2134 = vtanh.pop %v2127
        %v2136 = vrot.slane %v2037, 2
        %v2138 = vmul.f32 %v2133, %v2136
        %2140 = vrot.lane.b32.xlu0 %v2134, 64
        %v2141 = vpop.permute.xlu0 %2140
        %v2143 = vmul.f32 %v2133, %v2141
        %2145 = vrot.lane.b32.xlu0 %v2143, 32
        %v2146 = vpop.permute.xlu0 %2145
        %v2148 = vadd.f32 %v2138, %v2146
        %v2149 = vtanh.pop %v2148
        %2151 = vrot.lane.b32.xlu0 %v2149, 64
        %v2152 = vpop.permute.xlu0 %2151
        %v2154 = vmul.f32 %v2133, %v2152
        %2156 = vrot.lane.b32.xlu0 %v2154, 64
        %v2157 = vpop.permute.xlu0 %2156
        %2159 = vst.msk [vmem:[#allocation11] sm:$0x30] %vm1716, %v2157
        %v2160 = vrot.slane %v2154, 4
        %2161 = vrot.lane.b32.xlu0 %v2160, 32
        %v2162 = vpop.permute.xlu0 %2161
        %v2163 = vsel %vm513, %v2162, 0
        %2165 = vmatprep.subr.mxu0 0.0
        %2166 = vmatpush1.msra.mxu0 %v1486
        %2167 = vmatprep.subr.mxu0 0.0
        %2168 = vmatpush1.msra.mxu0 %v1487
        %2169 = vmatprep.subr.mxu0 0.0
        %2170 = vmatpush1.msra.mxu0 %v1488
        %2171 = vmatprep.subr.mxu0 0.0
        %2172 = vmatpush1.msra.mxu0 %v1489
        %2173 = vmatprep.subr.mxu0 0.0
        %2174 = vmatpush1.msra.mxu0 0.0
        %2175 = vmatprep.subr.mxu0 0.0
        %2176 = vmatpush1.msra.mxu0 0.0
        %2177 = vmatprep.subr.mxu0 0.0
        %2178 = vmatpush1.msra.mxu0 0.0
        %2179 = vmatprep.subr.mxu0 0.0
        %2180 = vmatpush1.msra.mxu0 0.0
        %2181 = vmatprep.subr.mxu0 0.0
        %2182 = vmatpush1.msra.mxu0 0.0
        %2183 = vmatprep.subr.mxu0 0.0
        %2184 = vmatpush1.msra.mxu0 0.0
        %2185 = vmatprep.subr.mxu0 0.0
        %2186 = vmatpush1.msra.mxu0 0.0
        %2187 = vmatprep.subr.mxu0 0.0
        %2188 = vmatpush1.msra.mxu0 0.0
        %2189 = vmatprep.subr.mxu0 0.0
        %2190 = vmatpush1.msra.mxu0 0.0
        %2191 = vmatprep.subr.mxu0 0.0
        %2192 = vmatpush1.msra.mxu0 0.0
        %2193 = vmatprep.subr.mxu0 0.0
        %2194 = vmatpush1.msra.mxu0 0.0
        %2195 = vmatprep.subr.mxu0 0.0
        %2196 = vmatpush1.msra.mxu0 0.0
        %2197 = vmatprep.subr.mxu0 0.0
        %2198 = vmatpush1.msra.mxu0 0.0
        %2199 = vmatprep.subr.mxu0 0.0
        %2200 = vmatpush1.msra.mxu0 0.0
        %2201 = vmatprep.subr.mxu0 0.0
        %2202 = vmatpush1.msra.mxu0 0.0
        %2203 = vmatprep.subr.mxu0 0.0
        %2204 = vmatpush1.msra.mxu0 0.0
        %2205 = vmatprep.subr.mxu0 0.0
        %2206 = vmatpush1.msra.mxu0 0.0
        %2207 = vmatprep.subr.mxu0 0.0
        %2208 = vmatpush1.msra.mxu0 0.0
        %2209 = vmatprep.subr.mxu0 0.0
        %2210 = vmatpush1.msra.mxu0 0.0
        %2211 = vmatprep.subr.mxu0 0.0
        %2212 = vmatpush1.msra.mxu0 0.0
        %2213 = vmatprep.subr.mxu0 0.0
        %2214 = vmatpush1.msra.mxu0 0.0
        %2215 = vmatprep.subr.mxu0 0.0
        %2216 = vmatpush1.msra.mxu0 0.0
        %2217 = vmatprep.subr.mxu0 0.0
        %2218 = vmatpush1.msra.mxu0 0.0
        %2219 = vmatprep.subr.mxu0 0.0
        %2220 = vmatpush1.msra.mxu0 0.0
        %2221 = vmatprep.subr.mxu0 0.0
        %2222 = vmatpush1.msra.mxu0 0.0
        %2223 = vmatprep.subr.mxu0 0.0
        %2224 = vmatpush1.msra.mxu0 0.0
        %2225 = vmatprep.subr.mxu0 0.0
        %2226 = vmatpush1.msra.mxu0 0.0
        %2227 = vmatprep.subr.mxu0 0.0
        %2228 = vmatpush1.msra.mxu0 0.0
        %2229 = vmatprep.mubr.f32.mxu0 0.0
        %2230 = vmatmul.mubr.f32.gmra.mrb[0].mxu0 %v2163
        %v2231 = vpop.f32.mrb[0].mxu0
        %v2232 = vadd.f32 0.0, %v2231
        %v2233 = vpop.f32.mrb[0].mxu0
        %2234 = vdwg.mxu0
        %v2236 = vrot.slane %v2232, 6
        %v2238 = vadd.f32 %v1477, %v2236
        %v2239 = vsub.f32 0.0, %v2238
        %v2240 = vmul.f32 %v2239, 1.442695
        %v2241 = vpow.pop %v2240
        %v2242 = vadd.f32 %v2241, 1.0
        %v2243 = vrcp.pop %v2242
        %v2244 = vmul.f32 1.0, %v2243
        %v2245 = vtanh.pop %v2238
        %v2247 = vrot.slane %v2148, 2
        %v2249 = vmul.f32 %v2244, %v2247
        %2251 = vrot.lane.b32.xlu0 %v2245, 64
        %v2252 = vpop.permute.xlu0 %2251
        %v2254 = vmul.f32 %v2244, %v2252
        %2256 = vrot.lane.b32.xlu0 %v2254, 32
        %v2257 = vpop.permute.xlu0 %2256
        %v2259 = vadd.f32 %v2249, %v2257
        %v2260 = vtanh.pop %v2259
        %2262 = vrot.lane.b32.xlu0 %v2260, 64
        %v2263 = vpop.permute.xlu0 %2262
        %v2265 = vmul.f32 %v2244, %v2263
        %2267 = vrot.lane.b32.xlu0 %v2265, 64
        %v2268 = vpop.permute.xlu0 %2267
        %2270 = vst.msk [vmem:[#allocation11] sm:$0xc] %vm1828, %v2268
        %v2271 = vrot.slane %v2265, 2
        %2272 = vrot.lane.b32.xlu0 %v2271, 32
        %v2273 = vpop.permute.xlu0 %2272
        %v2274 = vsel %vm513, %v2273, 0
        %2276 = vmatprep.subr.mxu0 0.0
        %2277 = vmatpush1.msra.mxu0 %v1486
        %2278 = vmatprep.subr.mxu0 0.0
        %2279 = vmatpush1.msra.mxu0 %v1487
        %2280 = vmatprep.subr.mxu0 0.0
        %2281 = vmatpush1.msra.mxu0 %v1488
        %2282 = vmatprep.subr.mxu0 0.0
        %2283 = vmatpush1.msra.mxu0 %v1489
        %2284 = vmatprep.subr.mxu0 0.0
        %2285 = vmatpush1.msra.mxu0 0.0
        %2286 = vmatprep.subr.mxu0 0.0
        %2287 = vmatpush1.msra.mxu0 0.0
        %2288 = vmatprep.subr.mxu0 0.0
        %2289 = vmatpush1.msra.mxu0 0.0
        %2290 = vmatprep.subr.mxu0 0.0
        %2291 = vmatpush1.msra.mxu0 0.0
        %2292 = vmatprep.subr.mxu0 0.0
        %2293 = vmatpush1.msra.mxu0 0.0
        %2294 = vmatprep.subr.mxu0 0.0
        %2295 = vmatpush1.msra.mxu0 0.0
        %2296 = vmatprep.subr.mxu0 0.0
        %2297 = vmatpush1.msra.mxu0 0.0
        %2298 = vmatprep.subr.mxu0 0.0
        %2299 = vmatpush1.msra.mxu0 0.0
        %2300 = vmatprep.subr.mxu0 0.0
        %2301 = vmatpush1.msra.mxu0 0.0
        %2302 = vmatprep.subr.mxu0 0.0
        %2303 = vmatpush1.msra.mxu0 0.0
        %2304 = vmatprep.subr.mxu0 0.0
        %2305 = vmatpush1.msra.mxu0 0.0
        %2306 = vmatprep.subr.mxu0 0.0
        %2307 = vmatpush1.msra.mxu0 0.0
        %2308 = vmatprep.subr.mxu0 0.0
        %2309 = vmatpush1.msra.mxu0 0.0
        %2310 = vmatprep.subr.mxu0 0.0
        %2311 = vmatpush1.msra.mxu0 0.0
        %2312 = vmatprep.subr.mxu0 0.0
        %2313 = vmatpush1.msra.mxu0 0.0
        %2314 = vmatprep.subr.mxu0 0.0
        %2315 = vmatpush1.msra.mxu0 0.0
        %2316 = vmatprep.subr.mxu0 0.0
        %2317 = vmatpush1.msra.mxu0 0.0
        %2318 = vmatprep.subr.mxu0 0.0
        %2319 = vmatpush1.msra.mxu0 0.0
        %2320 = vmatprep.subr.mxu0 0.0
        %2321 = vmatpush1.msra.mxu0 0.0
        %2322 = vmatprep.subr.mxu0 0.0
        %2323 = vmatpush1.msra.mxu0 0.0
        %2324 = vmatprep.subr.mxu0 0.0
        %2325 = vmatpush1.msra.mxu0 0.0
        %2326 = vmatprep.subr.mxu0 0.0
        %2327 = vmatpush1.msra.mxu0 0.0
        %2328 = vmatprep.subr.mxu0 0.0
        %2329 = vmatpush1.msra.mxu0 0.0
        %2330 = vmatprep.subr.mxu0 0.0
        %2331 = vmatpush1.msra.mxu0 0.0
        %2332 = vmatprep.subr.mxu0 0.0
        %2333 = vmatpush1.msra.mxu0 0.0
        %2334 = vmatprep.subr.mxu0 0.0
        %2335 = vmatpush1.msra.mxu0 0.0
        %2336 = vmatprep.subr.mxu0 0.0
        %2337 = vmatpush1.msra.mxu0 0.0
        %2338 = vmatprep.subr.mxu0 0.0
        %2339 = vmatpush1.msra.mxu0 0.0
        %2340 = vmatprep.mubr.f32.mxu0 0.0
        %2341 = vmatmul.mubr.f32.gmra.mrb[0].mxu0 %v2274
        %v2342 = vpop.f32.mrb[0].mxu0
        %v2343 = vadd.f32 0.0, %v2342
        %v2344 = vpop.f32.mrb[0].mxu0
        %2345 = vdwg.mxu0
        %v2346 = vadd.f32 %v1477, %v2343
        %v2347 = vsub.f32 0.0, %v2346
        %v2348 = vmul.f32 %v2347, 1.442695
        %v2349 = vpow.pop %v2348
        %v2350 = vadd.f32 %v2349, 1.0
        %v2351 = vrcp.pop %v2350
        %v2352 = vmul.f32 1.0, %v2351
        %v2353 = vtanh.pop %v2346
        %v2355 = vrot.slane %v2259, 2
        %v2357 = vmul.f32 %v2352, %v2355
        %2359 = vrot.lane.b32.xlu0 %v2353, 64
        %v2360 = vpop.permute.xlu0 %2359
        %v2362 = vmul.f32 %v2352, %v2360
        %2364 = vrot.lane.b32.xlu0 %v2362, 32
        %v2365 = vpop.permute.xlu0 %2364
        %v2367 = vadd.f32 %v2357, %v2365
        %v2368 = vtanh.pop %v2367
        %2370 = vrot.lane.b32.xlu0 %v2368, 64
        %v2371 = vpop.permute.xlu0 %2370
        %v2373 = vmul.f32 %v2352, %v2371
        %2375 = vrot.lane.b32.xlu0 %v2373, 64
        %v2376 = vpop.permute.xlu0 %2375
        %2378 = vst.msk [vmem:[#allocation11] sm:$0x3] %vm1937, %v2376
        // Predicated region
        $region69: #{tpu_custom_call.1} parent=43 // pred_check
          %p2379 = pneg %p189
        $region70: #{tpu_custom_call.1} parent=43 // pred_check_branch
          %2381 = sbr.rel (%p2379) target = $region72
        $region71: #{tpu_custom_call.1} parent=43 // pred_region
          %s2383 = ssub.s32 256, 256
          %2384 = vsyncadd [#allocation5], %s2383
          %s2385 = sshll.u32 [#allocation11], 4
          %s2386 = int_to_ptr.vmem [resolvable:$true] %s2385
          %2391 = dma.vmem_to_hbm [thread:$0]  %s2386, 256, %s6, [#allocation5], 128, 128, 8
        $region72: #{tpu_custom_call.1} parent=43 // pred_fallthru
          _
        // Predicated region
        $region73: #{tpu_custom_call.1} parent=43 // pred_check
          %p2392 = pneg %p189
        $region74: #{tpu_custom_call.1} parent=43 // pred_check_branch
          %2394 = sbr.rel (%p2392) target = $region76
        $region75: #{tpu_custom_call.1} parent=43 // pred_region
          %2395 = dma.done [#allocation5], 256
        $region76: #{tpu_custom_call.1} parent=43 // pred_fallthru
          _
      $region44: #{tpu_custom_call.1} parent=5 // pred_fallthru
        _
      %p2396 = scmp.le.s32.totalorder 2, %s20
      // Predicated region
      $region77: #{tpu_custom_call.1} parent=5 // pred_check
        %p2397 = pneg %p2396
      $region78: #{tpu_custom_call.1} parent=5 // pred_check_branch
        %2399 = sbr.rel (%p2397) target = $region80
      $region79: #{tpu_custom_call.1} parent=5 // pred_region
        %s2400 = ssub.s32 %s20, 2
      $region80: #{tpu_custom_call.1} parent=5 // pred_fallthru
        _
    $region6: #{tpu_custom_call.1} parent=1 // loop_footer
      %s24 = sadd.s32 1, %s20
    $region7: #{tpu_custom_call.1} parent=1 // loop_footer_branch
      %19 = sbr.rel target = $region3
    $region8: #{tpu_custom_call.1} parent=1 // loop_exit
      _
    %2401 = vsyncpa [#allocation4], 1
    %s2402 = scalar_lea.sflag [#allocation4], 1
    %2403 = vsyncpa %s2402, 1
    %2404 = vsyncpa [#allocation7], 1
    %s2405 = scalar_lea.sflag [#allocation7], 1
    %2406 = vsyncpa %s2405, 1
    %2407 = vsyncpa [#allocation10], 1
    %s2408 = scalar_lea.sflag [#allocation10], 1
    %2409 = vsyncpa %s2408, 1
    %2410 = vsyncpa [#allocation5], 1
    %s2411 = scalar_lea.sflag [#allocation5], 1
    %2412 = vsyncpa %s2411, 1

</llo_original>
